<compile_context>
chip_gen: v7x
topology: tpu7x:2x2x1
jax: 0.10.0
libtpu: 0.0.40
codegen_flags: <defaults>
</compile_context>

<pallas_src>
import functools

import jax
import jax.numpy as jnp
from jax import lax
from jax.experimental import pallas as pl
from jax.experimental.pallas import tpu as pltpu

INPUT_DIM = 34           # n_joints
IN_PAD = 128             # feature dim padded to a full lane width
ENC_DIM = 128            # encoder_layers[-1]
RNN_DIM = 64             # rnn_dim
GATE_DIM = 4 * RNN_DIM   # LSTM gates (i, f, g, o)
DEC2_DIM = 2 * IN_PAD    # fused [W_dec | W_dec@W_enc] output width
MAX_STATIC_UNROLL = 32   # above this, time loops switch to lax.fori_loop


def autoreg_kernel(x_ref, w_enc_ref, b_enc_ref, w_gate_ref, b_gate_ref,
                   w_dec2_ref, b_dec2_ref, out_ref, *, n_seeds, n_out):
    """One batch tile: warm-up on the seed frames, then autoregressive decode.

    x_ref:      (n_seeds, TILE_B, IN_PAD) f32 -- ONLY the seed frames.
    w_gate_ref: (ENC_DIM+RNN_DIM, GATE_DIM) bf16 -- [W_ih; W_hh] fused.
    w_dec2_ref: (RNN_DIM, 2*IN_PAD) bf16 -- [W_dec | W_dec@W_enc]: one MXU call
                yields both the decoder output and the pre-ReLU re-encoding
                increment (the K=128 encode matmul is folded away).
    out_ref:    (n_out, TILE_B, IN_PAD) f32, time-major.
    """
    tile_b = x_ref.shape[1]

    # Hoist bias broadcasts once (JAX does not CSE broadcast_in_dim in loops).
    b_gate = jnp.broadcast_to(b_gate_ref[...], (tile_b, GATE_DIM))
    b_dec2 = jnp.broadcast_to(b_dec2_ref[...], (tile_b, DEC2_DIM))

    def lstm_step(emb, h, c):
        # Fused gate matmul: [emb | h] @ [W_ih ; W_hh] -> (tile_b, 256) f32.
        xh = jnp.concatenate([emb, h], axis=1).astype(jnp.bfloat16)
        gates = jnp.dot(xh, w_gate_ref[...],
                        preferred_element_type=jnp.float32) + b_gate
        # Whole-vreg nonlinearities: sigmoid over [i|f], tanh/sigmoid over [g|o].
        if_sig = jax.nn.sigmoid(gates[:, :2 * RNN_DIM])
        go = gates[:, 2 * RNN_DIM:]
        go_tanh = jnp.tanh(go)
        go_sig = jax.nn.sigmoid(go)
        i_g = if_sig[:, :RNN_DIM]
        f_g = if_sig[:, RNN_DIM:]
        g_g = go_tanh[:, :RNN_DIM]
        o_g = go_sig[:, RNN_DIM:]
        c_new = f_g * c + i_g * g_g
        h_new = o_g * jnp.tanh(c_new)
        return h_new, c_new

    def dec_step(h):
        # h @ [W_dec | W_dec@W_enc] + [b_dec | b_dec@W_enc]  (single MXU call).
        return jnp.dot(h.astype(jnp.bfloat16), w_dec2_ref[...],
                       preferred_element_type=jnp.float32) + b_dec2

    # ----- warm-up: encode ALL seed frames with a single MXU call -----
    x_seeds = x_ref[...]                                     # (n_seeds, tile_b, IN_PAD)
    z_all = (jnp.dot(
        x_seeds.reshape(n_seeds * tile_b, IN_PAD).astype(jnp.bfloat16),
        w_enc_ref[...], preferred_element_type=jnp.float32)
        + b_enc_ref[...]).reshape(n_seeds, tile_b, ENC_DIM)  # pre-ReLU encodings
    emb_all = jax.nn.relu(z_all)

    h = jnp.zeros((tile_b, RNN_DIM), jnp.float32)            # init_state -> zeros
    c = jnp.zeros((tile_b, RNN_DIM), jnp.float32)
    if n_seeds <= MAX_STATIC_UNROLL:
        for t in range(n_seeds):                             # fully unrolled
            h, c = lstm_step(emb_all[t], h, c)
    else:
        def warm_body(t, hc):
            emb_t = lax.dynamic_index_in_dim(emb_all, t, 0, keepdims=False)
            return lstm_step(emb_t, *hc)
        h, c = lax.fori_loop(0, n_seeds, warm_body, (h, c), unroll=4)

    # First output: decoder(h) + residual of the last seed frame.  Seed the
    # carried pre-ReLU encoding z = prev @ W_enc + b_enc from the fused
    # columns plus the (pre-ReLU) encoding of the last seed frame.
    upd = dec_step(h)
    prev = upd[:, :IN_PAD] + x_ref[n_seeds - 1]
    z = upd[:, IN_PAD:] + z_all[n_seeds - 1]
    out_ref[0] = prev

    # ----- autoregressive decode (teacher_forcing_ratio == 0) -----
    def step(carry):
        prev, z, h, c = carry
        h, c = lstm_step(jax.nn.relu(z), h, c)
        upd = dec_step(h)
        return prev + upd[:, :IN_PAD], z + upd[:, IN_PAD:], h, c

    carry = (prev, z, h, c)
    if n_out - 1 <= MAX_STATIC_UNROLL:
        for t in range(1, n_out):                            # fully unrolled
            carry = step(carry)
            out_ref[t] = carry[0]
    else:
        # Chunk-unrolled loop keeps code size / live ranges bounded for long
        # sequences while retaining scheduler freedom inside each chunk.
        def body(t, carry):
            carry = step(carry)
            out_ref[t] = carry[0]
            return carry
        lax.fori_loop(1, n_out, body, carry, unroll=8)


def init_params(key):
    """PyTorch-style uniform(-1/sqrt(fan), 1/sqrt(fan)) init (weights stored transposed)."""
    ks = jax.random.split(key, 8)

    def u(k, shape, fan):
        bound = 1.0 / jnp.sqrt(jnp.float32(fan))
        return jax.random.uniform(k, shape, jnp.float32, -bound, bound)

    return dict(
        w_enc=u(ks[0], (INPUT_DIM, ENC_DIM), INPUT_DIM),     # Linear(34,128).weight.T
        b_enc=u(ks[1], (1, ENC_DIM), INPUT_DIM),
        w_ih=u(ks[2], (ENC_DIM, GATE_DIM), RNN_DIM),         # LSTMCell weight_ih.T
        w_hh=u(ks[3], (RNN_DIM, GATE_DIM), RNN_DIM),         # LSTMCell weight_hh.T
        b_ih=u(ks[4], (1, GATE_DIM), RNN_DIM),
        b_hh=u(ks[5], (1, GATE_DIM), RNN_DIM),
        w_dec=u(ks[6], (RNN_DIM, INPUT_DIM), RNN_DIM),       # Linear(64,34).weight.T
        b_dec=u(ks[7], (1, INPUT_DIM), RNN_DIM),
    )


def prepare_params(params):
    """Pad 34-wide dims to 128 lanes, fuse the gate matmuls, fold the encoder
    through the residual update, cast MXU operands to bf16 (biases stay f32)."""
    f32 = jnp.float32
    hi = jax.lax.Precision.HIGHEST
    w_enc = jnp.zeros((IN_PAD, ENC_DIM), f32).at[:INPUT_DIM].set(params["w_enc"])
    w_gate = jnp.concatenate([params["w_ih"], params["w_hh"]], axis=0)      # (192, 256)
    w_dec = jnp.zeros((RNN_DIM, IN_PAD), f32).at[:, :INPUT_DIM].set(params["w_dec"])
    b_dec = jnp.zeros((1, IN_PAD), f32).at[:, :INPUT_DIM].set(params["b_dec"])
    # Encoder folded through the residual update (precomputed in f32):
    #   z_{t+1} = z_t + h_t @ (W_dec@W_enc) + b_dec@W_enc,  emb = relu(z).
    w_decenc = jnp.dot(params["w_dec"], params["w_enc"], precision=hi)      # (64, 128)
    b_decenc = jnp.dot(params["b_dec"], params["w_enc"], precision=hi)      # (1, 128)
    return dict(
        w_enc=w_enc.astype(jnp.bfloat16),
        b_enc=params["b_enc"].astype(f32),
        w_gate=w_gate.astype(jnp.bfloat16),
        b_gate=(params["b_ih"] + params["b_hh"]).astype(f32),
        w_dec2=jnp.concatenate([w_dec, w_decenc], axis=1).astype(jnp.bfloat16),  # (64, 256)
        b_dec2=jnp.concatenate([b_dec, b_decenc], axis=1).astype(f32),           # (1, 256)
    )


def _pick_tile_b(batch):
    """Batch rows per grid step.  Big tiles feed the MXU real LHS rows per
    serial LSTM step; keep >=2 grid steps when the batch allows so the
    'parallel' grid axis can shard across both v7x TensorCores."""
    if batch <= 8:
        return 8
    if batch <= 256:
        half = (batch + 1) // 2
        return ((half + 7) // 8) * 8          # two roughly equal tiles
    return 128


def _vmem_limit_bytes(n_seeds, n_out, tile_b):
    in_blk = n_seeds * tile_b * IN_PAD * 4
    out_blk = n_out * tile_b * IN_PAD * 4
    weights = 2 * (IN_PAD * ENC_DIM + (ENC_DIM + RNN_DIM) * GATE_DIM
                   + RNN_DIM * DEC2_DIM) + 4 * (ENC_DIM + GATE_DIM + DEC2_DIM)
    need = 2 * (in_blk + out_blk + weights) + (4 << 20)      # double-buffered + headroom
    return int(min(max(need, 8 << 20), 64 << 20))            # cap at v7x physical VMEM


def autoregressive_2d_joints(x, params, *, n_seeds):
    """x: (batch, n_seqs, 34) -> (batch, n_seqs - n_seeds, 34)."""
    batch, n_seqs, d = x.shape
    assert d == INPUT_DIM and n_seqs > n_seeds
    n_out = n_seqs - n_seeds
    prep = prepare_params(params)

    tile_b = _pick_tile_b(batch)
    batch_pad = ((batch + tile_b - 1) // tile_b) * tile_b

    # Only the n_seeds seed frames are ever read (teacher forcing is off), so
    # pad/transpose just that slice: time-major, zero-padded lanes >= 34.
    x_seed = jnp.transpose(x[:, :n_seeds, :].astype(jnp.float32), (1, 0, 2))
    x_tm = jnp.zeros((n_seeds, batch_pad, IN_PAD), jnp.float32)
    x_tm = x_tm.at[:, :batch, :INPUT_DIM].set(x_seed)

    kernel = functools.partial(autoreg_kernel, n_seeds=n_seeds, n_out=n_out)

    out_tm = pl.pallas_call(
        kernel,
        out_shape=jax.ShapeDtypeStruct((n_out, batch_pad, IN_PAD), jnp.float32),
        grid=(batch_pad // tile_b,),
        in_specs=[
            pl.BlockSpec((n_seeds, tile_b, IN_PAD), lambda b: (0, b, 0)),    # x (seeds only)
            pl.BlockSpec((IN_PAD, ENC_DIM), lambda b: (0, 0)),               # w_enc
            pl.BlockSpec((1, ENC_DIM), lambda b: (0, 0)),                    # b_enc
            pl.BlockSpec((ENC_DIM + RNN_DIM, GATE_DIM), lambda b: (0, 0)),   # w_gate
            pl.BlockSpec((1, GATE_DIM), lambda b: (0, 0)),                   # b_gate
            pl.BlockSpec((RNN_DIM, DEC2_DIM), lambda b: (0, 0)),             # w_dec2
            pl.BlockSpec((1, DEC2_DIM), lambda b: (0, 0)),                   # b_dec2
        ],
        out_specs=pl.BlockSpec((n_out, tile_b, IN_PAD), lambda b: (0, b, 0)),
        compiler_params=pltpu.CompilerParams(
            dimension_semantics=("parallel",),
            vmem_limit_bytes=_vmem_limit_bytes(n_seeds, n_out, tile_b)),
    )(x_tm, prep["w_enc"], prep["b_enc"], prep["w_gate"], prep["b_gate"],
      prep["w_dec2"], prep["b_dec2"])

    # Slice padding off BEFORE transposing so the wrapper transpose moves
    # ~3.8x less data; time-major -> (batch, n_out, 34).
    return jnp.transpose(out_tm[:, :batch, :INPUT_DIM], (1, 0, 2))


# ----------------------------- references -----------------------------------

def reference_forward_f32(x, params, *, n_seeds, fused=False):
    """Module-faithful plain-JAX forward in full f32 (Precision.HIGHEST).
    fused=True folds the encoder through the residual update exactly like the
    kernel, to check the algebraic rewrite preserves semantics."""
    hi = jax.lax.Precision.HIGHEST
    w_enc, b_enc = params["w_enc"], params["b_enc"]
    w_ih, w_hh = params["w_ih"], params["w_hh"]
    b_g = params["b_ih"] + params["b_hh"]
    w_dec, b_dec = params["w_dec"], params["b_dec"]
    batch, n_seqs, _ = x.shape

    def lstm(emb, h, c):
        g = jnp.dot(emb, w_ih, precision=hi) + jnp.dot(h, w_hh, precision=hi) + b_g
        i = jax.nn.sigmoid(g[:, :RNN_DIM])
        f = jax.nn.sigmoid(g[:, RNN_DIM:2 * RNN_DIM])
        gg = jnp.tanh(g[:, 2 * RNN_DIM:3 * RNN_DIM])
        o = jax.nn.sigmoid(g[:, 3 * RNN_DIM:])
        c = f * c + i * gg
        return o * jnp.tanh(c), c

    h = jnp.zeros((batch, RNN_DIM), jnp.float32)
    c = jnp.zeros((batch, RNN_DIM), jnp.float32)
    for t in range(n_seeds):
        emb = jax.nn.relu(jnp.dot(x[:, t], w_enc, precision=hi) + b_enc)
        h, c = lstm(emb, h, c)
    prev = jnp.dot(h, w_dec, precision=hi) + b_dec + x[:, n_seeds - 1]
    outs = [prev]
    if fused:
        w_de = jnp.dot(w_dec, w_enc, precision=hi)
        b_de = jnp.dot(b_dec, w_enc, precision=hi)
        z = jnp.dot(prev, w_enc, precision=hi) + b_enc
        for _ in range(n_seqs - n_seeds - 1):
            h, c = lstm(jax.nn.relu(z), h, c)
            prev = prev + jnp.dot(h, w_dec, precision=hi) + b_dec
            z = z + jnp.dot(h, w_de, precision=hi) + b_de
            outs.append(prev)
    else:
        for _ in range(n_seqs - n_seeds - 1):
            emb = jax.nn.relu(jnp.dot(prev, w_enc, precision=hi) + b_enc)
            h, c = lstm(emb, h, c)
            prev = prev + jnp.dot(h, w_dec, precision=hi) + b_dec
            outs.append(prev)
    return jnp.stack(outs, axis=1)


def reference_fused_bf16(x, params, *, n_seeds):
    """Plain-JAX mirror of the kernel's exact numeric path (bf16 MXU operands,
    f32 accumulation, encoder folded through the residual update)."""
    prep = prepare_params(params)
    batch, n_seqs, _ = x.shape
    xp = jnp.zeros((batch, n_seqs, IN_PAD), jnp.float32).at[:, :, :INPUT_DIM].set(x)

    def mm(a, w):
        return jnp.dot(a.astype(jnp.bfloat16), w, preferred_element_type=jnp.float32)

    def lstm(emb, h, c):
        g = mm(jnp.concatenate([emb, h], axis=1), prep["w_gate"]) + prep["b_gate"]
        i = jax.nn.sigmoid(g[:, :RNN_DIM])
        f = jax.nn.sigmoid(g[:, RNN_DIM:2 * RNN_DIM])
        gg = jnp.tanh(g[:, 2 * RNN_DIM:3 * RNN_DIM])
        o = jax.nn.sigmoid(g[:, 3 * RNN_DIM:])
        c = f * c + i * gg
        return o * jnp.tanh(c), c

    zs = [mm(xp[:, t], prep["w_enc"]) + prep["b_enc"] for t in range(n_seeds)]
    h = jnp.zeros((batch, RNN_DIM), jnp.float32)
    c = jnp.zeros((batch, RNN_DIM), jnp.float32)
    for t in range(n_seeds):
        h, c = lstm(jax.nn.relu(zs[t]), h, c)
    upd = mm(h, prep["w_dec2"]) + prep["b_dec2"]
    prev = upd[:, :IN_PAD] + xp[:, n_seeds - 1]
    z = upd[:, IN_PAD:] + zs[n_seeds - 1]
    outs = [prev]
    for _ in range(n_seqs - n_seeds - 1):
        h, c = lstm(jax.nn.relu(z), h, c)
        upd = mm(h, prep["w_dec2"]) + prep["b_dec2"]
        prev = prev + upd[:, :IN_PAD]
        z = z + upd[:, IN_PAD:]
        outs.append(prev)
    return jnp.stack(outs, axis=1)[:, :, :INPUT_DIM]


if __name__ == "__main__":
    key = jax.random.PRNGKey(0)
    pkey, k1, k2 = jax.random.split(key, 3)
    params = init_params(pkey)

    # 0) The encoder-folding rewrite is algebraically exact (checked in f32).
    xa = jax.random.normal(k1, (4, 12, INPUT_DIM), jnp.float32)
    ref_plain = reference_forward_f32(xa, params, n_seeds=4, fused=False)
    ref_fused = reference_forward_f32(xa, params, n_seeds=4, fused=True)
    fuse_err = float(jnp.max(jnp.abs(ref_plain - ref_fused)))
    assert fuse_err < 1e-3, f"fused-algebra mismatch: {fuse_err}"

    # 1) Small config: fully unrolled kernel path, one batch tile (pads 4->8).
    out_a = jax.block_until_ready(autoregressive_2d_joints(xa, params, n_seeds=4))
    assert out_a.shape == (4, 8, INPUT_DIM), out_a.shape
    assert bool(jnp.all(jnp.isfinite(out_a)))
    err_a = float(jnp.max(jnp.abs(out_a - reference_fused_bf16(xa, params, n_seeds=4))))
    assert err_a < 5e-3, f"kernel vs bf16 reference (A): {err_a}"
    drift_a = float(jnp.max(jnp.abs(out_a - ref_plain)))
    assert drift_a < 2e-1, f"kernel vs f32 reference (A): {drift_a}"

    # 2) Longer config: exercises the chunk-unrolled fori_loop decode path and
    #    a 2-step "parallel" batch grid.
    xb = jax.random.normal(k2, (16, 40, INPUT_DIM), jnp.float32)
    out_b = jax.block_until_ready(autoregressive_2d_joints(xb, params, n_seeds=6))
    assert out_b.shape == (16, 34, INPUT_DIM), out_b.shape
    assert bool(jnp.all(jnp.isfinite(out_b)))
    err_b = float(jnp.max(jnp.abs(out_b - reference_fused_bf16(xb, params, n_seeds=6))))
    assert err_b < 5e-3, f"kernel vs bf16 reference (B): {err_b}"

    print("KERNEL_OK")
</pallas_src>

<mosaic_0001>
module attributes {stable_mosaic.version = 11 : i64} {
  func.func @autoreg_kernel(%arg0: i32, %arg1: memref<4x8x128xf32, #tpu.memory_space<vmem>>, %arg2: memref<128x128xbf16, #tpu.memory_space<vmem>>, %arg3: memref<1x128xf32, #tpu.memory_space<vmem>>, %arg4: memref<192x256xbf16, #tpu.memory_space<vmem>>, %arg5: memref<1x256xf32, #tpu.memory_space<vmem>>, %arg6: memref<64x256xbf16, #tpu.memory_space<vmem>>, %arg7: memref<1x256xf32, #tpu.memory_space<vmem>>, %arg8: memref<8x8x128xf32, #tpu.memory_space<vmem>>) attributes {dimension_semantics = [#tpu.dimension_semantics<parallel>], iteration_bounds = array<i64: 1>, scalar_prefetch = 0 : i64, scratch_operands = 0 : i64, tpu.core_type = #tpu.core_type<tc>, window_params = [{transform_indices = @transform_0, window_bounds = array<i64: 4, 8, 128>}, {pipeline_mode = #tpu.pipeline_mode<synchronous>, transform_indices = @transform_1, window_bounds = array<i64: 128, 128>}, {pipeline_mode = #tpu.pipeline_mode<synchronous>, transform_indices = @transform_2, window_bounds = array<i64: 1, 128>}, {pipeline_mode = #tpu.pipeline_mode<synchronous>, transform_indices = @transform_3, window_bounds = array<i64: 192, 256>}, {pipeline_mode = #tpu.pipeline_mode<synchronous>, transform_indices = @transform_4, window_bounds = array<i64: 1, 256>}, {pipeline_mode = #tpu.pipeline_mode<synchronous>, transform_indices = @transform_5, window_bounds = array<i64: 64, 256>}, {pipeline_mode = #tpu.pipeline_mode<synchronous>, transform_indices = @transform_6, window_bounds = array<i64: 1, 256>}, {transform_indices = @transform_7, window_bounds = array<i64: 8, 8, 128>}]} {
    %c0 = arith.constant 0 : index
    %c0_0 = arith.constant 0 : index
    %0 = vector.load %arg5[%c0, %c0_0] : memref<1x256xf32, #tpu.memory_space<vmem>>, vector<1x256xf32>
    %1 = vector.shape_cast %0 : vector<1x256xf32> to vector<1x256xf32>
    %2 = vector.broadcast %1 : vector<1x256xf32> to vector<8x256xf32>
    %c0_1 = arith.constant 0 : index
    %c0_2 = arith.constant 0 : index
    %3 = vector.load %arg7[%c0_1, %c0_2] : memref<1x256xf32, #tpu.memory_space<vmem>>, vector<1x256xf32>
    %4 = vector.shape_cast %3 : vector<1x256xf32> to vector<1x256xf32>
    %5 = vector.broadcast %4 : vector<1x256xf32> to vector<8x256xf32>
    %c0_3 = arith.constant 0 : index
    %c0_4 = arith.constant 0 : index
    %c0_5 = arith.constant 0 : index
    %6 = vector.load %arg1[%c0_3, %c0_4, %c0_5] : memref<4x8x128xf32, #tpu.memory_space<vmem>>, vector<4x8x128xf32>
    %7 = vector.shape_cast %6 : vector<4x8x128xf32> to vector<32x128xf32>
    %8 = arith.truncf %7 : vector<32x128xf32> to vector<32x128xbf16>
    %c0_6 = arith.constant 0 : index
    %c0_7 = arith.constant 0 : index
    %9 = vector.load %arg2[%c0_6, %c0_7] : memref<128x128xbf16, #tpu.memory_space<vmem>>, vector<128x128xbf16>
    %cst = arith.constant dense<0.000000e+00> : vector<32x128xf32>
    %10 = tpu.matmul %8, %9, %cst {dimension_numbers = #tpu.dot_dimension_numbers<[1], [0], [0], [1], [0, 0, 1, 1], [], []>} : vector<32x128xbf16>, vector<128x128xbf16>, vector<32x128xf32> -> vector<32x128xf32>
    %c0_8 = arith.constant 0 : index
    %c0_9 = arith.constant 0 : index
    %11 = vector.load %arg3[%c0_8, %c0_9] : memref<1x128xf32, #tpu.memory_space<vmem>>, vector<1x128xf32>
    %12 = vector.broadcast %11 : vector<1x128xf32> to vector<32x128xf32>
    %13 = arith.addf %10, %12 : vector<32x128xf32>
    %14 = vector.shape_cast %13 : vector<32x128xf32> to vector<4x8x128xf32>
    %cst_10 = arith.constant 0.000000e+00 : f32
    %15 = vector.broadcast %cst_10 : f32 to vector<4x8x128xf32>
    %16 = arith.maximumf %14, %15 : vector<4x8x128xf32>
    %cst_11 = arith.constant 0.000000e+00 : f32
    %17 = vector.broadcast %cst_11 : f32 to vector<8x64xf32>
    %cst_12 = arith.constant 0.000000e+00 : f32
    %18 = vector.broadcast %cst_12 : f32 to vector<8x64xf32>
    %19 = vector.extract_strided_slice %16 {offsets = [0, 0, 0], sizes = [1, 8, 128], strides = [1, 1, 1]} : vector<4x8x128xf32> to vector<1x8x128xf32>
    %20 = vector.shape_cast %19 : vector<1x8x128xf32> to vector<8x128xf32>
    %21 = tpu.concatenate %20, %17 in 1 : vector<8x128xf32>, vector<8x64xf32> -> vector<8x192xf32>
    %22 = arith.truncf %21 : vector<8x192xf32> to vector<8x192xbf16>
    %c0_13 = arith.constant 0 : index
    %c0_14 = arith.constant 0 : index
    %23 = vector.load %arg4[%c0_13, %c0_14] : memref<192x256xbf16, #tpu.memory_space<vmem>>, vector<192x256xbf16>
    %cst_15 = arith.constant dense<0.000000e+00> : vector<8x256xf32>
    %24 = tpu.matmul %22, %23, %cst_15 {dimension_numbers = #tpu.dot_dimension_numbers<[1], [0], [0], [1], [0, 0, 1, 1], [], []>} : vector<8x192xbf16>, vector<192x256xbf16>, vector<8x256xf32> -> vector<8x256xf32>
    %25 = arith.addf %24, %2 : vector<8x256xf32>
    %26 = vector.extract_strided_slice %25 {offsets = [0, 0], sizes = [8, 128], strides = [1, 1]} : vector<8x256xf32> to vector<8x128xf32>
    %27 = arith.negf %26 : vector<8x128xf32>
    %28 = math.exp %27 : vector<8x128xf32>
    %cst_16 = arith.constant 1.000000e+00 : f32
    %29 = vector.broadcast %cst_16 : f32 to vector<8x128xf32>
    %30 = arith.addf %29, %28 : vector<8x128xf32>
    %31 = arith.divf %29, %30 : vector<8x128xf32>
    %32 = vector.extract_strided_slice %25 {offsets = [0, 128], sizes = [8, 128], strides = [1, 1]} : vector<8x256xf32> to vector<8x128xf32>
    %33 = math.tanh %32 : vector<8x128xf32>
    %34 = arith.negf %32 : vector<8x128xf32>
    %35 = math.exp %34 : vector<8x128xf32>
    %cst_17 = arith.constant 1.000000e+00 : f32
    %36 = vector.broadcast %cst_17 : f32 to vector<8x128xf32>
    %37 = arith.addf %36, %35 : vector<8x128xf32>
    %38 = arith.divf %36, %37 : vector<8x128xf32>
    %39 = vector.extract_strided_slice %31 {offsets = [0, 0], sizes = [8, 64], strides = [1, 1]} : vector<8x128xf32> to vector<8x64xf32>
    %40 = vector.extract_strided_slice %31 {offsets = [0, 64], sizes = [8, 64], strides = [1, 1]} : vector<8x128xf32> to vector<8x64xf32>
    %41 = vector.extract_strided_slice %33 {offsets = [0, 0], sizes = [8, 64], strides = [1, 1]} : vector<8x128xf32> to vector<8x64xf32>
    %42 = vector.extract_strided_slice %38 {offsets = [0, 64], sizes = [8, 64], strides = [1, 1]} : vector<8x128xf32> to vector<8x64xf32>
    %43 = arith.mulf %40, %18 : vector<8x64xf32>
    %44 = arith.mulf %39, %41 : vector<8x64xf32>
    %45 = arith.addf %43, %44 : vector<8x64xf32>
    %46 = math.tanh %45 : vector<8x64xf32>
    %47 = arith.mulf %42, %46 : vector<8x64xf32>
    %48 = vector.extract_strided_slice %16 {offsets = [1, 0, 0], sizes = [1, 8, 128], strides = [1, 1, 1]} : vector<4x8x128xf32> to vector<1x8x128xf32>
    %49 = vector.shape_cast %48 : vector<1x8x128xf32> to vector<8x128xf32>
    %50 = tpu.concatenate %49, %47 in 1 : vector<8x128xf32>, vector<8x64xf32> -> vector<8x192xf32>
    %51 = arith.truncf %50 : vector<8x192xf32> to vector<8x192xbf16>
    %c0_18 = arith.constant 0 : index
    %c0_19 = arith.constant 0 : index
    %52 = vector.load %arg4[%c0_18, %c0_19] : memref<192x256xbf16, #tpu.memory_space<vmem>>, vector<192x256xbf16>
    %cst_20 = arith.constant dense<0.000000e+00> : vector<8x256xf32>
    %53 = tpu.matmul %51, %52, %cst_20 {dimension_numbers = #tpu.dot_dimension_numbers<[1], [0], [0], [1], [0, 0, 1, 1], [], []>} : vector<8x192xbf16>, vector<192x256xbf16>, vector<8x256xf32> -> vector<8x256xf32>
    %54 = arith.addf %53, %2 : vector<8x256xf32>
    %55 = vector.extract_strided_slice %54 {offsets = [0, 0], sizes = [8, 128], strides = [1, 1]} : vector<8x256xf32> to vector<8x128xf32>
    %56 = arith.negf %55 : vector<8x128xf32>
    %57 = math.exp %56 : vector<8x128xf32>
    %cst_21 = arith.constant 1.000000e+00 : f32
    %58 = vector.broadcast %cst_21 : f32 to vector<8x128xf32>
    %59 = arith.addf %58, %57 : vector<8x128xf32>
    %60 = arith.divf %58, %59 : vector<8x128xf32>
    %61 = vector.extract_strided_slice %54 {offsets = [0, 128], sizes = [8, 128], strides = [1, 1]} : vector<8x256xf32> to vector<8x128xf32>
    %62 = math.tanh %61 : vector<8x128xf32>
    %63 = arith.negf %61 : vector<8x128xf32>
    %64 = math.exp %63 : vector<8x128xf32>
    %cst_22 = arith.constant 1.000000e+00 : f32
    %65 = vector.broadcast %cst_22 : f32 to vector<8x128xf32>
    %66 = arith.addf %65, %64 : vector<8x128xf32>
    %67 = arith.divf %65, %66 : vector<8x128xf32>
    %68 = vector.extract_strided_slice %60 {offsets = [0, 0], sizes = [8, 64], strides = [1, 1]} : vector<8x128xf32> to vector<8x64xf32>
    %69 = vector.extract_strided_slice %60 {offsets = [0, 64], sizes = [8, 64], strides = [1, 1]} : vector<8x128xf32> to vector<8x64xf32>
    %70 = vector.extract_strided_slice %62 {offsets = [0, 0], sizes = [8, 64], strides = [1, 1]} : vector<8x128xf32> to vector<8x64xf32>
    %71 = vector.extract_strided_slice %67 {offsets = [0, 64], sizes = [8, 64], strides = [1, 1]} : vector<8x128xf32> to vector<8x64xf32>
    %72 = arith.mulf %69, %45 : vector<8x64xf32>
    %73 = arith.mulf %68, %70 : vector<8x64xf32>
    %74 = arith.addf %72, %73 : vector<8x64xf32>
    %75 = math.tanh %74 : vector<8x64xf32>
    %76 = arith.mulf %71, %75 : vector<8x64xf32>
    %77 = vector.extract_strided_slice %16 {offsets = [2, 0, 0], sizes = [1, 8, 128], strides = [1, 1, 1]} : vector<4x8x128xf32> to vector<1x8x128xf32>
    %78 = vector.shape_cast %77 : vector<1x8x128xf32> to vector<8x128xf32>
    %79 = tpu.concatenate %78, %76 in 1 : vector<8x128xf32>, vector<8x64xf32> -> vector<8x192xf32>
    %80 = arith.truncf %79 : vector<8x192xf32> to vector<8x192xbf16>
    %c0_23 = arith.constant 0 : index
    %c0_24 = arith.constant 0 : index
    %81 = vector.load %arg4[%c0_23, %c0_24] : memref<192x256xbf16, #tpu.memory_space<vmem>>, vector<192x256xbf16>
    %cst_25 = arith.constant dense<0.000000e+00> : vector<8x256xf32>
    %82 = tpu.matmul %80, %81, %cst_25 {dimension_numbers = #tpu.dot_dimension_numbers<[1], [0], [0], [1], [0, 0, 1, 1], [], []>} : vector<8x192xbf16>, vector<192x256xbf16>, vector<8x256xf32> -> vector<8x256xf32>
    %83 = arith.addf %82, %2 : vector<8x256xf32>
    %84 = vector.extract_strided_slice %83 {offsets = [0, 0], sizes = [8, 128], strides = [1, 1]} : vector<8x256xf32> to vector<8x128xf32>
    %85 = arith.negf %84 : vector<8x128xf32>
    %86 = math.exp %85 : vector<8x128xf32>
    %cst_26 = arith.constant 1.000000e+00 : f32
    %87 = vector.broadcast %cst_26 : f32 to vector<8x128xf32>
    %88 = arith.addf %87, %86 : vector<8x128xf32>
    %89 = arith.divf %87, %88 : vector<8x128xf32>
    %90 = vector.extract_strided_slice %83 {offsets = [0, 128], sizes = [8, 128], strides = [1, 1]} : vector<8x256xf32> to vector<8x128xf32>
    %91 = math.tanh %90 : vector<8x128xf32>
    %92 = arith.negf %90 : vector<8x128xf32>
    %93 = math.exp %92 : vector<8x128xf32>
    %cst_27 = arith.constant 1.000000e+00 : f32
    %94 = vector.broadcast %cst_27 : f32 to vector<8x128xf32>
    %95 = arith.addf %94, %93 : vector<8x128xf32>
    %96 = arith.divf %94, %95 : vector<8x128xf32>
    %97 = vector.extract_strided_slice %89 {offsets = [0, 0], sizes = [8, 64], strides = [1, 1]} : vector<8x128xf32> to vector<8x64xf32>
    %98 = vector.extract_strided_slice %89 {offsets = [0, 64], sizes = [8, 64], strides = [1, 1]} : vector<8x128xf32> to vector<8x64xf32>
    %99 = vector.extract_strided_slice %91 {offsets = [0, 0], sizes = [8, 64], strides = [1, 1]} : vector<8x128xf32> to vector<8x64xf32>
    %100 = vector.extract_strided_slice %96 {offsets = [0, 64], sizes = [8, 64], strides = [1, 1]} : vector<8x128xf32> to vector<8x64xf32>
    %101 = arith.mulf %98, %74 : vector<8x64xf32>
    %102 = arith.mulf %97, %99 : vector<8x64xf32>
    %103 = arith.addf %101, %102 : vector<8x64xf32>
    %104 = math.tanh %103 : vector<8x64xf32>
    %105 = arith.mulf %100, %104 : vector<8x64xf32>
    %106 = vector.extract_strided_slice %16 {offsets = [3, 0, 0], sizes = [1, 8, 128], strides = [1, 1, 1]} : vector<4x8x128xf32> to vector<1x8x128xf32>
    %107 = vector.shape_cast %106 : vector<1x8x128xf32> to vector<8x128xf32>
    %108 = tpu.concatenate %107, %105 in 1 : vector<8x128xf32>, vector<8x64xf32> -> vector<8x192xf32>
    %109 = arith.truncf %108 : vector<8x192xf32> to vector<8x192xbf16>
    %c0_28 = arith.constant 0 : index
    %c0_29 = arith.constant 0 : index
    %110 = vector.load %arg4[%c0_28, %c0_29] : memref<192x256xbf16, #tpu.memory_space<vmem>>, vector<192x256xbf16>
    %cst_30 = arith.constant dense<0.000000e+00> : vector<8x256xf32>
    %111 = tpu.matmul %109, %110, %cst_30 {dimension_numbers = #tpu.dot_dimension_numbers<[1], [0], [0], [1], [0, 0, 1, 1], [], []>} : vector<8x192xbf16>, vector<192x256xbf16>, vector<8x256xf32> -> vector<8x256xf32>
    %112 = arith.addf %111, %2 : vector<8x256xf32>
    %113 = vector.extract_strided_slice %112 {offsets = [0, 0], sizes = [8, 128], strides = [1, 1]} : vector<8x256xf32> to vector<8x128xf32>
    %114 = arith.negf %113 : vector<8x128xf32>
    %115 = math.exp %114 : vector<8x128xf32>
    %cst_31 = arith.constant 1.000000e+00 : f32
    %116 = vector.broadcast %cst_31 : f32 to vector<8x128xf32>
    %117 = arith.addf %116, %115 : vector<8x128xf32>
    %118 = arith.divf %116, %117 : vector<8x128xf32>
    %119 = vector.extract_strided_slice %112 {offsets = [0, 128], sizes = [8, 128], strides = [1, 1]} : vector<8x256xf32> to vector<8x128xf32>
    %120 = math.tanh %119 : vector<8x128xf32>
    %121 = arith.negf %119 : vector<8x128xf32>
    %122 = math.exp %121 : vector<8x128xf32>
    %cst_32 = arith.constant 1.000000e+00 : f32
    %123 = vector.broadcast %cst_32 : f32 to vector<8x128xf32>
    %124 = arith.addf %123, %122 : vector<8x128xf32>
    %125 = arith.divf %123, %124 : vector<8x128xf32>
    %126 = vector.extract_strided_slice %118 {offsets = [0, 0], sizes = [8, 64], strides = [1, 1]} : vector<8x128xf32> to vector<8x64xf32>
    %127 = vector.extract_strided_slice %118 {offsets = [0, 64], sizes = [8, 64], strides = [1, 1]} : vector<8x128xf32> to vector<8x64xf32>
    %128 = vector.extract_strided_slice %120 {offsets = [0, 0], sizes = [8, 64], strides = [1, 1]} : vector<8x128xf32> to vector<8x64xf32>
    %129 = vector.extract_strided_slice %125 {offsets = [0, 64], sizes = [8, 64], strides = [1, 1]} : vector<8x128xf32> to vector<8x64xf32>
    %130 = arith.mulf %127, %103 : vector<8x64xf32>
    %131 = arith.mulf %126, %128 : vector<8x64xf32>
    %132 = arith.addf %130, %131 : vector<8x64xf32>
    %133 = math.tanh %132 : vector<8x64xf32>
    %134 = arith.mulf %129, %133 : vector<8x64xf32>
    %135 = arith.truncf %134 : vector<8x64xf32> to vector<8x64xbf16>
    %c0_33 = arith.constant 0 : index
    %c0_34 = arith.constant 0 : index
    %136 = vector.load %arg6[%c0_33, %c0_34] : memref<64x256xbf16, #tpu.memory_space<vmem>>, vector<64x256xbf16>
    %cst_35 = arith.constant dense<0.000000e+00> : vector<8x256xf32>
    %137 = tpu.matmul %135, %136, %cst_35 {dimension_numbers = #tpu.dot_dimension_numbers<[1], [0], [0], [1], [0, 0, 1, 1], [], []>} : vector<8x64xbf16>, vector<64x256xbf16>, vector<8x256xf32> -> vector<8x256xf32>
    %138 = arith.addf %137, %5 : vector<8x256xf32>
    %139 = vector.extract_strided_slice %138 {offsets = [0, 0], sizes = [8, 128], strides = [1, 1]} : vector<8x256xf32> to vector<8x128xf32>
    %c3 = arith.constant 3 : index
    %c0_36 = arith.constant 0 : index
    %c0_37 = arith.constant 0 : index
    %140 = vector.load %arg1[%c3, %c0_36, %c0_37] : memref<4x8x128xf32, #tpu.memory_space<vmem>>, vector<1x8x128xf32>
    %141 = vector.shape_cast %140 : vector<1x8x128xf32> to vector<8x128xf32>
    %142 = arith.addf %139, %141 : vector<8x128xf32>
    %143 = vector.extract_strided_slice %138 {offsets = [0, 128], sizes = [8, 128], strides = [1, 1]} : vector<8x256xf32> to vector<8x128xf32>
    %144 = vector.extract_strided_slice %14 {offsets = [3, 0, 0], sizes = [1, 8, 128], strides = [1, 1, 1]} : vector<4x8x128xf32> to vector<1x8x128xf32>
    %145 = vector.shape_cast %144 : vector<1x8x128xf32> to vector<8x128xf32>
    %146 = arith.addf %143, %145 : vector<8x128xf32>
    %c0_38 = arith.constant 0 : index
    %c0_39 = arith.constant 0 : index
    %c0_40 = arith.constant 0 : index
    %147 = vector.load %arg8[%c0_38, %c0_39, %c0_40] : memref<8x8x128xf32, #tpu.memory_space<vmem>>, vector<1x8x128xf32>
    %148 = vector.shape_cast %147 : vector<1x8x128xf32> to vector<8x128xf32>
    %149 = vector.shape_cast %142 : vector<8x128xf32> to vector<1x8x128xf32>
    tpu.vector_store %arg8[%c0_38, %c0_39, %c0_40], %149 {strides = array<i32>} : memref<8x8x128xf32, #tpu.memory_space<vmem>>, vector<1x8x128xf32>,
    %cst_41 = arith.constant 0.000000e+00 : f32
    %150 = vector.broadcast %cst_41 : f32 to vector<8x128xf32>
    %151 = arith.maximumf %146, %150 : vector<8x128xf32>
    %152 = tpu.concatenate %151, %134 in 1 : vector<8x128xf32>, vector<8x64xf32> -> vector<8x192xf32>
    %153 = arith.truncf %152 : vector<8x192xf32> to vector<8x192xbf16>
    %c0_42 = arith.constant 0 : index
    %c0_43 = arith.constant 0 : index
    %154 = vector.load %arg4[%c0_42, %c0_43] : memref<192x256xbf16, #tpu.memory_space<vmem>>, vector<192x256xbf16>
    %cst_44 = arith.constant dense<0.000000e+00> : vector<8x256xf32>
    %155 = tpu.matmul %153, %154, %cst_44 {dimension_numbers = #tpu.dot_dimension_numbers<[1], [0], [0], [1], [0, 0, 1, 1], [], []>} : vector<8x192xbf16>, vector<192x256xbf16>, vector<8x256xf32> -> vector<8x256xf32>
    %156 = arith.addf %155, %2 : vector<8x256xf32>
    %157 = vector.extract_strided_slice %156 {offsets = [0, 0], sizes = [8, 128], strides = [1, 1]} : vector<8x256xf32> to vector<8x128xf32>
    %158 = arith.negf %157 : vector<8x128xf32>
    %159 = math.exp %158 : vector<8x128xf32>
    %cst_45 = arith.constant 1.000000e+00 : f32
    %160 = vector.broadcast %cst_45 : f32 to vector<8x128xf32>
    %161 = arith.addf %160, %159 : vector<8x128xf32>
    %162 = arith.divf %160, %161 : vector<8x128xf32>
    %163 = vector.extract_strided_slice %156 {offsets = [0, 128], sizes = [8, 128], strides = [1, 1]} : vector<8x256xf32> to vector<8x128xf32>
    %164 = math.tanh %163 : vector<8x128xf32>
    %165 = arith.negf %163 : vector<8x128xf32>
    %166 = math.exp %165 : vector<8x128xf32>
    %cst_46 = arith.constant 1.000000e+00 : f32
    %167 = vector.broadcast %cst_46 : f32 to vector<8x128xf32>
    %168 = arith.addf %167, %166 : vector<8x128xf32>
    %169 = arith.divf %167, %168 : vector<8x128xf32>
    %170 = vector.extract_strided_slice %162 {offsets = [0, 0], sizes = [8, 64], strides = [1, 1]} : vector<8x128xf32> to vector<8x64xf32>
    %171 = vector.extract_strided_slice %162 {offsets = [0, 64], sizes = [8, 64], strides = [1, 1]} : vector<8x128xf32> to vector<8x64xf32>
    %172 = vector.extract_strided_slice %164 {offsets = [0, 0], sizes = [8, 64], strides = [1, 1]} : vector<8x128xf32> to vector<8x64xf32>
    %173 = vector.extract_strided_slice %169 {offsets = [0, 64], sizes = [8, 64], strides = [1, 1]} : vector<8x128xf32> to vector<8x64xf32>
    %174 = arith.mulf %171, %132 : vector<8x64xf32>
    %175 = arith.mulf %170, %172 : vector<8x64xf32>
    %176 = arith.addf %174, %175 : vector<8x64xf32>
    %177 = math.tanh %176 : vector<8x64xf32>
    %178 = arith.mulf %173, %177 : vector<8x64xf32>
    %179 = arith.truncf %178 : vector<8x64xf32> to vector<8x64xbf16>
    %c0_47 = arith.constant 0 : index
    %c0_48 = arith.constant 0 : index
    %180 = vector.load %arg6[%c0_47, %c0_48] : memref<64x256xbf16, #tpu.memory_space<vmem>>, vector<64x256xbf16>
    %cst_49 = arith.constant dense<0.000000e+00> : vector<8x256xf32>
    %181 = tpu.matmul %179, %180, %cst_49 {dimension_numbers = #tpu.dot_dimension_numbers<[1], [0], [0], [1], [0, 0, 1, 1], [], []>} : vector<8x64xbf16>, vector<64x256xbf16>, vector<8x256xf32> -> vector<8x256xf32>
    %182 = arith.addf %181, %5 : vector<8x256xf32>
    %183 = vector.extract_strided_slice %182 {offsets = [0, 0], sizes = [8, 128], strides = [1, 1]} : vector<8x256xf32> to vector<8x128xf32>
    %184 = arith.addf %142, %183 : vector<8x128xf32>
    %185 = vector.extract_strided_slice %182 {offsets = [0, 128], sizes = [8, 128], strides = [1, 1]} : vector<8x256xf32> to vector<8x128xf32>
    %186 = arith.addf %146, %185 : vector<8x128xf32>
    %c1 = arith.constant 1 : index
    %c0_50 = arith.constant 0 : index
    %c0_51 = arith.constant 0 : index
    %187 = vector.load %arg8[%c1, %c0_50, %c0_51] : memref<8x8x128xf32, #tpu.memory_space<vmem>>, vector<1x8x128xf32>
    %188 = vector.shape_cast %187 : vector<1x8x128xf32> to vector<8x128xf32>
    %189 = vector.shape_cast %184 : vector<8x128xf32> to vector<1x8x128xf32>
    tpu.vector_store %arg8[%c1, %c0_50, %c0_51], %189 {strides = array<i32>} : memref<8x8x128xf32, #tpu.memory_space<vmem>>, vector<1x8x128xf32>,
    %cst_52 = arith.constant 0.000000e+00 : f32
    %190 = vector.broadcast %cst_52 : f32 to vector<8x128xf32>
    %191 = arith.maximumf %186, %190 : vector<8x128xf32>
    %192 = tpu.concatenate %191, %178 in 1 : vector<8x128xf32>, vector<8x64xf32> -> vector<8x192xf32>
    %193 = arith.truncf %192 : vector<8x192xf32> to vector<8x192xbf16>
    %c0_53 = arith.constant 0 : index
    %c0_54 = arith.constant 0 : index
    %194 = vector.load %arg4[%c0_53, %c0_54] : memref<192x256xbf16, #tpu.memory_space<vmem>>, vector<192x256xbf16>
    %cst_55 = arith.constant dense<0.000000e+00> : vector<8x256xf32>
    %195 = tpu.matmul %193, %194, %cst_55 {dimension_numbers = #tpu.dot_dimension_numbers<[1], [0], [0], [1], [0, 0, 1, 1], [], []>} : vector<8x192xbf16>, vector<192x256xbf16>, vector<8x256xf32> -> vector<8x256xf32>
    %196 = arith.addf %195, %2 : vector<8x256xf32>
    %197 = vector.extract_strided_slice %196 {offsets = [0, 0], sizes = [8, 128], strides = [1, 1]} : vector<8x256xf32> to vector<8x128xf32>
    %198 = arith.negf %197 : vector<8x128xf32>
    %199 = math.exp %198 : vector<8x128xf32>
    %cst_56 = arith.constant 1.000000e+00 : f32
    %200 = vector.broadcast %cst_56 : f32 to vector<8x128xf32>
    %201 = arith.addf %200, %199 : vector<8x128xf32>
    %202 = arith.divf %200, %201 : vector<8x128xf32>
    %203 = vector.extract_strided_slice %196 {offsets = [0, 128], sizes = [8, 128], strides = [1, 1]} : vector<8x256xf32> to vector<8x128xf32>
    %204 = math.tanh %203 : vector<8x128xf32>
    %205 = arith.negf %203 : vector<8x128xf32>
    %206 = math.exp %205 : vector<8x128xf32>
    %cst_57 = arith.constant 1.000000e+00 : f32
    %207 = vector.broadcast %cst_57 : f32 to vector<8x128xf32>
    %208 = arith.addf %207, %206 : vector<8x128xf32>
    %209 = arith.divf %207, %208 : vector<8x128xf32>
    %210 = vector.extract_strided_slice %202 {offsets = [0, 0], sizes = [8, 64], strides = [1, 1]} : vector<8x128xf32> to vector<8x64xf32>
    %211 = vector.extract_strided_slice %202 {offsets = [0, 64], sizes = [8, 64], strides = [1, 1]} : vector<8x128xf32> to vector<8x64xf32>
    %212 = vector.extract_strided_slice %204 {offsets = [0, 0], sizes = [8, 64], strides = [1, 1]} : vector<8x128xf32> to vector<8x64xf32>
    %213 = vector.extract_strided_slice %209 {offsets = [0, 64], sizes = [8, 64], strides = [1, 1]} : vector<8x128xf32> to vector<8x64xf32>
    %214 = arith.mulf %211, %176 : vector<8x64xf32>
    %215 = arith.mulf %210, %212 : vector<8x64xf32>
    %216 = arith.addf %214, %215 : vector<8x64xf32>
    %217 = math.tanh %216 : vector<8x64xf32>
    %218 = arith.mulf %213, %217 : vector<8x64xf32>
    %219 = arith.truncf %218 : vector<8x64xf32> to vector<8x64xbf16>
    %c0_58 = arith.constant 0 : index
    %c0_59 = arith.constant 0 : index
    %220 = vector.load %arg6[%c0_58, %c0_59] : memref<64x256xbf16, #tpu.memory_space<vmem>>, vector<64x256xbf16>
    %cst_60 = arith.constant dense<0.000000e+00> : vector<8x256xf32>
    %221 = tpu.matmul %219, %220, %cst_60 {dimension_numbers = #tpu.dot_dimension_numbers<[1], [0], [0], [1], [0, 0, 1, 1], [], []>} : vector<8x64xbf16>, vector<64x256xbf16>, vector<8x256xf32> -> vector<8x256xf32>
    %222 = arith.addf %221, %5 : vector<8x256xf32>
    %223 = vector.extract_strided_slice %222 {offsets = [0, 0], sizes = [8, 128], strides = [1, 1]} : vector<8x256xf32> to vector<8x128xf32>
    %224 = arith.addf %184, %223 : vector<8x128xf32>
    %225 = vector.extract_strided_slice %222 {offsets = [0, 128], sizes = [8, 128], strides = [1, 1]} : vector<8x256xf32> to vector<8x128xf32>
    %226 = arith.addf %186, %225 : vector<8x128xf32>
    %c2 = arith.constant 2 : index
    %c0_61 = arith.constant 0 : index
    %c0_62 = arith.constant 0 : index
    %227 = vector.load %arg8[%c2, %c0_61, %c0_62] : memref<8x8x128xf32, #tpu.memory_space<vmem>>, vector<1x8x128xf32>
    %228 = vector.shape_cast %227 : vector<1x8x128xf32> to vector<8x128xf32>
    %229 = vector.shape_cast %224 : vector<8x128xf32> to vector<1x8x128xf32>
    tpu.vector_store %arg8[%c2, %c0_61, %c0_62], %229 {strides = array<i32>} : memref<8x8x128xf32, #tpu.memory_space<vmem>>, vector<1x8x128xf32>,
    %cst_63 = arith.constant 0.000000e+00 : f32
    %230 = vector.broadcast %cst_63 : f32 to vector<8x128xf32>
    %231 = arith.maximumf %226, %230 : vector<8x128xf32>
    %232 = tpu.concatenate %231, %218 in 1 : vector<8x128xf32>, vector<8x64xf32> -> vector<8x192xf32>
    %233 = arith.truncf %232 : vector<8x192xf32> to vector<8x192xbf16>
    %c0_64 = arith.constant 0 : index
    %c0_65 = arith.constant 0 : index
    %234 = vector.load %arg4[%c0_64, %c0_65] : memref<192x256xbf16, #tpu.memory_space<vmem>>, vector<192x256xbf16>
    %cst_66 = arith.constant dense<0.000000e+00> : vector<8x256xf32>
    %235 = tpu.matmul %233, %234, %cst_66 {dimension_numbers = #tpu.dot_dimension_numbers<[1], [0], [0], [1], [0, 0, 1, 1], [], []>} : vector<8x192xbf16>, vector<192x256xbf16>, vector<8x256xf32> -> vector<8x256xf32>
    %236 = arith.addf %235, %2 : vector<8x256xf32>
    %237 = vector.extract_strided_slice %236 {offsets = [0, 0], sizes = [8, 128], strides = [1, 1]} : vector<8x256xf32> to vector<8x128xf32>
    %238 = arith.negf %237 : vector<8x128xf32>
    %239 = math.exp %238 : vector<8x128xf32>
    %cst_67 = arith.constant 1.000000e+00 : f32
    %240 = vector.broadcast %cst_67 : f32 to vector<8x128xf32>
    %241 = arith.addf %240, %239 : vector<8x128xf32>
    %242 = arith.divf %240, %241 : vector<8x128xf32>
    %243 = vector.extract_strided_slice %236 {offsets = [0, 128], sizes = [8, 128], strides = [1, 1]} : vector<8x256xf32> to vector<8x128xf32>
    %244 = math.tanh %243 : vector<8x128xf32>
    %245 = arith.negf %243 : vector<8x128xf32>
    %246 = math.exp %245 : vector<8x128xf32>
    %cst_68 = arith.constant 1.000000e+00 : f32
    %247 = vector.broadcast %cst_68 : f32 to vector<8x128xf32>
    %248 = arith.addf %247, %246 : vector<8x128xf32>
    %249 = arith.divf %247, %248 : vector<8x128xf32>
    %250 = vector.extract_strided_slice %242 {offsets = [0, 0], sizes = [8, 64], strides = [1, 1]} : vector<8x128xf32> to vector<8x64xf32>
    %251 = vector.extract_strided_slice %242 {offsets = [0, 64], sizes = [8, 64], strides = [1, 1]} : vector<8x128xf32> to vector<8x64xf32>
    %252 = vector.extract_strided_slice %244 {offsets = [0, 0], sizes = [8, 64], strides = [1, 1]} : vector<8x128xf32> to vector<8x64xf32>
    %253 = vector.extract_strided_slice %249 {offsets = [0, 64], sizes = [8, 64], strides = [1, 1]} : vector<8x128xf32> to vector<8x64xf32>
    %254 = arith.mulf %251, %216 : vector<8x64xf32>
    %255 = arith.mulf %250, %252 : vector<8x64xf32>
    %256 = arith.addf %254, %255 : vector<8x64xf32>
    %257 = math.tanh %256 : vector<8x64xf32>
    %258 = arith.mulf %253, %257 : vector<8x64xf32>
    %259 = arith.truncf %258 : vector<8x64xf32> to vector<8x64xbf16>
    %c0_69 = arith.constant 0 : index
    %c0_70 = arith.constant 0 : index
    %260 = vector.load %arg6[%c0_69, %c0_70] : memref<64x256xbf16, #tpu.memory_space<vmem>>, vector<64x256xbf16>
    %cst_71 = arith.constant dense<0.000000e+00> : vector<8x256xf32>
    %261 = tpu.matmul %259, %260, %cst_71 {dimension_numbers = #tpu.dot_dimension_numbers<[1], [0], [0], [1], [0, 0, 1, 1], [], []>} : vector<8x64xbf16>, vector<64x256xbf16>, vector<8x256xf32> -> vector<8x256xf32>
    %262 = arith.addf %261, %5 : vector<8x256xf32>
    %263 = vector.extract_strided_slice %262 {offsets = [0, 0], sizes = [8, 128], strides = [1, 1]} : vector<8x256xf32> to vector<8x128xf32>
    %264 = arith.addf %224, %263 : vector<8x128xf32>
    %265 = vector.extract_strided_slice %262 {offsets = [0, 128], sizes = [8, 128], strides = [1, 1]} : vector<8x256xf32> to vector<8x128xf32>
    %266 = arith.addf %226, %265 : vector<8x128xf32>
    %c3_72 = arith.constant 3 : index
    %c0_73 = arith.constant 0 : index
    %c0_74 = arith.constant 0 : index
    %267 = vector.load %arg8[%c3_72, %c0_73, %c0_74] : memref<8x8x128xf32, #tpu.memory_space<vmem>>, vector<1x8x128xf32>
    %268 = vector.shape_cast %267 : vector<1x8x128xf32> to vector<8x128xf32>
    %269 = vector.shape_cast %264 : vector<8x128xf32> to vector<1x8x128xf32>
    tpu.vector_store %arg8[%c3_72, %c0_73, %c0_74], %269 {strides = array<i32>} : memref<8x8x128xf32, #tpu.memory_space<vmem>>, vector<1x8x128xf32>,
    %cst_75 = arith.constant 0.000000e+00 : f32
    %270 = vector.broadcast %cst_75 : f32 to vector<8x128xf32>
    %271 = arith.maximumf %266, %270 : vector<8x128xf32>
    %272 = tpu.concatenate %271, %258 in 1 : vector<8x128xf32>, vector<8x64xf32> -> vector<8x192xf32>
    %273 = arith.truncf %272 : vector<8x192xf32> to vector<8x192xbf16>
    %c0_76 = arith.constant 0 : index
    %c0_77 = arith.constant 0 : index
    %274 = vector.load %arg4[%c0_76, %c0_77] : memref<192x256xbf16, #tpu.memory_space<vmem>>, vector<192x256xbf16>
    %cst_78 = arith.constant dense<0.000000e+00> : vector<8x256xf32>
    %275 = tpu.matmul %273, %274, %cst_78 {dimension_numbers = #tpu.dot_dimension_numbers<[1], [0], [0], [1], [0, 0, 1, 1], [], []>} : vector<8x192xbf16>, vector<192x256xbf16>, vector<8x256xf32> -> vector<8x256xf32>
    %276 = arith.addf %275, %2 : vector<8x256xf32>
    %277 = vector.extract_strided_slice %276 {offsets = [0, 0], sizes = [8, 128], strides = [1, 1]} : vector<8x256xf32> to vector<8x128xf32>
    %278 = arith.negf %277 : vector<8x128xf32>
    %279 = math.exp %278 : vector<8x128xf32>
    %cst_79 = arith.constant 1.000000e+00 : f32
    %280 = vector.broadcast %cst_79 : f32 to vector<8x128xf32>
    %281 = arith.addf %280, %279 : vector<8x128xf32>
    %282 = arith.divf %280, %281 : vector<8x128xf32>
    %283 = vector.extract_strided_slice %276 {offsets = [0, 128], sizes = [8, 128], strides = [1, 1]} : vector<8x256xf32> to vector<8x128xf32>
    %284 = math.tanh %283 : vector<8x128xf32>
    %285 = arith.negf %283 : vector<8x128xf32>
    %286 = math.exp %285 : vector<8x128xf32>
    %cst_80 = arith.constant 1.000000e+00 : f32
    %287 = vector.broadcast %cst_80 : f32 to vector<8x128xf32>
    %288 = arith.addf %287, %286 : vector<8x128xf32>
    %289 = arith.divf %287, %288 : vector<8x128xf32>
    %290 = vector.extract_strided_slice %282 {offsets = [0, 0], sizes = [8, 64], strides = [1, 1]} : vector<8x128xf32> to vector<8x64xf32>
    %291 = vector.extract_strided_slice %282 {offsets = [0, 64], sizes = [8, 64], strides = [1, 1]} : vector<8x128xf32> to vector<8x64xf32>
    %292 = vector.extract_strided_slice %284 {offsets = [0, 0], sizes = [8, 64], strides = [1, 1]} : vector<8x128xf32> to vector<8x64xf32>
    %293 = vector.extract_strided_slice %289 {offsets = [0, 64], sizes = [8, 64], strides = [1, 1]} : vector<8x128xf32> to vector<8x64xf32>
    %294 = arith.mulf %291, %256 : vector<8x64xf32>
    %295 = arith.mulf %290, %292 : vector<8x64xf32>
    %296 = arith.addf %294, %295 : vector<8x64xf32>
    %297 = math.tanh %296 : vector<8x64xf32>
    %298 = arith.mulf %293, %297 : vector<8x64xf32>
    %299 = arith.truncf %298 : vector<8x64xf32> to vector<8x64xbf16>
    %c0_81 = arith.constant 0 : index
    %c0_82 = arith.constant 0 : index
    %300 = vector.load %arg6[%c0_81, %c0_82] : memref<64x256xbf16, #tpu.memory_space<vmem>>, vector<64x256xbf16>
    %cst_83 = arith.constant dense<0.000000e+00> : vector<8x256xf32>
    %301 = tpu.matmul %299, %300, %cst_83 {dimension_numbers = #tpu.dot_dimension_numbers<[1], [0], [0], [1], [0, 0, 1, 1], [], []>} : vector<8x64xbf16>, vector<64x256xbf16>, vector<8x256xf32> -> vector<8x256xf32>
    %302 = arith.addf %301, %5 : vector<8x256xf32>
    %303 = vector.extract_strided_slice %302 {offsets = [0, 0], sizes = [8, 128], strides = [1, 1]} : vector<8x256xf32> to vector<8x128xf32>
    %304 = arith.addf %264, %303 : vector<8x128xf32>
    %305 = vector.extract_strided_slice %302 {offsets = [0, 128], sizes = [8, 128], strides = [1, 1]} : vector<8x256xf32> to vector<8x128xf32>
    %306 = arith.addf %266, %305 : vector<8x128xf32>
    %c4 = arith.constant 4 : index
    %c0_84 = arith.constant 0 : index
    %c0_85 = arith.constant 0 : index
    %307 = vector.load %arg8[%c4, %c0_84, %c0_85] : memref<8x8x128xf32, #tpu.memory_space<vmem>>, vector<1x8x128xf32>
    %308 = vector.shape_cast %307 : vector<1x8x128xf32> to vector<8x128xf32>
    %309 = vector.shape_cast %304 : vector<8x128xf32> to vector<1x8x128xf32>
    tpu.vector_store %arg8[%c4, %c0_84, %c0_85], %309 {strides = array<i32>} : memref<8x8x128xf32, #tpu.memory_space<vmem>>, vector<1x8x128xf32>,
    %cst_86 = arith.constant 0.000000e+00 : f32
    %310 = vector.broadcast %cst_86 : f32 to vector<8x128xf32>
    %311 = arith.maximumf %306, %310 : vector<8x128xf32>
    %312 = tpu.concatenate %311, %298 in 1 : vector<8x128xf32>, vector<8x64xf32> -> vector<8x192xf32>
    %313 = arith.truncf %312 : vector<8x192xf32> to vector<8x192xbf16>
    %c0_87 = arith.constant 0 : index
    %c0_88 = arith.constant 0 : index
    %314 = vector.load %arg4[%c0_87, %c0_88] : memref<192x256xbf16, #tpu.memory_space<vmem>>, vector<192x256xbf16>
    %cst_89 = arith.constant dense<0.000000e+00> : vector<8x256xf32>
    %315 = tpu.matmul %313, %314, %cst_89 {dimension_numbers = #tpu.dot_dimension_numbers<[1], [0], [0], [1], [0, 0, 1, 1], [], []>} : vector<8x192xbf16>, vector<192x256xbf16>, vector<8x256xf32> -> vector<8x256xf32>
    %316 = arith.addf %315, %2 : vector<8x256xf32>
    %317 = vector.extract_strided_slice %316 {offsets = [0, 0], sizes = [8, 128], strides = [1, 1]} : vector<8x256xf32> to vector<8x128xf32>
    %318 = arith.negf %317 : vector<8x128xf32>
    %319 = math.exp %318 : vector<8x128xf32>
    %cst_90 = arith.constant 1.000000e+00 : f32
    %320 = vector.broadcast %cst_90 : f32 to vector<8x128xf32>
    %321 = arith.addf %320, %319 : vector<8x128xf32>
    %322 = arith.divf %320, %321 : vector<8x128xf32>
    %323 = vector.extract_strided_slice %316 {offsets = [0, 128], sizes = [8, 128], strides = [1, 1]} : vector<8x256xf32> to vector<8x128xf32>
    %324 = math.tanh %323 : vector<8x128xf32>
    %325 = arith.negf %323 : vector<8x128xf32>
    %326 = math.exp %325 : vector<8x128xf32>
    %cst_91 = arith.constant 1.000000e+00 : f32
    %327 = vector.broadcast %cst_91 : f32 to vector<8x128xf32>
    %328 = arith.addf %327, %326 : vector<8x128xf32>
    %329 = arith.divf %327, %328 : vector<8x128xf32>
    %330 = vector.extract_strided_slice %322 {offsets = [0, 0], sizes = [8, 64], strides = [1, 1]} : vector<8x128xf32> to vector<8x64xf32>
    %331 = vector.extract_strided_slice %322 {offsets = [0, 64], sizes = [8, 64], strides = [1, 1]} : vector<8x128xf32> to vector<8x64xf32>
    %332 = vector.extract_strided_slice %324 {offsets = [0, 0], sizes = [8, 64], strides = [1, 1]} : vector<8x128xf32> to vector<8x64xf32>
    %333 = vector.extract_strided_slice %329 {offsets = [0, 64], sizes = [8, 64], strides = [1, 1]} : vector<8x128xf32> to vector<8x64xf32>
    %334 = arith.mulf %331, %296 : vector<8x64xf32>
    %335 = arith.mulf %330, %332 : vector<8x64xf32>
    %336 = arith.addf %334, %335 : vector<8x64xf32>
    %337 = math.tanh %336 : vector<8x64xf32>
    %338 = arith.mulf %333, %337 : vector<8x64xf32>
    %339 = arith.truncf %338 : vector<8x64xf32> to vector<8x64xbf16>
    %c0_92 = arith.constant 0 : index
    %c0_93 = arith.constant 0 : index
    %340 = vector.load %arg6[%c0_92, %c0_93] : memref<64x256xbf16, #tpu.memory_space<vmem>>, vector<64x256xbf16>
    %cst_94 = arith.constant dense<0.000000e+00> : vector<8x256xf32>
    %341 = tpu.matmul %339, %340, %cst_94 {dimension_numbers = #tpu.dot_dimension_numbers<[1], [0], [0], [1], [0, 0, 1, 1], [], []>} : vector<8x64xbf16>, vector<64x256xbf16>, vector<8x256xf32> -> vector<8x256xf32>
    %342 = arith.addf %341, %5 : vector<8x256xf32>
    %343 = vector.extract_strided_slice %342 {offsets = [0, 0], sizes = [8, 128], strides = [1, 1]} : vector<8x256xf32> to vector<8x128xf32>
    %344 = arith.addf %304, %343 : vector<8x128xf32>
    %345 = vector.extract_strided_slice %342 {offsets = [0, 128], sizes = [8, 128], strides = [1, 1]} : vector<8x256xf32> to vector<8x128xf32>
    %346 = arith.addf %306, %345 : vector<8x128xf32>
    %c5 = arith.constant 5 : index
    %c0_95 = arith.constant 0 : index
    %c0_96 = arith.constant 0 : index
    %347 = vector.load %arg8[%c5, %c0_95, %c0_96] : memref<8x8x128xf32, #tpu.memory_space<vmem>>, vector<1x8x128xf32>
    %348 = vector.shape_cast %347 : vector<1x8x128xf32> to vector<8x128xf32>
    %349 = vector.shape_cast %344 : vector<8x128xf32> to vector<1x8x128xf32>
    tpu.vector_store %arg8[%c5, %c0_95, %c0_96], %349 {strides = array<i32>} : memref<8x8x128xf32, #tpu.memory_space<vmem>>, vector<1x8x128xf32>,
    %cst_97 = arith.constant 0.000000e+00 : f32
    %350 = vector.broadcast %cst_97 : f32 to vector<8x128xf32>
    %351 = arith.maximumf %346, %350 : vector<8x128xf32>
    %352 = tpu.concatenate %351, %338 in 1 : vector<8x128xf32>, vector<8x64xf32> -> vector<8x192xf32>
    %353 = arith.truncf %352 : vector<8x192xf32> to vector<8x192xbf16>
    %c0_98 = arith.constant 0 : index
    %c0_99 = arith.constant 0 : index
    %354 = vector.load %arg4[%c0_98, %c0_99] : memref<192x256xbf16, #tpu.memory_space<vmem>>, vector<192x256xbf16>
    %cst_100 = arith.constant dense<0.000000e+00> : vector<8x256xf32>
    %355 = tpu.matmul %353, %354, %cst_100 {dimension_numbers = #tpu.dot_dimension_numbers<[1], [0], [0], [1], [0, 0, 1, 1], [], []>} : vector<8x192xbf16>, vector<192x256xbf16>, vector<8x256xf32> -> vector<8x256xf32>
    %356 = arith.addf %355, %2 : vector<8x256xf32>
    %357 = vector.extract_strided_slice %356 {offsets = [0, 0], sizes = [8, 128], strides = [1, 1]} : vector<8x256xf32> to vector<8x128xf32>
    %358 = arith.negf %357 : vector<8x128xf32>
    %359 = math.exp %358 : vector<8x128xf32>
    %cst_101 = arith.constant 1.000000e+00 : f32
    %360 = vector.broadcast %cst_101 : f32 to vector<8x128xf32>
    %361 = arith.addf %360, %359 : vector<8x128xf32>
    %362 = arith.divf %360, %361 : vector<8x128xf32>
    %363 = vector.extract_strided_slice %356 {offsets = [0, 128], sizes = [8, 128], strides = [1, 1]} : vector<8x256xf32> to vector<8x128xf32>
    %364 = math.tanh %363 : vector<8x128xf32>
    %365 = arith.negf %363 : vector<8x128xf32>
    %366 = math.exp %365 : vector<8x128xf32>
    %cst_102 = arith.constant 1.000000e+00 : f32
    %367 = vector.broadcast %cst_102 : f32 to vector<8x128xf32>
    %368 = arith.addf %367, %366 : vector<8x128xf32>
    %369 = arith.divf %367, %368 : vector<8x128xf32>
    %370 = vector.extract_strided_slice %362 {offsets = [0, 0], sizes = [8, 64], strides = [1, 1]} : vector<8x128xf32> to vector<8x64xf32>
    %371 = vector.extract_strided_slice %362 {offsets = [0, 64], sizes = [8, 64], strides = [1, 1]} : vector<8x128xf32> to vector<8x64xf32>
    %372 = vector.extract_strided_slice %364 {offsets = [0, 0], sizes = [8, 64], strides = [1, 1]} : vector<8x128xf32> to vector<8x64xf32>
    %373 = vector.extract_strided_slice %369 {offsets = [0, 64], sizes = [8, 64], strides = [1, 1]} : vector<8x128xf32> to vector<8x64xf32>
    %374 = arith.mulf %371, %336 : vector<8x64xf32>
    %375 = arith.mulf %370, %372 : vector<8x64xf32>
    %376 = arith.addf %374, %375 : vector<8x64xf32>
    %377 = math.tanh %376 : vector<8x64xf32>
    %378 = arith.mulf %373, %377 : vector<8x64xf32>
    %379 = arith.truncf %378 : vector<8x64xf32> to vector<8x64xbf16>
    %c0_103 = arith.constant 0 : index
    %c0_104 = arith.constant 0 : index
    %380 = vector.load %arg6[%c0_103, %c0_104] : memref<64x256xbf16, #tpu.memory_space<vmem>>, vector<64x256xbf16>
    %cst_105 = arith.constant dense<0.000000e+00> : vector<8x256xf32>
    %381 = tpu.matmul %379, %380, %cst_105 {dimension_numbers = #tpu.dot_dimension_numbers<[1], [0], [0], [1], [0, 0, 1, 1], [], []>} : vector<8x64xbf16>, vector<64x256xbf16>, vector<8x256xf32> -> vector<8x256xf32>
    %382 = arith.addf %381, %5 : vector<8x256xf32>
    %383 = vector.extract_strided_slice %382 {offsets = [0, 0], sizes = [8, 128], strides = [1, 1]} : vector<8x256xf32> to vector<8x128xf32>
    %384 = arith.addf %344, %383 : vector<8x128xf32>
    %385 = vector.extract_strided_slice %382 {offsets = [0, 128], sizes = [8, 128], strides = [1, 1]} : vector<8x256xf32> to vector<8x128xf32>
    %386 = arith.addf %346, %385 : vector<8x128xf32>
    %c6 = arith.constant 6 : index
    %c0_106 = arith.constant 0 : index
    %c0_107 = arith.constant 0 : index
    %387 = vector.load %arg8[%c6, %c0_106, %c0_107] : memref<8x8x128xf32, #tpu.memory_space<vmem>>, vector<1x8x128xf32>
    %388 = vector.shape_cast %387 : vector<1x8x128xf32> to vector<8x128xf32>
    %389 = vector.shape_cast %384 : vector<8x128xf32> to vector<1x8x128xf32>
    tpu.vector_store %arg8[%c6, %c0_106, %c0_107], %389 {strides = array<i32>} : memref<8x8x128xf32, #tpu.memory_space<vmem>>, vector<1x8x128xf32>,
    %cst_108 = arith.constant 0.000000e+00 : f32
    %390 = vector.broadcast %cst_108 : f32 to vector<8x128xf32>
    %391 = arith.maximumf %386, %390 : vector<8x128xf32>
    %392 = tpu.concatenate %391, %378 in 1 : vector<8x128xf32>, vector<8x64xf32> -> vector<8x192xf32>
    %393 = arith.truncf %392 : vector<8x192xf32> to vector<8x192xbf16>
    %c0_109 = arith.constant 0 : index
    %c0_110 = arith.constant 0 : index
    %394 = vector.load %arg4[%c0_109, %c0_110] : memref<192x256xbf16, #tpu.memory_space<vmem>>, vector<192x256xbf16>
    %cst_111 = arith.constant dense<0.000000e+00> : vector<8x256xf32>
    %395 = tpu.matmul %393, %394, %cst_111 {dimension_numbers = #tpu.dot_dimension_numbers<[1], [0], [0], [1], [0, 0, 1, 1], [], []>} : vector<8x192xbf16>, vector<192x256xbf16>, vector<8x256xf32> -> vector<8x256xf32>
    %396 = arith.addf %395, %2 : vector<8x256xf32>
    %397 = vector.extract_strided_slice %396 {offsets = [0, 0], sizes = [8, 128], strides = [1, 1]} : vector<8x256xf32> to vector<8x128xf32>
    %398 = arith.negf %397 : vector<8x128xf32>
    %399 = math.exp %398 : vector<8x128xf32>
    %cst_112 = arith.constant 1.000000e+00 : f32
    %400 = vector.broadcast %cst_112 : f32 to vector<8x128xf32>
    %401 = arith.addf %400, %399 : vector<8x128xf32>
    %402 = arith.divf %400, %401 : vector<8x128xf32>
    %403 = vector.extract_strided_slice %396 {offsets = [0, 128], sizes = [8, 128], strides = [1, 1]} : vector<8x256xf32> to vector<8x128xf32>
    %404 = math.tanh %403 : vector<8x128xf32>
    %405 = arith.negf %403 : vector<8x128xf32>
    %406 = math.exp %405 : vector<8x128xf32>
    %cst_113 = arith.constant 1.000000e+00 : f32
    %407 = vector.broadcast %cst_113 : f32 to vector<8x128xf32>
    %408 = arith.addf %407, %406 : vector<8x128xf32>
    %409 = arith.divf %407, %408 : vector<8x128xf32>
    %410 = vector.extract_strided_slice %402 {offsets = [0, 0], sizes = [8, 64], strides = [1, 1]} : vector<8x128xf32> to vector<8x64xf32>
    %411 = vector.extract_strided_slice %402 {offsets = [0, 64], sizes = [8, 64], strides = [1, 1]} : vector<8x128xf32> to vector<8x64xf32>
    %412 = vector.extract_strided_slice %404 {offsets = [0, 0], sizes = [8, 64], strides = [1, 1]} : vector<8x128xf32> to vector<8x64xf32>
    %413 = vector.extract_strided_slice %409 {offsets = [0, 64], sizes = [8, 64], strides = [1, 1]} : vector<8x128xf32> to vector<8x64xf32>
    %414 = arith.mulf %411, %376 : vector<8x64xf32>
    %415 = arith.mulf %410, %412 : vector<8x64xf32>
    %416 = arith.addf %414, %415 : vector<8x64xf32>
    %417 = math.tanh %416 : vector<8x64xf32>
    %418 = arith.mulf %413, %417 : vector<8x64xf32>
    %419 = arith.truncf %418 : vector<8x64xf32> to vector<8x64xbf16>
    %c0_114 = arith.constant 0 : index
    %c0_115 = arith.constant 0 : index
    %420 = vector.load %arg6[%c0_114, %c0_115] : memref<64x256xbf16, #tpu.memory_space<vmem>>, vector<64x256xbf16>
    %cst_116 = arith.constant dense<0.000000e+00> : vector<8x256xf32>
    %421 = tpu.matmul %419, %420, %cst_116 {dimension_numbers = #tpu.dot_dimension_numbers<[1], [0], [0], [1], [0, 0, 1, 1], [], []>} : vector<8x64xbf16>, vector<64x256xbf16>, vector<8x256xf32> -> vector<8x256xf32>
    %422 = arith.addf %421, %5 : vector<8x256xf32>
    %423 = vector.extract_strided_slice %422 {offsets = [0, 0], sizes = [8, 128], strides = [1, 1]} : vector<8x256xf32> to vector<8x128xf32>
    %424 = arith.addf %384, %423 : vector<8x128xf32>
    %c7 = arith.constant 7 : index
    %c0_117 = arith.constant 0 : index
    %c0_118 = arith.constant 0 : index
    %425 = vector.load %arg8[%c7, %c0_117, %c0_118] : memref<8x8x128xf32, #tpu.memory_space<vmem>>, vector<1x8x128xf32>
    %426 = vector.shape_cast %425 : vector<1x8x128xf32> to vector<8x128xf32>
    %427 = vector.shape_cast %424 : vector<8x128xf32> to vector<1x8x128xf32>
    tpu.vector_store %arg8[%c7, %c0_117, %c0_118], %427 {strides = array<i32>} : memref<8x8x128xf32, #tpu.memory_space<vmem>>, vector<1x8x128xf32>,
    return
  }
  func.func @transform_0(%arg0: i32) -> (i32, i32, i32) {
    %c0_i32 = arith.constant 0 : i32
    %c0_i32_0 = arith.constant 0 : i32
    %c0_i32_1 = arith.constant 0 : i32
    return %c0_i32, %arg0, %c0_i32_0 : i32, i32, i32
  }
  func.func @transform_1(%arg0: i32) -> (i32, i32) {
    %c0_i32 = arith.constant 0 : i32
    %c0_i32_0 = arith.constant 0 : i32
    %c0_i32_1 = arith.constant 0 : i32
    return %c0_i32, %c0_i32_0 : i32, i32
  }
  func.func @transform_2(%arg0: i32) -> (i32, i32) {
    %c0_i32 = arith.constant 0 : i32
    %c0_i32_0 = arith.constant 0 : i32
    %c0_i32_1 = arith.constant 0 : i32
    return %c0_i32, %c0_i32_0 : i32, i32
  }
  func.func @transform_3(%arg0: i32) -> (i32, i32) {
    %c0_i32 = arith.constant 0 : i32
    %c0_i32_0 = arith.constant 0 : i32
    %c0_i32_1 = arith.constant 0 : i32
    return %c0_i32, %c0_i32_0 : i32, i32
  }
  func.func @transform_4(%arg0: i32) -> (i32, i32) {
    %c0_i32 = arith.constant 0 : i32
    %c0_i32_0 = arith.constant 0 : i32
    %c0_i32_1 = arith.constant 0 : i32
    return %c0_i32, %c0_i32_0 : i32, i32
  }
  func.func @transform_5(%arg0: i32) -> (i32, i32) {
    %c0_i32 = arith.constant 0 : i32
    %c0_i32_0 = arith.constant 0 : i32
    %c0_i32_1 = arith.constant 0 : i32
    return %c0_i32, %c0_i32_0 : i32, i32
  }
  func.func @transform_6(%arg0: i32) -> (i32, i32) {
    %c0_i32 = arith.constant 0 : i32
    %c0_i32_0 = arith.constant 0 : i32
    %c0_i32_1 = arith.constant 0 : i32
    return %c0_i32, %c0_i32_0 : i32, i32
  }
  func.func @transform_7(%arg0: i32) -> (i32, i32, i32) {
    %c0_i32 = arith.constant 0 : i32
    %c0_i32_0 = arith.constant 0 : i32
    %c0_i32_1 = arith.constant 0 : i32
    return %c0_i32, %arg0, %c0_i32_0 : i32, i32, i32
  }
}

</mosaic_0001>

<llo_original>
// kernel: tpu_custom_call.1
$region0: #{tpu_custom_call.1}
  #allocation0 [shape = 'u32[]', space=smem, size = 0x4, offset = 0x4, fixed_abs, tag = 'smem constant byte address 0x4 - core index']
  #allocation1 [shape = 'u32[144,128]{1,0:T(1,128)}', space=vmem, size = 0x12000, scoped, tag = 'internal scratch']
  %s0 = inlined_call_operand.hbm [shape: f32[4,8,128], index: 0, kind: input, shape index: {}]
  %s1 = inlined_call_operand.hbm [shape: bf16[128,128], index: 1, kind: input, shape index: {}]
  %s2 = inlined_call_operand.vmem [shape: f32[1,128], index: 2, kind: input, shape index: {}]
  %s3 = inlined_call_operand.hbm [shape: bf16[192,256], index: 3, kind: input, shape index: {}]
  %s4 = inlined_call_operand.vmem [shape: f32[1,256], index: 4, kind: input, shape index: {}]
  %s5 = inlined_call_operand.hbm [shape: bf16[64,256], index: 5, kind: input, shape index: {}]
  %s6 = inlined_call_operand.vmem [shape: f32[1,256], index: 6, kind: input, shape index: {}]
  %s7 = inlined_call_operand.hbm [shape: f32[8,8,128], index: 7, kind: output, shape index: {}]
  %s8 = sld [smem:[#allocation0]]
  $region54: #{tpu_custom_call.1} parent=0
    _
  %s10 = ssub.s32 1, %s8
  %s11 = scalar_select 0, %s10, %s8
  $region1: #{tpu_custom_call.1} parent=0
    #allocation2 [shape = 'u8[16384]{0}', space=vmem, size = 0x4000, scoped, tag = 'input window, operand 0, single buffered']
    #allocation3 [shape = 's32[1]{0}', space=sflag, size = 0x4, scoped, tag = 'scoped memory for tpu_custom_call.1']
    #allocation4 [shape = 's32[1]{0}', space=sflag, size = 0x4, scoped, tag = 'scoped memory for tpu_custom_call.1']
    #allocation5 [shape = 'u8[32768]{0}', space=vmem, size = 0x8000, scoped, tag = 'input window, operand 1, single buffered']
    #allocation6 [shape = 's32[1]{0}', space=sflag, size = 0x4, scoped, tag = 'scoped memory for tpu_custom_call.1']
    #allocation7 [shape = 'u8[98304]{0}', space=vmem, size = 0x18000, scoped, tag = 'input window, operand 3, single buffered']
    #allocation8 [shape = 'u8[32768]{0}', space=vmem, size = 0x8000, scoped, tag = 'input window, operand 5, single buffered']
    #allocation9 [shape = 's32[1]{0}', space=sflag, size = 0x4, scoped, tag = 'scoped memory for tpu_custom_call.1']
    #allocation10 [shape = 'u8[32768]{0}', space=vmem, size = 0x8000, scoped, tag = 'output window, operand 0, single buffered']
    %12 = vsyncpa [#allocation3], 0
    %13 = vsyncpa [#allocation6], 0
    %14 = vsyncpa [#allocation9], 0
    %15 = vsyncpa [#allocation4], 0
    // Predicated region
    $region2: #{tpu_custom_call.1} parent=1 // pred_check
      _
    $region3: #{tpu_custom_call.1} parent=1 // pred_check_branch
      %17 = sbr.rel (0) target = $region5
    $region4: #{tpu_custom_call.1} parent=1 // pred_region
      %s19 = ssub.s32 512, 512
      %20 = vsyncadd [#allocation3], %s19
      %s21 = sshll.u32 [#allocation2], 4
      %s22 = int_to_ptr.vmem [resolvable:$true] %s21
      %27 = dma.hbm_to_vmem [thread:$0]  %s0, 512, %s22, [#allocation3], 128, 128, 8
    $region5: #{tpu_custom_call.1} parent=1 // pred_fallthru
      _
    // Predicated region
    $region6: #{tpu_custom_call.1} parent=1 // pred_check
      _
    $region7: #{tpu_custom_call.1} parent=1 // pred_check_branch
      %29 = sbr.rel (0) target = $region9
    $region8: #{tpu_custom_call.1} parent=1 // pred_region
      %s31 = ssub.s32 1024, 1024
      %32 = vsyncadd [#allocation6], %s31
      %s33 = sshll.u32 [#allocation5], 4
      %s34 = int_to_ptr.vmem [resolvable:$true] %s33
      %39 = dma.hbm_to_vmem [thread:$0]  %s1, 1024, %s34, [#allocation6], 64, 64, 4
    $region9: #{tpu_custom_call.1} parent=1 // pred_fallthru
      _
    // Predicated region
    $region10: #{tpu_custom_call.1} parent=1 // pred_check
      _
    $region11: #{tpu_custom_call.1} parent=1 // pred_check_branch
      %41 = sbr.rel (0) target = $region13
    $region12: #{tpu_custom_call.1} parent=1 // pred_region
      _
    $region13: #{tpu_custom_call.1} parent=1 // pred_fallthru
      _
    // Predicated region
    $region14: #{tpu_custom_call.1} parent=1 // pred_check
      _
    $region15: #{tpu_custom_call.1} parent=1 // pred_check_branch
      %43 = sbr.rel (0) target = $region17
    $region16: #{tpu_custom_call.1} parent=1 // pred_region
      %s45 = ssub.s32 3072, 3072
      %46 = vsyncadd [#allocation6], %s45
      %s47 = sshll.u32 [#allocation7], 4
      %s48 = int_to_ptr.vmem [resolvable:$true] %s47
      %53 = dma.hbm_to_vmem [thread:$0]  %s3, 3072, %s48, [#allocation6], 128, 128, 8
    $region17: #{tpu_custom_call.1} parent=1 // pred_fallthru
      _
    // Predicated region
    $region18: #{tpu_custom_call.1} parent=1 // pred_check
      _
    $region19: #{tpu_custom_call.1} parent=1 // pred_check_branch
      %55 = sbr.rel (0) target = $region21
    $region20: #{tpu_custom_call.1} parent=1 // pred_region
      _
    $region21: #{tpu_custom_call.1} parent=1 // pred_fallthru
      _
    // Predicated region
    $region22: #{tpu_custom_call.1} parent=1 // pred_check
      _
    $region23: #{tpu_custom_call.1} parent=1 // pred_check_branch
      %57 = sbr.rel (0) target = $region25
    $region24: #{tpu_custom_call.1} parent=1 // pred_region
      %s59 = ssub.s32 1024, 1024
      %60 = vsyncadd [#allocation9], %s59
      %s61 = sshll.u32 [#allocation8], 4
      %s62 = int_to_ptr.vmem [resolvable:$true] %s61
      %67 = dma.hbm_to_vmem [thread:$0]  %s5, 1024, %s62, [#allocation9], 128, 128, 8
    $region25: #{tpu_custom_call.1} parent=1 // pred_fallthru
      _
    // Predicated region
    $region26: #{tpu_custom_call.1} parent=1 // pred_check
      _
    $region27: #{tpu_custom_call.1} parent=1 // pred_check_branch
      %69 = sbr.rel (0) target = $region29
    $region28: #{tpu_custom_call.1} parent=1 // pred_region
      _
    $region29: #{tpu_custom_call.1} parent=1 // pred_fallthru
      _
    // Predicated region
    $region30: #{tpu_custom_call.1} parent=1 // pred_check
      _
    $region31: #{tpu_custom_call.1} parent=1 // pred_check_branch
      %71 = sbr.rel (0) target = $region33
    $region32: #{tpu_custom_call.1} parent=1 // pred_region
      %72 = dma.done [#allocation3], 512
    $region33: #{tpu_custom_call.1} parent=1 // pred_fallthru
      _
    // Predicated region
    $region34: #{tpu_custom_call.1} parent=1 // pred_check
      _
    $region35: #{tpu_custom_call.1} parent=1 // pred_check_branch
      %74 = sbr.rel (0) target = $region37
    $region36: #{tpu_custom_call.1} parent=1 // pred_region
      %75 = dma.done [#allocation6], 1024
    $region37: #{tpu_custom_call.1} parent=1 // pred_fallthru
      _
    // Predicated region
    $region38: #{tpu_custom_call.1} parent=1 // pred_check
      _
    $region39: #{tpu_custom_call.1} parent=1 // pred_check_branch
      %77 = sbr.rel (0) target = $region41
    $region40: #{tpu_custom_call.1} parent=1 // pred_region
      %78 = dma.done [#allocation6], 3072
    $region41: #{tpu_custom_call.1} parent=1 // pred_fallthru
      _
    // Predicated region
    $region42: #{tpu_custom_call.1} parent=1 // pred_check
      _
    $region43: #{tpu_custom_call.1} parent=1 // pred_check_branch
      %80 = sbr.rel (0) target = $region45
    $region44: #{tpu_custom_call.1} parent=1 // pred_region
      %81 = dma.done [#allocation9], 1024
    $region45: #{tpu_custom_call.1} parent=1 // pred_fallthru
      _
    %v83 = vld [vmem:[%s4] sm:$0x3]
    %v85 = vlaneseq
    %v86 = vshrl.u32 %v85, 7
    %v87 = vsub.s32 0, %v86
    %v88 = vrot.slane %v83, %v87
    %v89 = vlaneseq
    %v90 = vshrl.u32 %v89, 7
    %v91 = vsub.s32 1, %v90
    %v92 = vrot.slane %v83, %v91
    %v95 = vld [vmem:[%s6] sm:$0x3]
    %v97 = vlaneseq
    %v98 = vshrl.u32 %v97, 7
    %v99 = vsub.s32 0, %v98
    %v100 = vrot.slane %v95, %v99
    %v101 = vlaneseq
    %v102 = vshrl.u32 %v101, 7
    %v103 = vsub.s32 1, %v102
    %v104 = vrot.slane %v95, %v103
    %v107 = vld [vmem:[#allocation2] sm:$0xff]
    %v108 = vld [vmem:[#allocation2 + $0x8] sm:$0xff]
    %v109 = vld [vmem:[#allocation2 + $0x10] sm:$0xff]
    %v110 = vld [vmem:[#allocation2 + $0x18] sm:$0xff]
    %v111 = vpack.c.bf16 %v108, %v107
    %v112 = vpack.c.bf16 %v110, %v109
    %v113 = vld [vmem:[#allocation5] sm:$0xf]
    %v114 = vld [vmem:[#allocation5 + $0x4] sm:$0xf]
    %v115 = vld [vmem:[#allocation5 + $0x8] sm:$0xf]
    %v116 = vld [vmem:[#allocation5 + $0xc] sm:$0xf]
    %v117 = vld [vmem:[#allocation5 + $0x10] sm:$0xf]
    %v118 = vld [vmem:[#allocation5 + $0x14] sm:$0xf]
    %v119 = vld [vmem:[#allocation5 + $0x18] sm:$0xf]
    %v120 = vld [vmem:[#allocation5 + $0x1c] sm:$0xf]
    %v121 = vld [vmem:[#allocation5 + $0x20] sm:$0xf]
    %v122 = vld [vmem:[#allocation5 + $0x24] sm:$0xf]
    %v123 = vld [vmem:[#allocation5 + $0x28] sm:$0xf]
    %v124 = vld [vmem:[#allocation5 + $0x2c] sm:$0xf]
    %v125 = vld [vmem:[#allocation5 + $0x30] sm:$0xf]
    %v126 = vld [vmem:[#allocation5 + $0x34] sm:$0xf]
    %v127 = vld [vmem:[#allocation5 + $0x38] sm:$0xf]
    %v128 = vld [vmem:[#allocation5 + $0x3c] sm:$0xf]
    %v129 = vld [vmem:[%s2] sm:$0x1]
    %v131 = vlaneseq
    %v132 = vshrl.u32 %v131, 7
    %v133 = vsub.s32 0, %v132
    %v134 = vrot.slane %v129, %v133
    %v152 = vunpack.c.l.b16 %v113
    %v153 = vunpack.c.l.b16 %v114
    %v154 = vunpack.c.l.b16 %v115
    %v155 = vunpack.c.l.b16 %v116
    %v156 = vunpack.c.l.b16 %v117
    %v157 = vunpack.c.l.b16 %v118
    %v158 = vunpack.c.l.b16 %v119
    %v159 = vunpack.c.l.b16 %v120
    %v160 = vunpack.c.l.b16 %v121
    %v161 = vunpack.c.l.b16 %v122
    %v162 = vunpack.c.l.b16 %v123
    %v163 = vunpack.c.l.b16 %v124
    %v164 = vunpack.c.l.b16 %v125
    %v165 = vunpack.c.l.b16 %v126
    %v166 = vunpack.c.l.b16 %v127
    %v167 = vunpack.c.l.b16 %v128
    %v168 = vpack.c.b16 %v153, %v152
    %v169 = vpack.c.b16 %v155, %v154
    %v170 = vpack.c.b16 %v157, %v156
    %v171 = vpack.c.b16 %v159, %v158
    %v172 = vpack.c.b16 %v161, %v160
    %v173 = vpack.c.b16 %v163, %v162
    %v174 = vpack.c.b16 %v165, %v164
    %v175 = vpack.c.b16 %v167, %v166
    %184 = vmatprep.subr.bf16.mxu0 0
    %185 = vmatpush1.bf16.msra.mxu0 %v168
    %186 = vmatprep.subr.bf16.mxu0 0
    %187 = vmatpush1.bf16.msra.mxu0 %v169
    %188 = vmatprep.subr.bf16.mxu0 0
    %189 = vmatpush1.bf16.msra.mxu0 %v170
    %190 = vmatprep.subr.bf16.mxu0 0
    %191 = vmatpush1.bf16.msra.mxu0 %v171
    %192 = vmatprep.subr.bf16.mxu0 0
    %193 = vmatpush1.bf16.msra.mxu0 %v172
    %194 = vmatprep.subr.bf16.mxu0 0
    %195 = vmatpush1.bf16.msra.mxu0 %v173
    %196 = vmatprep.subr.bf16.mxu0 0
    %197 = vmatpush1.bf16.msra.mxu0 %v174
    %198 = vmatprep.subr.bf16.mxu0 0
    %199 = vmatpush1.bf16.msra.mxu0 %v175
    %200 = vmatprep.subr.bf16.mxu0 0
    %201 = vmatpush1.bf16.msra.mxu0 0
    %202 = vmatprep.subr.bf16.mxu0 0
    %203 = vmatpush1.bf16.msra.mxu0 0
    %204 = vmatprep.subr.bf16.mxu0 0
    %205 = vmatpush1.bf16.msra.mxu0 0
    %206 = vmatprep.subr.bf16.mxu0 0
    %207 = vmatpush1.bf16.msra.mxu0 0
    %208 = vmatprep.subr.bf16.mxu0 0
    %209 = vmatpush1.bf16.msra.mxu0 0
    %210 = vmatprep.subr.bf16.mxu0 0
    %211 = vmatpush1.bf16.msra.mxu0 0
    %212 = vmatprep.subr.bf16.mxu0 0
    %213 = vmatpush1.bf16.msra.mxu0 0
    %214 = vmatprep.subr.bf16.mxu0 0
    %215 = vmatpush1.bf16.msra.mxu0 0
    %216 = vmatprep.mubr.bf16.mxu0 0
    %217 = vmatmul.mubr.bf16.gmra.mrb[0].mxu0 %v111
    %v218 = vpop.f32.mrb[0].mxu0
    %v219 = vadd.f32 %v134, %v218
    %v220 = vpop.f32.mrb[0].mxu0
    %v221 = vpop.f32.mrb[0].mxu0
    %v222 = vadd.f32 %v134, %v221
    %v223 = vpop.f32.mrb[0].mxu0
    %224 = vmatprep.mubr.bf16.mxu0 0
    %225 = vmatmul.mubr.bf16.gmra.mrb[0].mxu0 %v112
    %v226 = vpop.f32.mrb[0].mxu0
    %v227 = vadd.f32 %v134, %v226
    %v228 = vpop.f32.mrb[0].mxu0
    %v229 = vpop.f32.mrb[0].mxu0
    %v230 = vadd.f32 %v134, %v229
    %v231 = vpop.f32.mrb[0].mxu0
    %232 = vdwg.mxu0
    %v233 = vmax.f32 %v219, 0.0
    %v234 = vmax.f32 %v222, 0.0
    %v235 = vmax.f32 %v227, 0.0
    %v236 = vmax.f32 %v230, 0.0
    %v237 = vpack.c.bf16 %v233, %v233
    %v238 = vpack.c.bf16 0.0, 0.0
    %v239 = vld [vmem:[#allocation7] sm:$0xff]
    %v240 = vld [vmem:[#allocation7 + $0x8] sm:$0xff]
    %v241 = vld [vmem:[#allocation7 + $0x10] sm:$0xff]
    %v242 = vld [vmem:[#allocation7 + $0x18] sm:$0xff]
    %v243 = vld [vmem:[#allocation7 + $0x20] sm:$0xff]
    %v244 = vld [vmem:[#allocation7 + $0x28] sm:$0xff]
    %v245 = vld [vmem:[#allocation7 + $0x30] sm:$0xff]
    %v246 = vld [vmem:[#allocation7 + $0x38] sm:$0xff]
    %v247 = vld [vmem:[#allocation7 + $0x40] sm:$0xff]
    %v248 = vld [vmem:[#allocation7 + $0x48] sm:$0xff]
    %v249 = vld [vmem:[#allocation7 + $0x50] sm:$0xff]
    %v250 = vld [vmem:[#allocation7 + $0x58] sm:$0xff]
    %v251 = vld [vmem:[#allocation7 + $0x60] sm:$0xff]
    %v252 = vld [vmem:[#allocation7 + $0x68] sm:$0xff]
    %v253 = vld [vmem:[#allocation7 + $0x70] sm:$0xff]
    %v254 = vld [vmem:[#allocation7 + $0x78] sm:$0xff]
    %v255 = vld [vmem:[#allocation7 + $0x80] sm:$0xff]
    %v256 = vld [vmem:[#allocation7 + $0x88] sm:$0xff]
    %v257 = vld [vmem:[#allocation7 + $0x90] sm:$0xff]
    %v258 = vld [vmem:[#allocation7 + $0x98] sm:$0xff]
    %v259 = vld [vmem:[#allocation7 + $0xa0] sm:$0xff]
    %v260 = vld [vmem:[#allocation7 + $0xa8] sm:$0xff]
    %v261 = vld [vmem:[#allocation7 + $0xb0] sm:$0xff]
    %v262 = vld [vmem:[#allocation7 + $0xb8] sm:$0xff]
    %v287 = vunpack.c.l.b16 %v239
    %v288 = vunpack.c.h.b16 %v239
    %v289 = vunpack.c.l.b16 %v240
    %v290 = vunpack.c.h.b16 %v240
    %v291 = vunpack.c.l.b16 %v241
    %v292 = vunpack.c.h.b16 %v241
    %v293 = vunpack.c.l.b16 %v242
    %v294 = vunpack.c.h.b16 %v242
    %v295 = vunpack.c.l.b16 %v243
    %v296 = vunpack.c.h.b16 %v243
    %v297 = vunpack.c.l.b16 %v244
    %v298 = vunpack.c.h.b16 %v244
    %v299 = vunpack.c.l.b16 %v245
    %v300 = vunpack.c.h.b16 %v245
    %v301 = vunpack.c.l.b16 %v246
    %v302 = vunpack.c.h.b16 %v246
    %v303 = vunpack.c.l.b16 %v247
    %v304 = vunpack.c.h.b16 %v247
    %v305 = vunpack.c.l.b16 %v248
    %v306 = vunpack.c.h.b16 %v248
    %v307 = vunpack.c.l.b16 %v249
    %v308 = vunpack.c.h.b16 %v249
    %v309 = vunpack.c.l.b16 %v250
    %v310 = vunpack.c.h.b16 %v250
    %v311 = vunpack.c.l.b16 %v251
    %v312 = vunpack.c.h.b16 %v251
    %v313 = vunpack.c.l.b16 %v252
    %v314 = vunpack.c.h.b16 %v252
    %v315 = vunpack.c.l.b16 %v253
    %v316 = vunpack.c.h.b16 %v253
    %v317 = vunpack.c.l.b16 %v254
    %v318 = vunpack.c.h.b16 %v254
    %v319 = vunpack.c.l.b16 %v255
    %v320 = vunpack.c.h.b16 %v255
    %v321 = vunpack.c.l.b16 %v256
    %v322 = vunpack.c.h.b16 %v256
    %v323 = vunpack.c.l.b16 %v257
    %v324 = vunpack.c.h.b16 %v257
    %v325 = vunpack.c.l.b16 %v258
    %v326 = vunpack.c.h.b16 %v258
    %v327 = vunpack.c.l.b16 %v259
    %v328 = vunpack.c.h.b16 %v259
    %v329 = vunpack.c.l.b16 %v260
    %v330 = vunpack.c.h.b16 %v260
    %v331 = vunpack.c.l.b16 %v261
    %v332 = vunpack.c.h.b16 %v261
    %v333 = vunpack.c.l.b16 %v262
    %v334 = vunpack.c.h.b16 %v262
    %v335 = vpack.c.b16 %v289, %v287
    %v336 = vpack.c.b16 %v290, %v288
    %v337 = vpack.c.b16 %v293, %v291
    %v338 = vpack.c.b16 %v294, %v292
    %v339 = vpack.c.b16 %v297, %v295
    %v340 = vpack.c.b16 %v298, %v296
    %v341 = vpack.c.b16 %v301, %v299
    %v342 = vpack.c.b16 %v302, %v300
    %v343 = vpack.c.b16 %v305, %v303
    %v344 = vpack.c.b16 %v306, %v304
    %v345 = vpack.c.b16 %v309, %v307
    %v346 = vpack.c.b16 %v310, %v308
    %v347 = vpack.c.b16 %v313, %v311
    %v348 = vpack.c.b16 %v314, %v312
    %v349 = vpack.c.b16 %v317, %v315
    %v350 = vpack.c.b16 %v318, %v316
    %v351 = vpack.c.b16 %v321, %v319
    %v352 = vpack.c.b16 %v322, %v320
    %v353 = vpack.c.b16 %v325, %v323
    %v354 = vpack.c.b16 %v326, %v324
    %v355 = vpack.c.b16 %v329, %v327
    %v356 = vpack.c.b16 %v330, %v328
    %v357 = vpack.c.b16 %v333, %v331
    %v358 = vpack.c.b16 %v334, %v332
    %vm383 = vcmask 523264
    %v385 = vsel %vm383, %v238, 0
    %387 = vmatprep.subr.bf16.mxu0 %v336
    %388 = vmatpush1.bf16.msra.mxu0 %v335
    %389 = vmatprep.subr.bf16.mxu0 %v338
    %390 = vmatpush1.bf16.msra.mxu0 %v337
    %391 = vmatprep.subr.bf16.mxu0 %v340
    %392 = vmatpush1.bf16.msra.mxu0 %v339
    %393 = vmatprep.subr.bf16.mxu0 %v342
    %394 = vmatpush1.bf16.msra.mxu0 %v341
    %395 = vmatprep.subr.bf16.mxu0 %v344
    %396 = vmatpush1.bf16.msra.mxu0 %v343
    %397 = vmatprep.subr.bf16.mxu0 %v346
    %398 = vmatpush1.bf16.msra.mxu0 %v345
    %399 = vmatprep.subr.bf16.mxu0 %v348
    %400 = vmatpush1.bf16.msra.mxu0 %v347
    %401 = vmatprep.subr.bf16.mxu0 %v350
    %402 = vmatpush1.bf16.msra.mxu0 %v349
    %403 = vmatprep.subr.bf16.mxu0 %v352
    %404 = vmatpush1.bf16.msra.mxu0 %v351
    %405 = vmatprep.subr.bf16.mxu0 %v354
    %406 = vmatpush1.bf16.msra.mxu0 %v353
    %407 = vmatprep.subr.bf16.mxu0 %v356
    %408 = vmatpush1.bf16.msra.mxu0 %v355
    %409 = vmatprep.subr.bf16.mxu0 %v358
    %410 = vmatpush1.bf16.msra.mxu0 %v357
    %411 = vmatprep.subr.bf16.mxu0 0
    %412 = vmatpush1.bf16.msra.mxu0 0
    %413 = vmatprep.subr.bf16.mxu0 0
    %414 = vmatpush1.bf16.msra.mxu0 0
    %415 = vmatprep.subr.bf16.mxu0 0
    %416 = vmatpush1.bf16.msra.mxu0 0
    %417 = vmatprep.subr.bf16.mxu0 0
    %418 = vmatpush1.bf16.msra.mxu0 0
    %419 = vmatprep.mubr.bf16.mxu0 %v385
    %420 = vmatmul.mubr.bf16.gmra.mrb[0].mxu0 %v237
    %v421 = vpop.f32.mrb[0].mxu0
    %v422 = vadd.f32 %v88, %v421
    %v423 = vpop.f32.mrb[0].mxu0
    %v424 = vadd.f32 %v92, %v423
    %v425 = vpop.f32.mrb[0].mxu0
    %v426 = vpop.f32.mrb[0].mxu0
    %427 = vdwg.mxu0
    %v428 = vxor.u32 %v422, 2147483648
    %v429 = vmul.f32 %v428, 1.442695
    %v430 = vpow.pop %v429
    %v431 = vadd.f32 %v430, 1.0
    %v432 = vrcp.pop %v431
    %v433 = vmul.f32 1.0, %v432
    %v434 = vtanh.pop %v424
    %v435 = vxor.u32 %v424, 2147483648
    %v436 = vmul.f32 %v435, 1.442695
    %v437 = vpow.pop %v436
    %v438 = vadd.f32 %v437, 1.0
    %v439 = vrcp.pop %v438
    %v440 = vmul.f32 1.0, %v439
    %v441 = vmul.f32 %v433, 0.0
    %v442 = vmul.f32 %v433, %v434
    %444 = vrot.lane.b32.xlu0 %v442, 64
    %v445 = vpop.permute.xlu0 %444
    %v447 = vadd.f32 %v441, %v445
    %v448 = vtanh.pop %v447
    %v449 = vmul.f32 %v440, %v448
    %451 = vrot.lane.b32.xlu0 %v449, 64
    %v452 = vpop.permute.xlu0 %451
    %v454 = vpack.c.bf16 %v234, %v234
    %v455 = vpack.c.bf16 %v452, %v452
    %v457 = vsel %vm383, %v455, 0
    %459 = vmatprep.subr.bf16.mxu0 %v336
    %460 = vmatpush1.bf16.msra.mxu0 %v335
    %461 = vmatprep.subr.bf16.mxu0 %v338
    %462 = vmatpush1.bf16.msra.mxu0 %v337
    %463 = vmatprep.subr.bf16.mxu0 %v340
    %464 = vmatpush1.bf16.msra.mxu0 %v339
    %465 = vmatprep.subr.bf16.mxu0 %v342
    %466 = vmatpush1.bf16.msra.mxu0 %v341
    %467 = vmatprep.subr.bf16.mxu0 %v344
    %468 = vmatpush1.bf16.msra.mxu0 %v343
    %469 = vmatprep.subr.bf16.mxu0 %v346
    %470 = vmatpush1.bf16.msra.mxu0 %v345
    %471 = vmatprep.subr.bf16.mxu0 %v348
    %472 = vmatpush1.bf16.msra.mxu0 %v347
    %473 = vmatprep.subr.bf16.mxu0 %v350
    %474 = vmatpush1.bf16.msra.mxu0 %v349
    %475 = vmatprep.subr.bf16.mxu0 %v352
    %476 = vmatpush1.bf16.msra.mxu0 %v351
    %477 = vmatprep.subr.bf16.mxu0 %v354
    %478 = vmatpush1.bf16.msra.mxu0 %v353
    %479 = vmatprep.subr.bf16.mxu0 %v356
    %480 = vmatpush1.bf16.msra.mxu0 %v355
    %481 = vmatprep.subr.bf16.mxu0 %v358
    %482 = vmatpush1.bf16.msra.mxu0 %v357
    %483 = vmatprep.subr.bf16.mxu0 0
    %484 = vmatpush1.bf16.msra.mxu0 0
    %485 = vmatprep.subr.bf16.mxu0 0
    %486 = vmatpush1.bf16.msra.mxu0 0
    %487 = vmatprep.subr.bf16.mxu0 0
    %488 = vmatpush1.bf16.msra.mxu0 0
    %489 = vmatprep.subr.bf16.mxu0 0
    %490 = vmatpush1.bf16.msra.mxu0 0
    %491 = vmatprep.mubr.bf16.mxu0 %v457
    %492 = vmatmul.mubr.bf16.gmra.mrb[0].mxu0 %v454
    %v493 = vpop.f32.mrb[0].mxu0
    %v494 = vadd.f32 %v88, %v493
    %v495 = vpop.f32.mrb[0].mxu0
    %v496 = vadd.f32 %v92, %v495
    %v497 = vpop.f32.mrb[0].mxu0
    %v498 = vpop.f32.mrb[0].mxu0
    %499 = vdwg.mxu0
    %v500 = vxor.u32 %v494, 2147483648
    %v501 = vmul.f32 %v500, 1.442695
    %v502 = vpow.pop %v501
    %v503 = vadd.f32 %v502, 1.0
    %v504 = vrcp.pop %v503
    %v505 = vmul.f32 1.0, %v504
    %v506 = vtanh.pop %v496
    %v507 = vxor.u32 %v496, 2147483648
    %v508 = vmul.f32 %v507, 1.442695
    %v509 = vpow.pop %v508
    %v510 = vadd.f32 %v509, 1.0
    %v511 = vrcp.pop %v510
    %v512 = vmul.f32 1.0, %v511
    %v513 = vmul.f32 %v505, %v447
    %v514 = vmul.f32 %v505, %v506
    %516 = vrot.lane.b32.xlu0 %v514, 64
    %v517 = vpop.permute.xlu0 %516
    %v519 = vadd.f32 %v513, %v517
    %v520 = vtanh.pop %v519
    %v521 = vmul.f32 %v512, %v520
    %523 = vrot.lane.b32.xlu0 %v521, 64
    %v524 = vpop.permute.xlu0 %523
    %v526 = vpack.c.bf16 %v235, %v235
    %v527 = vpack.c.bf16 %v524, %v524
    %v529 = vsel %vm383, %v527, 0
    %531 = vmatprep.subr.bf16.mxu0 %v336
    %532 = vmatpush1.bf16.msra.mxu0 %v335
    %533 = vmatprep.subr.bf16.mxu0 %v338
    %534 = vmatpush1.bf16.msra.mxu0 %v337
    %535 = vmatprep.subr.bf16.mxu0 %v340
    %536 = vmatpush1.bf16.msra.mxu0 %v339
    %537 = vmatprep.subr.bf16.mxu0 %v342
    %538 = vmatpush1.bf16.msra.mxu0 %v341
    %539 = vmatprep.subr.bf16.mxu0 %v344
    %540 = vmatpush1.bf16.msra.mxu0 %v343
    %541 = vmatprep.subr.bf16.mxu0 %v346
    %542 = vmatpush1.bf16.msra.mxu0 %v345
    %543 = vmatprep.subr.bf16.mxu0 %v348
    %544 = vmatpush1.bf16.msra.mxu0 %v347
    %545 = vmatprep.subr.bf16.mxu0 %v350
    %546 = vmatpush1.bf16.msra.mxu0 %v349
    %547 = vmatprep.subr.bf16.mxu0 %v352
    %548 = vmatpush1.bf16.msra.mxu0 %v351
    %549 = vmatprep.subr.bf16.mxu0 %v354
    %550 = vmatpush1.bf16.msra.mxu0 %v353
    %551 = vmatprep.subr.bf16.mxu0 %v356
    %552 = vmatpush1.bf16.msra.mxu0 %v355
    %553 = vmatprep.subr.bf16.mxu0 %v358
    %554 = vmatpush1.bf16.msra.mxu0 %v357
    %555 = vmatprep.subr.bf16.mxu0 0
    %556 = vmatpush1.bf16.msra.mxu0 0
    %557 = vmatprep.subr.bf16.mxu0 0
    %558 = vmatpush1.bf16.msra.mxu0 0
    %559 = vmatprep.subr.bf16.mxu0 0
    %560 = vmatpush1.bf16.msra.mxu0 0
    %561 = vmatprep.subr.bf16.mxu0 0
    %562 = vmatpush1.bf16.msra.mxu0 0
    %563 = vmatprep.mubr.bf16.mxu0 %v529
    %564 = vmatmul.mubr.bf16.gmra.mrb[0].mxu0 %v526
    %v565 = vpop.f32.mrb[0].mxu0
    %v566 = vadd.f32 %v88, %v565
    %v567 = vpop.f32.mrb[0].mxu0
    %v568 = vadd.f32 %v92, %v567
    %v569 = vpop.f32.mrb[0].mxu0
    %v570 = vpop.f32.mrb[0].mxu0
    %571 = vdwg.mxu0
    %v572 = vxor.u32 %v566, 2147483648
    %v573 = vmul.f32 %v572, 1.442695
    %v574 = vpow.pop %v573
    %v575 = vadd.f32 %v574, 1.0
    %v576 = vrcp.pop %v575
    %v577 = vmul.f32 1.0, %v576
    %v578 = vtanh.pop %v568
    %v579 = vxor.u32 %v568, 2147483648
    %v580 = vmul.f32 %v579, 1.442695
    %v581 = vpow.pop %v580
    %v582 = vadd.f32 %v581, 1.0
    %v583 = vrcp.pop %v582
    %v584 = vmul.f32 1.0, %v583
    %v585 = vmul.f32 %v577, %v519
    %v586 = vmul.f32 %v577, %v578
    %588 = vrot.lane.b32.xlu0 %v586, 64
    %v589 = vpop.permute.xlu0 %588
    %v591 = vadd.f32 %v585, %v589
    %v592 = vtanh.pop %v591
    %v593 = vmul.f32 %v584, %v592
    %595 = vrot.lane.b32.xlu0 %v593, 64
    %v596 = vpop.permute.xlu0 %595
    %v598 = vpack.c.bf16 %v236, %v236
    %v599 = vpack.c.bf16 %v596, %v596
    %v601 = vsel %vm383, %v599, 0
    %603 = vmatprep.subr.bf16.mxu0 %v336
    %604 = vmatpush1.bf16.msra.mxu0 %v335
    %605 = vmatprep.subr.bf16.mxu0 %v338
    %606 = vmatpush1.bf16.msra.mxu0 %v337
    %607 = vmatprep.subr.bf16.mxu0 %v340
    %608 = vmatpush1.bf16.msra.mxu0 %v339
    %609 = vmatprep.subr.bf16.mxu0 %v342
    %610 = vmatpush1.bf16.msra.mxu0 %v341
    %611 = vmatprep.subr.bf16.mxu0 %v344
    %612 = vmatpush1.bf16.msra.mxu0 %v343
    %613 = vmatprep.subr.bf16.mxu0 %v346
    %614 = vmatpush1.bf16.msra.mxu0 %v345
    %615 = vmatprep.subr.bf16.mxu0 %v348
    %616 = vmatpush1.bf16.msra.mxu0 %v347
    %617 = vmatprep.subr.bf16.mxu0 %v350
    %618 = vmatpush1.bf16.msra.mxu0 %v349
    %619 = vmatprep.subr.bf16.mxu0 %v352
    %620 = vmatpush1.bf16.msra.mxu0 %v351
    %621 = vmatprep.subr.bf16.mxu0 %v354
    %622 = vmatpush1.bf16.msra.mxu0 %v353
    %623 = vmatprep.subr.bf16.mxu0 %v356
    %624 = vmatpush1.bf16.msra.mxu0 %v355
    %625 = vmatprep.subr.bf16.mxu0 %v358
    %626 = vmatpush1.bf16.msra.mxu0 %v357
    %627 = vmatprep.subr.bf16.mxu0 0
    %628 = vmatpush1.bf16.msra.mxu0 0
    %629 = vmatprep.subr.bf16.mxu0 0
    %630 = vmatpush1.bf16.msra.mxu0 0
    %631 = vmatprep.subr.bf16.mxu0 0
    %632 = vmatpush1.bf16.msra.mxu0 0
    %633 = vmatprep.subr.bf16.mxu0 0
    %634 = vmatpush1.bf16.msra.mxu0 0
    %635 = vmatprep.mubr.bf16.mxu0 %v601
    %636 = vmatmul.mubr.bf16.gmra.mrb[0].mxu0 %v598
    %v637 = vpop.f32.mrb[0].mxu0
    %v638 = vadd.f32 %v88, %v637
    %v639 = vpop.f32.mrb[0].mxu0
    %v640 = vadd.f32 %v92, %v639
    %v641 = vpop.f32.mrb[0].mxu0
    %v642 = vpop.f32.mrb[0].mxu0
    %643 = vdwg.mxu0
    %v644 = vxor.u32 %v638, 2147483648
    %v645 = vmul.f32 %v644, 1.442695
    %v646 = vpow.pop %v645
    %v647 = vadd.f32 %v646, 1.0
    %v648 = vrcp.pop %v647
    %v649 = vmul.f32 1.0, %v648
    %v650 = vtanh.pop %v640
    %v651 = vxor.u32 %v640, 2147483648
    %v652 = vmul.f32 %v651, 1.442695
    %v653 = vpow.pop %v652
    %v654 = vadd.f32 %v653, 1.0
    %v655 = vrcp.pop %v654
    %v656 = vmul.f32 1.0, %v655
    %v657 = vmul.f32 %v649, %v591
    %v658 = vmul.f32 %v649, %v650
    %660 = vrot.lane.b32.xlu0 %v658, 64
    %v661 = vpop.permute.xlu0 %660
    %v663 = vadd.f32 %v657, %v661
    %v664 = vtanh.pop %v663
    %v665 = vmul.f32 %v656, %v664
    %v666 = vpack.c.bf16 %v665, %v665
    %v667 = vld [vmem:[#allocation8] sm:$0xff]
    %v668 = vld [vmem:[#allocation8 + $0x8] sm:$0xff]
    %v669 = vld [vmem:[#allocation8 + $0x10] sm:$0xff]
    %v670 = vld [vmem:[#allocation8 + $0x18] sm:$0xff]
    %v671 = vld [vmem:[#allocation8 + $0x20] sm:$0xff]
    %v672 = vld [vmem:[#allocation8 + $0x28] sm:$0xff]
    %v673 = vld [vmem:[#allocation8 + $0x30] sm:$0xff]
    %v674 = vld [vmem:[#allocation8 + $0x38] sm:$0xff]
    %676 = vrot.lane.b32.xlu0 %v666, 64
    %v677 = vpop.permute.xlu0 %676
    %v686 = vunpack.c.l.b16 %v667
    %v687 = vunpack.c.h.b16 %v667
    %v688 = vunpack.c.l.b16 %v668
    %v689 = vunpack.c.h.b16 %v668
    %v690 = vunpack.c.l.b16 %v669
    %v691 = vunpack.c.h.b16 %v669
    %v692 = vunpack.c.l.b16 %v670
    %v693 = vunpack.c.h.b16 %v670
    %v694 = vunpack.c.l.b16 %v671
    %v695 = vunpack.c.h.b16 %v671
    %v696 = vunpack.c.l.b16 %v672
    %v697 = vunpack.c.h.b16 %v672
    %v698 = vunpack.c.l.b16 %v673
    %v699 = vunpack.c.h.b16 %v673
    %v700 = vunpack.c.l.b16 %v674
    %v701 = vunpack.c.h.b16 %v674
    %v702 = vpack.c.b16 %v688, %v686
    %v703 = vpack.c.b16 %v689, %v687
    %v704 = vpack.c.b16 %v692, %v690
    %v705 = vpack.c.b16 %v693, %v691
    %v706 = vpack.c.b16 %v696, %v694
    %v707 = vpack.c.b16 %v697, %v695
    %v708 = vpack.c.b16 %v700, %v698
    %v709 = vpack.c.b16 %v701, %v699
    %v719 = vsel %vm383, %v677, 0
    %721 = vmatprep.subr.bf16.mxu0 %v703
    %722 = vmatpush1.bf16.msra.mxu0 %v702
    %723 = vmatprep.subr.bf16.mxu0 %v705
    %724 = vmatpush1.bf16.msra.mxu0 %v704
    %725 = vmatprep.subr.bf16.mxu0 %v707
    %726 = vmatpush1.bf16.msra.mxu0 %v706
    %727 = vmatprep.subr.bf16.mxu0 %v709
    %728 = vmatpush1.bf16.msra.mxu0 %v708
    %729 = vmatprep.subr.bf16.mxu0 0
    %730 = vmatpush1.bf16.msra.mxu0 0
    %731 = vmatprep.subr.bf16.mxu0 0
    %732 = vmatpush1.bf16.msra.mxu0 0
    %733 = vmatprep.subr.bf16.mxu0 0
    %734 = vmatpush1.bf16.msra.mxu0 0
    %735 = vmatprep.subr.bf16.mxu0 0
    %736 = vmatpush1.bf16.msra.mxu0 0
    %737 = vmatprep.subr.bf16.mxu0 0
    %738 = vmatpush1.bf16.msra.mxu0 0
    %739 = vmatprep.subr.bf16.mxu0 0
    %740 = vmatpush1.bf16.msra.mxu0 0
    %741 = vmatprep.subr.bf16.mxu0 0
    %742 = vmatpush1.bf16.msra.mxu0 0
    %743 = vmatprep.subr.bf16.mxu0 0
    %744 = vmatpush1.bf16.msra.mxu0 0
    %745 = vmatprep.subr.bf16.mxu0 0
    %746 = vmatpush1.bf16.msra.mxu0 0
    %747 = vmatprep.subr.bf16.mxu0 0
    %748 = vmatpush1.bf16.msra.mxu0 0
    %749 = vmatprep.subr.bf16.mxu0 0
    %750 = vmatpush1.bf16.msra.mxu0 0
    %751 = vmatprep.subr.bf16.mxu0 0
    %752 = vmatpush1.bf16.msra.mxu0 0
    %753 = vmatprep.mubr.bf16.mxu0 0
    %754 = vmatmul.mubr.bf16.gmra.mrb[0].mxu0 %v719
    %v755 = vpop.f32.mrb[0].mxu0
    %v756 = vadd.f32 %v100, %v755
    %v757 = vpop.f32.mrb[0].mxu0
    %v758 = vadd.f32 %v104, %v757
    %v759 = vpop.f32.mrb[0].mxu0
    %v760 = vpop.f32.mrb[0].mxu0
    %761 = vdwg.mxu0
    %s762 = scalar_lea.vmem [#allocation2], 24
    %v763 = vld [vmem:[%s762] sm:$0xff]
    %v764 = vadd.f32 %v756, %v763
    %v765 = vadd.f32 %v758, %v230
    %766 = vst [vmem:[#allocation10] sm:$0xff] %v764
    %v767 = vmax.f32 %v765, 0.0
    %769 = vrot.lane.b32.xlu0 %v665, 64
    %v770 = vpop.permute.xlu0 %769
    %v772 = vpack.c.bf16 %v767, %v767
    %v773 = vpack.c.bf16 %v770, %v770
    %v774 = vld [vmem:[#allocation7] sm:$0xff]
    %v775 = vld [vmem:[#allocation7 + $0x8] sm:$0xff]
    %v776 = vld [vmem:[#allocation7 + $0x10] sm:$0xff]
    %v777 = vld [vmem:[#allocation7 + $0x18] sm:$0xff]
    %v778 = vld [vmem:[#allocation7 + $0x20] sm:$0xff]
    %v779 = vld [vmem:[#allocation7 + $0x28] sm:$0xff]
    %v780 = vld [vmem:[#allocation7 + $0x30] sm:$0xff]
    %v781 = vld [vmem:[#allocation7 + $0x38] sm:$0xff]
    %v782 = vld [vmem:[#allocation7 + $0x40] sm:$0xff]
    %v783 = vld [vmem:[#allocation7 + $0x48] sm:$0xff]
    %v784 = vld [vmem:[#allocation7 + $0x50] sm:$0xff]
    %v785 = vld [vmem:[#allocation7 + $0x58] sm:$0xff]
    %v786 = vld [vmem:[#allocation7 + $0x60] sm:$0xff]
    %v787 = vld [vmem:[#allocation7 + $0x68] sm:$0xff]
    %v788 = vld [vmem:[#allocation7 + $0x70] sm:$0xff]
    %v789 = vld [vmem:[#allocation7 + $0x78] sm:$0xff]
    %v790 = vld [vmem:[#allocation7 + $0x80] sm:$0xff]
    %v791 = vld [vmem:[#allocation7 + $0x88] sm:$0xff]
    %v792 = vld [vmem:[#allocation7 + $0x90] sm:$0xff]
    %v793 = vld [vmem:[#allocation7 + $0x98] sm:$0xff]
    %v794 = vld [vmem:[#allocation7 + $0xa0] sm:$0xff]
    %v795 = vld [vmem:[#allocation7 + $0xa8] sm:$0xff]
    %v796 = vld [vmem:[#allocation7 + $0xb0] sm:$0xff]
    %v797 = vld [vmem:[#allocation7 + $0xb8] sm:$0xff]
    %v822 = vunpack.c.l.b16 %v774
    %v823 = vunpack.c.h.b16 %v774
    %v824 = vunpack.c.l.b16 %v775
    %v825 = vunpack.c.h.b16 %v775
    %v826 = vunpack.c.l.b16 %v776
    %v827 = vunpack.c.h.b16 %v776
    %v828 = vunpack.c.l.b16 %v777
    %v829 = vunpack.c.h.b16 %v777
    %v830 = vunpack.c.l.b16 %v778
    %v831 = vunpack.c.h.b16 %v778
    %v832 = vunpack.c.l.b16 %v779
    %v833 = vunpack.c.h.b16 %v779
    %v834 = vunpack.c.l.b16 %v780
    %v835 = vunpack.c.h.b16 %v780
    %v836 = vunpack.c.l.b16 %v781
    %v837 = vunpack.c.h.b16 %v781
    %v838 = vunpack.c.l.b16 %v782
    %v839 = vunpack.c.h.b16 %v782
    %v840 = vunpack.c.l.b16 %v783
    %v841 = vunpack.c.h.b16 %v783
    %v842 = vunpack.c.l.b16 %v784
    %v843 = vunpack.c.h.b16 %v784
    %v844 = vunpack.c.l.b16 %v785
    %v845 = vunpack.c.h.b16 %v785
    %v846 = vunpack.c.l.b16 %v786
    %v847 = vunpack.c.h.b16 %v786
    %v848 = vunpack.c.l.b16 %v787
    %v849 = vunpack.c.h.b16 %v787
    %v850 = vunpack.c.l.b16 %v788
    %v851 = vunpack.c.h.b16 %v788
    %v852 = vunpack.c.l.b16 %v789
    %v853 = vunpack.c.h.b16 %v789
    %v854 = vunpack.c.l.b16 %v790
    %v855 = vunpack.c.h.b16 %v790
    %v856 = vunpack.c.l.b16 %v791
    %v857 = vunpack.c.h.b16 %v791
    %v858 = vunpack.c.l.b16 %v792
    %v859 = vunpack.c.h.b16 %v792
    %v860 = vunpack.c.l.b16 %v793
    %v861 = vunpack.c.h.b16 %v793
    %v862 = vunpack.c.l.b16 %v794
    %v863 = vunpack.c.h.b16 %v794
    %v864 = vunpack.c.l.b16 %v795
    %v865 = vunpack.c.h.b16 %v795
    %v866 = vunpack.c.l.b16 %v796
    %v867 = vunpack.c.h.b16 %v796
    %v868 = vunpack.c.l.b16 %v797
    %v869 = vunpack.c.h.b16 %v797
    %v870 = vpack.c.b16 %v824, %v822
    %v871 = vpack.c.b16 %v825, %v823
    %v872 = vpack.c.b16 %v828, %v826
    %v873 = vpack.c.b16 %v829, %v827
    %v874 = vpack.c.b16 %v832, %v830
    %v875 = vpack.c.b16 %v833, %v831
    %v876 = vpack.c.b16 %v836, %v834
    %v877 = vpack.c.b16 %v837, %v835
    %v878 = vpack.c.b16 %v840, %v838
    %v879 = vpack.c.b16 %v841, %v839
    %v880 = vpack.c.b16 %v844, %v842
    %v881 = vpack.c.b16 %v845, %v843
    %v882 = vpack.c.b16 %v848, %v846
    %v883 = vpack.c.b16 %v849, %v847
    %v884 = vpack.c.b16 %v852, %v850
    %v885 = vpack.c.b16 %v853, %v851
    %v886 = vpack.c.b16 %v856, %v854
    %v887 = vpack.c.b16 %v857, %v855
    %v888 = vpack.c.b16 %v860, %v858
    %v889 = vpack.c.b16 %v861, %v859
    %v890 = vpack.c.b16 %v864, %v862
    %v891 = vpack.c.b16 %v865, %v863
    %v892 = vpack.c.b16 %v868, %v866
    %v893 = vpack.c.b16 %v869, %v867
    %v919 = vsel %vm383, %v773, 0
    %921 = vmatprep.subr.bf16.mxu0 %v871
    %922 = vmatpush1.bf16.msra.mxu0 %v870
    %923 = vmatprep.subr.bf16.mxu0 %v873
    %924 = vmatpush1.bf16.msra.mxu0 %v872
    %925 = vmatprep.subr.bf16.mxu0 %v875
    %926 = vmatpush1.bf16.msra.mxu0 %v874
    %927 = vmatprep.subr.bf16.mxu0 %v877
    %928 = vmatpush1.bf16.msra.mxu0 %v876
    %929 = vmatprep.subr.bf16.mxu0 %v879
    %930 = vmatpush1.bf16.msra.mxu0 %v878
    %931 = vmatprep.subr.bf16.mxu0 %v881
    %932 = vmatpush1.bf16.msra.mxu0 %v880
    %933 = vmatprep.subr.bf16.mxu0 %v883
    %934 = vmatpush1.bf16.msra.mxu0 %v882
    %935 = vmatprep.subr.bf16.mxu0 %v885
    %936 = vmatpush1.bf16.msra.mxu0 %v884
    %937 = vmatprep.subr.bf16.mxu0 %v887
    %938 = vmatpush1.bf16.msra.mxu0 %v886
    %939 = vmatprep.subr.bf16.mxu0 %v889
    %940 = vmatpush1.bf16.msra.mxu0 %v888
    %941 = vmatprep.subr.bf16.mxu0 %v891
    %942 = vmatpush1.bf16.msra.mxu0 %v890
    %943 = vmatprep.subr.bf16.mxu0 %v893
    %944 = vmatpush1.bf16.msra.mxu0 %v892
    %945 = vmatprep.subr.bf16.mxu0 0
    %946 = vmatpush1.bf16.msra.mxu0 0
    %947 = vmatprep.subr.bf16.mxu0 0
    %948 = vmatpush1.bf16.msra.mxu0 0
    %949 = vmatprep.subr.bf16.mxu0 0
    %950 = vmatpush1.bf16.msra.mxu0 0
    %951 = vmatprep.subr.bf16.mxu0 0
    %952 = vmatpush1.bf16.msra.mxu0 0
    %953 = vmatprep.mubr.bf16.mxu0 %v919
    %954 = vmatmul.mubr.bf16.gmra.mrb[0].mxu0 %v772
    %v955 = vpop.f32.mrb[0].mxu0
    %v956 = vadd.f32 %v88, %v955
    %v957 = vpop.f32.mrb[0].mxu0
    %v958 = vadd.f32 %v92, %v957
    %v959 = vpop.f32.mrb[0].mxu0
    %v960 = vpop.f32.mrb[0].mxu0
    %961 = vdwg.mxu0
    %v962 = vxor.u32 %v956, 2147483648
    %v963 = vmul.f32 %v962, 1.442695
    %v964 = vpow.pop %v963
    %v965 = vadd.f32 %v964, 1.0
    %v966 = vrcp.pop %v965
    %v967 = vmul.f32 1.0, %v966
    %v968 = vtanh.pop %v958
    %v969 = vxor.u32 %v958, 2147483648
    %v970 = vmul.f32 %v969, 1.442695
    %v971 = vpow.pop %v970
    %v972 = vadd.f32 %v971, 1.0
    %v973 = vrcp.pop %v972
    %v974 = vmul.f32 1.0, %v973
    %v975 = vmul.f32 %v967, %v663
    %v976 = vmul.f32 %v967, %v968
    %978 = vrot.lane.b32.xlu0 %v976, 64
    %v979 = vpop.permute.xlu0 %978
    %v981 = vadd.f32 %v975, %v979
    %v982 = vtanh.pop %v981
    %v983 = vmul.f32 %v974, %v982
    %v984 = vpack.c.bf16 %v983, %v983
    %v985 = vld [vmem:[#allocation8] sm:$0xff]
    %v986 = vld [vmem:[#allocation8 + $0x8] sm:$0xff]
    %v987 = vld [vmem:[#allocation8 + $0x10] sm:$0xff]
    %v988 = vld [vmem:[#allocation8 + $0x18] sm:$0xff]
    %v989 = vld [vmem:[#allocation8 + $0x20] sm:$0xff]
    %v990 = vld [vmem:[#allocation8 + $0x28] sm:$0xff]
    %v991 = vld [vmem:[#allocation8 + $0x30] sm:$0xff]
    %v992 = vld [vmem:[#allocation8 + $0x38] sm:$0xff]
    %994 = vrot.lane.b32.xlu0 %v984, 64
    %v995 = vpop.permute.xlu0 %994
    %v1004 = vunpack.c.l.b16 %v985
    %v1005 = vunpack.c.h.b16 %v985
    %v1006 = vunpack.c.l.b16 %v986
    %v1007 = vunpack.c.h.b16 %v986
    %v1008 = vunpack.c.l.b16 %v987
    %v1009 = vunpack.c.h.b16 %v987
    %v1010 = vunpack.c.l.b16 %v988
    %v1011 = vunpack.c.h.b16 %v988
    %v1012 = vunpack.c.l.b16 %v989
    %v1013 = vunpack.c.h.b16 %v989
    %v1014 = vunpack.c.l.b16 %v990
    %v1015 = vunpack.c.h.b16 %v990
    %v1016 = vunpack.c.l.b16 %v991
    %v1017 = vunpack.c.h.b16 %v991
    %v1018 = vunpack.c.l.b16 %v992
    %v1019 = vunpack.c.h.b16 %v992
    %v1020 = vpack.c.b16 %v1006, %v1004
    %v1021 = vpack.c.b16 %v1007, %v1005
    %v1022 = vpack.c.b16 %v1010, %v1008
    %v1023 = vpack.c.b16 %v1011, %v1009
    %v1024 = vpack.c.b16 %v1014, %v1012
    %v1025 = vpack.c.b16 %v1015, %v1013
    %v1026 = vpack.c.b16 %v1018, %v1016
    %v1027 = vpack.c.b16 %v1019, %v1017
    %v1037 = vsel %vm383, %v995, 0
    %1039 = vmatprep.subr.bf16.mxu0 %v1021
    %1040 = vmatpush1.bf16.msra.mxu0 %v1020
    %1041 = vmatprep.subr.bf16.mxu0 %v1023
    %1042 = vmatpush1.bf16.msra.mxu0 %v1022
    %1043 = vmatprep.subr.bf16.mxu0 %v1025
    %1044 = vmatpush1.bf16.msra.mxu0 %v1024
    %1045 = vmatprep.subr.bf16.mxu0 %v1027
    %1046 = vmatpush1.bf16.msra.mxu0 %v1026
    %1047 = vmatprep.subr.bf16.mxu0 0
    %1048 = vmatpush1.bf16.msra.mxu0 0
    %1049 = vmatprep.subr.bf16.mxu0 0
    %1050 = vmatpush1.bf16.msra.mxu0 0
    %1051 = vmatprep.subr.bf16.mxu0 0
    %1052 = vmatpush1.bf16.msra.mxu0 0
    %1053 = vmatprep.subr.bf16.mxu0 0
    %1054 = vmatpush1.bf16.msra.mxu0 0
    %1055 = vmatprep.subr.bf16.mxu0 0
    %1056 = vmatpush1.bf16.msra.mxu0 0
    %1057 = vmatprep.subr.bf16.mxu0 0
    %1058 = vmatpush1.bf16.msra.mxu0 0
    %1059 = vmatprep.subr.bf16.mxu0 0
    %1060 = vmatpush1.bf16.msra.mxu0 0
    %1061 = vmatprep.subr.bf16.mxu0 0
    %1062 = vmatpush1.bf16.msra.mxu0 0
    %1063 = vmatprep.subr.bf16.mxu0 0
    %1064 = vmatpush1.bf16.msra.mxu0 0
    %1065 = vmatprep.subr.bf16.mxu0 0
    %1066 = vmatpush1.bf16.msra.mxu0 0
    %1067 = vmatprep.subr.bf16.mxu0 0
    %1068 = vmatpush1.bf16.msra.mxu0 0
    %1069 = vmatprep.subr.bf16.mxu0 0
    %1070 = vmatpush1.bf16.msra.mxu0 0
    %1071 = vmatprep.mubr.bf16.mxu0 0
    %1072 = vmatmul.mubr.bf16.gmra.mrb[0].mxu0 %v1037
    %v1073 = vpop.f32.mrb[0].mxu0
    %v1074 = vadd.f32 %v100, %v1073
    %v1075 = vpop.f32.mrb[0].mxu0
    %v1076 = vadd.f32 %v104, %v1075
    %v1077 = vpop.f32.mrb[0].mxu0
    %v1078 = vpop.f32.mrb[0].mxu0
    %1079 = vdwg.mxu0
    %v1080 = vadd.f32 %v764, %v1074
    %v1081 = vadd.f32 %v765, %v1076
    %s1082 = scalar_lea.vmem [#allocation10], 8
    %1083 = vst [vmem:[%s1082] sm:$0xff] %v1080
    %v1084 = vmax.f32 %v1081, 0.0
    %1086 = vrot.lane.b32.xlu0 %v983, 64
    %v1087 = vpop.permute.xlu0 %1086
    %v1089 = vpack.c.bf16 %v1084, %v1084
    %v1090 = vpack.c.bf16 %v1087, %v1087
    %v1091 = vld [vmem:[#allocation7] sm:$0xff]
    %v1092 = vld [vmem:[#allocation7 + $0x8] sm:$0xff]
    %v1093 = vld [vmem:[#allocation7 + $0x10] sm:$0xff]
    %v1094 = vld [vmem:[#allocation7 + $0x18] sm:$0xff]
    %v1095 = vld [vmem:[#allocation7 + $0x20] sm:$0xff]
    %v1096 = vld [vmem:[#allocation7 + $0x28] sm:$0xff]
    %v1097 = vld [vmem:[#allocation7 + $0x30] sm:$0xff]
    %v1098 = vld [vmem:[#allocation7 + $0x38] sm:$0xff]
    %v1099 = vld [vmem:[#allocation7 + $0x40] sm:$0xff]
    %v1100 = vld [vmem:[#allocation7 + $0x48] sm:$0xff]
    %v1101 = vld [vmem:[#allocation7 + $0x50] sm:$0xff]
    %v1102 = vld [vmem:[#allocation7 + $0x58] sm:$0xff]
    %v1103 = vld [vmem:[#allocation7 + $0x60] sm:$0xff]
    %v1104 = vld [vmem:[#allocation7 + $0x68] sm:$0xff]
    %v1105 = vld [vmem:[#allocation7 + $0x70] sm:$0xff]
    %v1106 = vld [vmem:[#allocation7 + $0x78] sm:$0xff]
    %v1107 = vld [vmem:[#allocation7 + $0x80] sm:$0xff]
    %v1108 = vld [vmem:[#allocation7 + $0x88] sm:$0xff]
    %v1109 = vld [vmem:[#allocation7 + $0x90] sm:$0xff]
    %v1110 = vld [vmem:[#allocation7 + $0x98] sm:$0xff]
    %v1111 = vld [vmem:[#allocation7 + $0xa0] sm:$0xff]
    %v1112 = vld [vmem:[#allocation7 + $0xa8] sm:$0xff]
    %v1113 = vld [vmem:[#allocation7 + $0xb0] sm:$0xff]
    %v1114 = vld [vmem:[#allocation7 + $0xb8] sm:$0xff]
    %v1139 = vunpack.c.l.b16 %v1091
    %v1140 = vunpack.c.h.b16 %v1091
    %v1141 = vunpack.c.l.b16 %v1092
    %v1142 = vunpack.c.h.b16 %v1092
    %v1143 = vunpack.c.l.b16 %v1093
    %v1144 = vunpack.c.h.b16 %v1093
    %v1145 = vunpack.c.l.b16 %v1094
    %v1146 = vunpack.c.h.b16 %v1094
    %v1147 = vunpack.c.l.b16 %v1095
    %v1148 = vunpack.c.h.b16 %v1095
    %v1149 = vunpack.c.l.b16 %v1096
    %v1150 = vunpack.c.h.b16 %v1096
    %v1151 = vunpack.c.l.b16 %v1097
    %v1152 = vunpack.c.h.b16 %v1097
    %v1153 = vunpack.c.l.b16 %v1098
    %v1154 = vunpack.c.h.b16 %v1098
    %v1155 = vunpack.c.l.b16 %v1099
    %v1156 = vunpack.c.h.b16 %v1099
    %v1157 = vunpack.c.l.b16 %v1100
    %v1158 = vunpack.c.h.b16 %v1100
    %v1159 = vunpack.c.l.b16 %v1101
    %v1160 = vunpack.c.h.b16 %v1101
    %v1161 = vunpack.c.l.b16 %v1102
    %v1162 = vunpack.c.h.b16 %v1102
    %v1163 = vunpack.c.l.b16 %v1103
    %v1164 = vunpack.c.h.b16 %v1103
    %v1165 = vunpack.c.l.b16 %v1104
    %v1166 = vunpack.c.h.b16 %v1104
    %v1167 = vunpack.c.l.b16 %v1105
    %v1168 = vunpack.c.h.b16 %v1105
    %v1169 = vunpack.c.l.b16 %v1106
    %v1170 = vunpack.c.h.b16 %v1106
    %v1171 = vunpack.c.l.b16 %v1107
    %v1172 = vunpack.c.h.b16 %v1107
    %v1173 = vunpack.c.l.b16 %v1108
    %v1174 = vunpack.c.h.b16 %v1108
    %v1175 = vunpack.c.l.b16 %v1109
    %v1176 = vunpack.c.h.b16 %v1109
    %v1177 = vunpack.c.l.b16 %v1110
    %v1178 = vunpack.c.h.b16 %v1110
    %v1179 = vunpack.c.l.b16 %v1111
    %v1180 = vunpack.c.h.b16 %v1111
    %v1181 = vunpack.c.l.b16 %v1112
    %v1182 = vunpack.c.h.b16 %v1112
    %v1183 = vunpack.c.l.b16 %v1113
    %v1184 = vunpack.c.h.b16 %v1113
    %v1185 = vunpack.c.l.b16 %v1114
    %v1186 = vunpack.c.h.b16 %v1114
    %v1187 = vpack.c.b16 %v1141, %v1139
    %v1188 = vpack.c.b16 %v1142, %v1140
    %v1189 = vpack.c.b16 %v1145, %v1143
    %v1190 = vpack.c.b16 %v1146, %v1144
    %v1191 = vpack.c.b16 %v1149, %v1147
    %v1192 = vpack.c.b16 %v1150, %v1148
    %v1193 = vpack.c.b16 %v1153, %v1151
    %v1194 = vpack.c.b16 %v1154, %v1152
    %v1195 = vpack.c.b16 %v1157, %v1155
    %v1196 = vpack.c.b16 %v1158, %v1156
    %v1197 = vpack.c.b16 %v1161, %v1159
    %v1198 = vpack.c.b16 %v1162, %v1160
    %v1199 = vpack.c.b16 %v1165, %v1163
    %v1200 = vpack.c.b16 %v1166, %v1164
    %v1201 = vpack.c.b16 %v1169, %v1167
    %v1202 = vpack.c.b16 %v1170, %v1168
    %v1203 = vpack.c.b16 %v1173, %v1171
    %v1204 = vpack.c.b16 %v1174, %v1172
    %v1205 = vpack.c.b16 %v1177, %v1175
    %v1206 = vpack.c.b16 %v1178, %v1176
    %v1207 = vpack.c.b16 %v1181, %v1179
    %v1208 = vpack.c.b16 %v1182, %v1180
    %v1209 = vpack.c.b16 %v1185, %v1183
    %v1210 = vpack.c.b16 %v1186, %v1184
    %v1236 = vsel %vm383, %v1090, 0
    %1238 = vmatprep.subr.bf16.mxu0 %v1188
    %1239 = vmatpush1.bf16.msra.mxu0 %v1187
    %1240 = vmatprep.subr.bf16.mxu0 %v1190
    %1241 = vmatpush1.bf16.msra.mxu0 %v1189
    %1242 = vmatprep.subr.bf16.mxu0 %v1192
    %1243 = vmatpush1.bf16.msra.mxu0 %v1191
    %1244 = vmatprep.subr.bf16.mxu0 %v1194
    %1245 = vmatpush1.bf16.msra.mxu0 %v1193
    %1246 = vmatprep.subr.bf16.mxu0 %v1196
    %1247 = vmatpush1.bf16.msra.mxu0 %v1195
    %1248 = vmatprep.subr.bf16.mxu0 %v1198
    %1249 = vmatpush1.bf16.msra.mxu0 %v1197
    %1250 = vmatprep.subr.bf16.mxu0 %v1200
    %1251 = vmatpush1.bf16.msra.mxu0 %v1199
    %1252 = vmatprep.subr.bf16.mxu0 %v1202
    %1253 = vmatpush1.bf16.msra.mxu0 %v1201
    %1254 = vmatprep.subr.bf16.mxu0 %v1204
    %1255 = vmatpush1.bf16.msra.mxu0 %v1203
    %1256 = vmatprep.subr.bf16.mxu0 %v1206
    %1257 = vmatpush1.bf16.msra.mxu0 %v1205
    %1258 = vmatprep.subr.bf16.mxu0 %v1208
    %1259 = vmatpush1.bf16.msra.mxu0 %v1207
    %1260 = vmatprep.subr.bf16.mxu0 %v1210
    %1261 = vmatpush1.bf16.msra.mxu0 %v1209
    %1262 = vmatprep.subr.bf16.mxu0 0
    %1263 = vmatpush1.bf16.msra.mxu0 0
    %1264 = vmatprep.subr.bf16.mxu0 0
    %1265 = vmatpush1.bf16.msra.mxu0 0
    %1266 = vmatprep.subr.bf16.mxu0 0
    %1267 = vmatpush1.bf16.msra.mxu0 0
    %1268 = vmatprep.subr.bf16.mxu0 0
    %1269 = vmatpush1.bf16.msra.mxu0 0
    %1270 = vmatprep.mubr.bf16.mxu0 %v1236
    %1271 = vmatmul.mubr.bf16.gmra.mrb[0].mxu0 %v1089
    %v1272 = vpop.f32.mrb[0].mxu0
    %v1273 = vadd.f32 %v88, %v1272
    %v1274 = vpop.f32.mrb[0].mxu0
    %v1275 = vadd.f32 %v92, %v1274
    %v1276 = vpop.f32.mrb[0].mxu0
    %v1277 = vpop.f32.mrb[0].mxu0
    %1278 = vdwg.mxu0
    %v1279 = vxor.u32 %v1273, 2147483648
    %v1280 = vmul.f32 %v1279, 1.442695
    %v1281 = vpow.pop %v1280
    %v1282 = vadd.f32 %v1281, 1.0
    %v1283 = vrcp.pop %v1282
    %v1284 = vmul.f32 1.0, %v1283
    %v1285 = vtanh.pop %v1275
    %v1286 = vxor.u32 %v1275, 2147483648
    %v1287 = vmul.f32 %v1286, 1.442695
    %v1288 = vpow.pop %v1287
    %v1289 = vadd.f32 %v1288, 1.0
    %v1290 = vrcp.pop %v1289
    %v1291 = vmul.f32 1.0, %v1290
    %v1292 = vmul.f32 %v1284, %v981
    %v1293 = vmul.f32 %v1284, %v1285
    %1295 = vrot.lane.b32.xlu0 %v1293, 64
    %v1296 = vpop.permute.xlu0 %1295
    %v1298 = vadd.f32 %v1292, %v1296
    %v1299 = vtanh.pop %v1298
    %v1300 = vmul.f32 %v1291, %v1299
    %v1301 = vpack.c.bf16 %v1300, %v1300
    %v1302 = vld [vmem:[#allocation8] sm:$0xff]
    %v1303 = vld [vmem:[#allocation8 + $0x8] sm:$0xff]
    %v1304 = vld [vmem:[#allocation8 + $0x10] sm:$0xff]
    %v1305 = vld [vmem:[#allocation8 + $0x18] sm:$0xff]
    %v1306 = vld [vmem:[#allocation8 + $0x20] sm:$0xff]
    %v1307 = vld [vmem:[#allocation8 + $0x28] sm:$0xff]
    %v1308 = vld [vmem:[#allocation8 + $0x30] sm:$0xff]
    %v1309 = vld [vmem:[#allocation8 + $0x38] sm:$0xff]
    %1311 = vrot.lane.b32.xlu0 %v1301, 64
    %v1312 = vpop.permute.xlu0 %1311
    %v1321 = vunpack.c.l.b16 %v1302
    %v1322 = vunpack.c.h.b16 %v1302
    %v1323 = vunpack.c.l.b16 %v1303
    %v1324 = vunpack.c.h.b16 %v1303
    %v1325 = vunpack.c.l.b16 %v1304
    %v1326 = vunpack.c.h.b16 %v1304
    %v1327 = vunpack.c.l.b16 %v1305
    %v1328 = vunpack.c.h.b16 %v1305
    %v1329 = vunpack.c.l.b16 %v1306
    %v1330 = vunpack.c.h.b16 %v1306
    %v1331 = vunpack.c.l.b16 %v1307
    %v1332 = vunpack.c.h.b16 %v1307
    %v1333 = vunpack.c.l.b16 %v1308
    %v1334 = vunpack.c.h.b16 %v1308
    %v1335 = vunpack.c.l.b16 %v1309
    %v1336 = vunpack.c.h.b16 %v1309
    %v1337 = vpack.c.b16 %v1323, %v1321
    %v1338 = vpack.c.b16 %v1324, %v1322
    %v1339 = vpack.c.b16 %v1327, %v1325
    %v1340 = vpack.c.b16 %v1328, %v1326
    %v1341 = vpack.c.b16 %v1331, %v1329
    %v1342 = vpack.c.b16 %v1332, %v1330
    %v1343 = vpack.c.b16 %v1335, %v1333
    %v1344 = vpack.c.b16 %v1336, %v1334
    %v1354 = vsel %vm383, %v1312, 0
    %1356 = vmatprep.subr.bf16.mxu0 %v1338
    %1357 = vmatpush1.bf16.msra.mxu0 %v1337
    %1358 = vmatprep.subr.bf16.mxu0 %v1340
    %1359 = vmatpush1.bf16.msra.mxu0 %v1339
    %1360 = vmatprep.subr.bf16.mxu0 %v1342
    %1361 = vmatpush1.bf16.msra.mxu0 %v1341
    %1362 = vmatprep.subr.bf16.mxu0 %v1344
    %1363 = vmatpush1.bf16.msra.mxu0 %v1343
    %1364 = vmatprep.subr.bf16.mxu0 0
    %1365 = vmatpush1.bf16.msra.mxu0 0
    %1366 = vmatprep.subr.bf16.mxu0 0
    %1367 = vmatpush1.bf16.msra.mxu0 0
    %1368 = vmatprep.subr.bf16.mxu0 0
    %1369 = vmatpush1.bf16.msra.mxu0 0
    %1370 = vmatprep.subr.bf16.mxu0 0
    %1371 = vmatpush1.bf16.msra.mxu0 0
    %1372 = vmatprep.subr.bf16.mxu0 0
    %1373 = vmatpush1.bf16.msra.mxu0 0
    %1374 = vmatprep.subr.bf16.mxu0 0
    %1375 = vmatpush1.bf16.msra.mxu0 0
    %1376 = vmatprep.subr.bf16.mxu0 0
    %1377 = vmatpush1.bf16.msra.mxu0 0
    %1378 = vmatprep.subr.bf16.mxu0 0
    %1379 = vmatpush1.bf16.msra.mxu0 0
    %1380 = vmatprep.subr.bf16.mxu0 0
    %1381 = vmatpush1.bf16.msra.mxu0 0
    %1382 = vmatprep.subr.bf16.mxu0 0
    %1383 = vmatpush1.bf16.msra.mxu0 0
    %1384 = vmatprep.subr.bf16.mxu0 0
    %1385 = vmatpush1.bf16.msra.mxu0 0
    %1386 = vmatprep.subr.bf16.mxu0 0
    %1387 = vmatpush1.bf16.msra.mxu0 0
    %1388 = vmatprep.mubr.bf16.mxu0 0
    %1389 = vmatmul.mubr.bf16.gmra.mrb[0].mxu0 %v1354
    %v1390 = vpop.f32.mrb[0].mxu0
    %v1391 = vadd.f32 %v100, %v1390
    %v1392 = vpop.f32.mrb[0].mxu0
    %v1393 = vadd.f32 %v104, %v1392
    %v1394 = vpop.f32.mrb[0].mxu0
    %v1395 = vpop.f32.mrb[0].mxu0
    %1396 = vdwg.mxu0
    %v1397 = vadd.f32 %v1080, %v1391
    %v1398 = vadd.f32 %v1081, %v1393
    %s1399 = scalar_lea.vmem [#allocation10], 16
    %1400 = vst [vmem:[%s1399] sm:$0xff] %v1397
    %v1401 = vmax.f32 %v1398, 0.0
    %1403 = vrot.lane.b32.xlu0 %v1300, 64
    %v1404 = vpop.permute.xlu0 %1403
    %v1406 = vpack.c.bf16 %v1401, %v1401
    %v1407 = vpack.c.bf16 %v1404, %v1404
    %v1408 = vld [vmem:[#allocation7] sm:$0xff]
    %v1409 = vld [vmem:[#allocation7 + $0x8] sm:$0xff]
    %v1410 = vld [vmem:[#allocation7 + $0x10] sm:$0xff]
    %v1411 = vld [vmem:[#allocation7 + $0x18] sm:$0xff]
    %v1412 = vld [vmem:[#allocation7 + $0x20] sm:$0xff]
    %v1413 = vld [vmem:[#allocation7 + $0x28] sm:$0xff]
    %v1414 = vld [vmem:[#allocation7 + $0x30] sm:$0xff]
    %v1415 = vld [vmem:[#allocation7 + $0x38] sm:$0xff]
    %v1416 = vld [vmem:[#allocation7 + $0x40] sm:$0xff]
    %v1417 = vld [vmem:[#allocation7 + $0x48] sm:$0xff]
    %v1418 = vld [vmem:[#allocation7 + $0x50] sm:$0xff]
    %v1419 = vld [vmem:[#allocation7 + $0x58] sm:$0xff]
    %v1420 = vld [vmem:[#allocation7 + $0x60] sm:$0xff]
    %v1421 = vld [vmem:[#allocation7 + $0x68] sm:$0xff]
    %v1422 = vld [vmem:[#allocation7 + $0x70] sm:$0xff]
    %v1423 = vld [vmem:[#allocation7 + $0x78] sm:$0xff]
    %v1424 = vld [vmem:[#allocation7 + $0x80] sm:$0xff]
    %v1425 = vld [vmem:[#allocation7 + $0x88] sm:$0xff]
    %v1426 = vld [vmem:[#allocation7 + $0x90] sm:$0xff]
    %v1427 = vld [vmem:[#allocation7 + $0x98] sm:$0xff]
    %v1428 = vld [vmem:[#allocation7 + $0xa0] sm:$0xff]
    %v1429 = vld [vmem:[#allocation7 + $0xa8] sm:$0xff]
    %v1430 = vld [vmem:[#allocation7 + $0xb0] sm:$0xff]
    %v1431 = vld [vmem:[#allocation7 + $0xb8] sm:$0xff]
    %v1456 = vunpack.c.l.b16 %v1408
    %v1457 = vunpack.c.h.b16 %v1408
    %v1458 = vunpack.c.l.b16 %v1409
    %v1459 = vunpack.c.h.b16 %v1409
    %v1460 = vunpack.c.l.b16 %v1410
    %v1461 = vunpack.c.h.b16 %v1410
    %v1462 = vunpack.c.l.b16 %v1411
    %v1463 = vunpack.c.h.b16 %v1411
    %v1464 = vunpack.c.l.b16 %v1412
    %v1465 = vunpack.c.h.b16 %v1412
    %v1466 = vunpack.c.l.b16 %v1413
    %v1467 = vunpack.c.h.b16 %v1413
    %v1468 = vunpack.c.l.b16 %v1414
    %v1469 = vunpack.c.h.b16 %v1414
    %v1470 = vunpack.c.l.b16 %v1415
    %v1471 = vunpack.c.h.b16 %v1415
    %v1472 = vunpack.c.l.b16 %v1416
    %v1473 = vunpack.c.h.b16 %v1416
    %v1474 = vunpack.c.l.b16 %v1417
    %v1475 = vunpack.c.h.b16 %v1417
    %v1476 = vunpack.c.l.b16 %v1418
    %v1477 = vunpack.c.h.b16 %v1418
    %v1478 = vunpack.c.l.b16 %v1419
    %v1479 = vunpack.c.h.b16 %v1419
    %v1480 = vunpack.c.l.b16 %v1420
    %v1481 = vunpack.c.h.b16 %v1420
    %v1482 = vunpack.c.l.b16 %v1421
    %v1483 = vunpack.c.h.b16 %v1421
    %v1484 = vunpack.c.l.b16 %v1422
    %v1485 = vunpack.c.h.b16 %v1422
    %v1486 = vunpack.c.l.b16 %v1423
    %v1487 = vunpack.c.h.b16 %v1423
    %v1488 = vunpack.c.l.b16 %v1424
    %v1489 = vunpack.c.h.b16 %v1424
    %v1490 = vunpack.c.l.b16 %v1425
    %v1491 = vunpack.c.h.b16 %v1425
    %v1492 = vunpack.c.l.b16 %v1426
    %v1493 = vunpack.c.h.b16 %v1426
    %v1494 = vunpack.c.l.b16 %v1427
    %v1495 = vunpack.c.h.b16 %v1427
    %v1496 = vunpack.c.l.b16 %v1428
    %v1497 = vunpack.c.h.b16 %v1428
    %v1498 = vunpack.c.l.b16 %v1429
    %v1499 = vunpack.c.h.b16 %v1429
    %v1500 = vunpack.c.l.b16 %v1430
    %v1501 = vunpack.c.h.b16 %v1430
    %v1502 = vunpack.c.l.b16 %v1431
    %v1503 = vunpack.c.h.b16 %v1431
    %v1504 = vpack.c.b16 %v1458, %v1456
    %v1505 = vpack.c.b16 %v1459, %v1457
    %v1506 = vpack.c.b16 %v1462, %v1460
    %v1507 = vpack.c.b16 %v1463, %v1461
    %v1508 = vpack.c.b16 %v1466, %v1464
    %v1509 = vpack.c.b16 %v1467, %v1465
    %v1510 = vpack.c.b16 %v1470, %v1468
    %v1511 = vpack.c.b16 %v1471, %v1469
    %v1512 = vpack.c.b16 %v1474, %v1472
    %v1513 = vpack.c.b16 %v1475, %v1473
    %v1514 = vpack.c.b16 %v1478, %v1476
    %v1515 = vpack.c.b16 %v1479, %v1477
    %v1516 = vpack.c.b16 %v1482, %v1480
    %v1517 = vpack.c.b16 %v1483, %v1481
    %v1518 = vpack.c.b16 %v1486, %v1484
    %v1519 = vpack.c.b16 %v1487, %v1485
    %v1520 = vpack.c.b16 %v1490, %v1488
    %v1521 = vpack.c.b16 %v1491, %v1489
    %v1522 = vpack.c.b16 %v1494, %v1492
    %v1523 = vpack.c.b16 %v1495, %v1493
    %v1524 = vpack.c.b16 %v1498, %v1496
    %v1525 = vpack.c.b16 %v1499, %v1497
    %v1526 = vpack.c.b16 %v1502, %v1500
    %v1527 = vpack.c.b16 %v1503, %v1501
    %v1553 = vsel %vm383, %v1407, 0
    %1555 = vmatprep.subr.bf16.mxu0 %v1505
    %1556 = vmatpush1.bf16.msra.mxu0 %v1504
    %1557 = vmatprep.subr.bf16.mxu0 %v1507
    %1558 = vmatpush1.bf16.msra.mxu0 %v1506
    %1559 = vmatprep.subr.bf16.mxu0 %v1509
    %1560 = vmatpush1.bf16.msra.mxu0 %v1508
    %1561 = vmatprep.subr.bf16.mxu0 %v1511
    %1562 = vmatpush1.bf16.msra.mxu0 %v1510
    %1563 = vmatprep.subr.bf16.mxu0 %v1513
    %1564 = vmatpush1.bf16.msra.mxu0 %v1512
    %1565 = vmatprep.subr.bf16.mxu0 %v1515
    %1566 = vmatpush1.bf16.msra.mxu0 %v1514
    %1567 = vmatprep.subr.bf16.mxu0 %v1517
    %1568 = vmatpush1.bf16.msra.mxu0 %v1516
    %1569 = vmatprep.subr.bf16.mxu0 %v1519
    %1570 = vmatpush1.bf16.msra.mxu0 %v1518
    %1571 = vmatprep.subr.bf16.mxu0 %v1521
    %1572 = vmatpush1.bf16.msra.mxu0 %v1520
    %1573 = vmatprep.subr.bf16.mxu0 %v1523
    %1574 = vmatpush1.bf16.msra.mxu0 %v1522
    %1575 = vmatprep.subr.bf16.mxu0 %v1525
    %1576 = vmatpush1.bf16.msra.mxu0 %v1524
    %1577 = vmatprep.subr.bf16.mxu0 %v1527
    %1578 = vmatpush1.bf16.msra.mxu0 %v1526
    %1579 = vmatprep.subr.bf16.mxu0 0
    %1580 = vmatpush1.bf16.msra.mxu0 0
    %1581 = vmatprep.subr.bf16.mxu0 0
    %1582 = vmatpush1.bf16.msra.mxu0 0
    %1583 = vmatprep.subr.bf16.mxu0 0
    %1584 = vmatpush1.bf16.msra.mxu0 0
    %1585 = vmatprep.subr.bf16.mxu0 0
    %1586 = vmatpush1.bf16.msra.mxu0 0
    %1587 = vmatprep.mubr.bf16.mxu0 %v1553
    %1588 = vmatmul.mubr.bf16.gmra.mrb[0].mxu0 %v1406
    %v1589 = vpop.f32.mrb[0].mxu0
    %v1590 = vadd.f32 %v88, %v1589
    %v1591 = vpop.f32.mrb[0].mxu0
    %v1592 = vadd.f32 %v92, %v1591
    %v1593 = vpop.f32.mrb[0].mxu0
    %v1594 = vpop.f32.mrb[0].mxu0
    %1595 = vdwg.mxu0
    %v1596 = vxor.u32 %v1590, 2147483648
    %v1597 = vmul.f32 %v1596, 1.442695
    %v1598 = vpow.pop %v1597
    %v1599 = vadd.f32 %v1598, 1.0
    %v1600 = vrcp.pop %v1599
    %v1601 = vmul.f32 1.0, %v1600
    %v1602 = vtanh.pop %v1592
    %v1603 = vxor.u32 %v1592, 2147483648
    %v1604 = vmul.f32 %v1603, 1.442695
    %v1605 = vpow.pop %v1604
    %v1606 = vadd.f32 %v1605, 1.0
    %v1607 = vrcp.pop %v1606
    %v1608 = vmul.f32 1.0, %v1607
    %v1609 = vmul.f32 %v1601, %v1298
    %v1610 = vmul.f32 %v1601, %v1602
    %1612 = vrot.lane.b32.xlu0 %v1610, 64
    %v1613 = vpop.permute.xlu0 %1612
    %v1615 = vadd.f32 %v1609, %v1613
    %v1616 = vtanh.pop %v1615
    %v1617 = vmul.f32 %v1608, %v1616
    %v1618 = vpack.c.bf16 %v1617, %v1617
    %v1619 = vld [vmem:[#allocation8] sm:$0xff]
    %v1620 = vld [vmem:[#allocation8 + $0x8] sm:$0xff]
    %v1621 = vld [vmem:[#allocation8 + $0x10] sm:$0xff]
    %v1622 = vld [vmem:[#allocation8 + $0x18] sm:$0xff]
    %v1623 = vld [vmem:[#allocation8 + $0x20] sm:$0xff]
    %v1624 = vld [vmem:[#allocation8 + $0x28] sm:$0xff]
    %v1625 = vld [vmem:[#allocation8 + $0x30] sm:$0xff]
    %v1626 = vld [vmem:[#allocation8 + $0x38] sm:$0xff]
    %1628 = vrot.lane.b32.xlu0 %v1618, 64
    %v1629 = vpop.permute.xlu0 %1628
    %v1638 = vunpack.c.l.b16 %v1619
    %v1639 = vunpack.c.h.b16 %v1619
    %v1640 = vunpack.c.l.b16 %v1620
    %v1641 = vunpack.c.h.b16 %v1620
    %v1642 = vunpack.c.l.b16 %v1621
    %v1643 = vunpack.c.h.b16 %v1621
    %v1644 = vunpack.c.l.b16 %v1622
    %v1645 = vunpack.c.h.b16 %v1622
    %v1646 = vunpack.c.l.b16 %v1623
    %v1647 = vunpack.c.h.b16 %v1623
    %v1648 = vunpack.c.l.b16 %v1624
    %v1649 = vunpack.c.h.b16 %v1624
    %v1650 = vunpack.c.l.b16 %v1625
    %v1651 = vunpack.c.h.b16 %v1625
    %v1652 = vunpack.c.l.b16 %v1626
    %v1653 = vunpack.c.h.b16 %v1626
    %v1654 = vpack.c.b16 %v1640, %v1638
    %v1655 = vpack.c.b16 %v1641, %v1639
    %v1656 = vpack.c.b16 %v1644, %v1642
    %v1657 = vpack.c.b16 %v1645, %v1643
    %v1658 = vpack.c.b16 %v1648, %v1646
    %v1659 = vpack.c.b16 %v1649, %v1647
    %v1660 = vpack.c.b16 %v1652, %v1650
    %v1661 = vpack.c.b16 %v1653, %v1651
    %v1671 = vsel %vm383, %v1629, 0
    %1673 = vmatprep.subr.bf16.mxu0 %v1655
    %1674 = vmatpush1.bf16.msra.mxu0 %v1654
    %1675 = vmatprep.subr.bf16.mxu0 %v1657
    %1676 = vmatpush1.bf16.msra.mxu0 %v1656
    %1677 = vmatprep.subr.bf16.mxu0 %v1659
    %1678 = vmatpush1.bf16.msra.mxu0 %v1658
    %1679 = vmatprep.subr.bf16.mxu0 %v1661
    %1680 = vmatpush1.bf16.msra.mxu0 %v1660
    %1681 = vmatprep.subr.bf16.mxu0 0
    %1682 = vmatpush1.bf16.msra.mxu0 0
    %1683 = vmatprep.subr.bf16.mxu0 0
    %1684 = vmatpush1.bf16.msra.mxu0 0
    %1685 = vmatprep.subr.bf16.mxu0 0
    %1686 = vmatpush1.bf16.msra.mxu0 0
    %1687 = vmatprep.subr.bf16.mxu0 0
    %1688 = vmatpush1.bf16.msra.mxu0 0
    %1689 = vmatprep.subr.bf16.mxu0 0
    %1690 = vmatpush1.bf16.msra.mxu0 0
    %1691 = vmatprep.subr.bf16.mxu0 0
    %1692 = vmatpush1.bf16.msra.mxu0 0
    %1693 = vmatprep.subr.bf16.mxu0 0
    %1694 = vmatpush1.bf16.msra.mxu0 0
    %1695 = vmatprep.subr.bf16.mxu0 0
    %1696 = vmatpush1.bf16.msra.mxu0 0
    %1697 = vmatprep.subr.bf16.mxu0 0
    %1698 = vmatpush1.bf16.msra.mxu0 0
    %1699 = vmatprep.subr.bf16.mxu0 0
    %1700 = vmatpush1.bf16.msra.mxu0 0
    %1701 = vmatprep.subr.bf16.mxu0 0
    %1702 = vmatpush1.bf16.msra.mxu0 0
    %1703 = vmatprep.subr.bf16.mxu0 0
    %1704 = vmatpush1.bf16.msra.mxu0 0
    %1705 = vmatprep.mubr.bf16.mxu0 0
    %1706 = vmatmul.mubr.bf16.gmra.mrb[0].mxu0 %v1671
    %v1707 = vpop.f32.mrb[0].mxu0
    %v1708 = vadd.f32 %v100, %v1707
    %v1709 = vpop.f32.mrb[0].mxu0
    %v1710 = vadd.f32 %v104, %v1709
    %v1711 = vpop.f32.mrb[0].mxu0
    %v1712 = vpop.f32.mrb[0].mxu0
    %1713 = vdwg.mxu0
    %v1714 = vadd.f32 %v1397, %v1708
    %v1715 = vadd.f32 %v1398, %v1710
    %s1716 = scalar_lea.vmem [#allocation10], 24
    %1717 = vst [vmem:[%s1716] sm:$0xff] %v1714
    %v1718 = vmax.f32 %v1715, 0.0
    %1720 = vrot.lane.b32.xlu0 %v1617, 64
    %v1721 = vpop.permute.xlu0 %1720
    %v1723 = vpack.c.bf16 %v1718, %v1718
    %v1724 = vpack.c.bf16 %v1721, %v1721
    %v1725 = vld [vmem:[#allocation7] sm:$0xff]
    %v1726 = vld [vmem:[#allocation7 + $0x8] sm:$0xff]
    %v1727 = vld [vmem:[#allocation7 + $0x10] sm:$0xff]
    %v1728 = vld [vmem:[#allocation7 + $0x18] sm:$0xff]
    %v1729 = vld [vmem:[#allocation7 + $0x20] sm:$0xff]
    %v1730 = vld [vmem:[#allocation7 + $0x28] sm:$0xff]
    %v1731 = vld [vmem:[#allocation7 + $0x30] sm:$0xff]
    %v1732 = vld [vmem:[#allocation7 + $0x38] sm:$0xff]
    %v1733 = vld [vmem:[#allocation7 + $0x40] sm:$0xff]
    %v1734 = vld [vmem:[#allocation7 + $0x48] sm:$0xff]
    %v1735 = vld [vmem:[#allocation7 + $0x50] sm:$0xff]
    %v1736 = vld [vmem:[#allocation7 + $0x58] sm:$0xff]
    %v1737 = vld [vmem:[#allocation7 + $0x60] sm:$0xff]
    %v1738 = vld [vmem:[#allocation7 + $0x68] sm:$0xff]
    %v1739 = vld [vmem:[#allocation7 + $0x70] sm:$0xff]
    %v1740 = vld [vmem:[#allocation7 + $0x78] sm:$0xff]
    %v1741 = vld [vmem:[#allocation7 + $0x80] sm:$0xff]
    %v1742 = vld [vmem:[#allocation7 + $0x88] sm:$0xff]
    %v1743 = vld [vmem:[#allocation7 + $0x90] sm:$0xff]
    %v1744 = vld [vmem:[#allocation7 + $0x98] sm:$0xff]
    %v1745 = vld [vmem:[#allocation7 + $0xa0] sm:$0xff]
    %v1746 = vld [vmem:[#allocation7 + $0xa8] sm:$0xff]
    %v1747 = vld [vmem:[#allocation7 + $0xb0] sm:$0xff]
    %v1748 = vld [vmem:[#allocation7 + $0xb8] sm:$0xff]
    %v1773 = vunpack.c.l.b16 %v1725
    %v1774 = vunpack.c.h.b16 %v1725
    %v1775 = vunpack.c.l.b16 %v1726
    %v1776 = vunpack.c.h.b16 %v1726
    %v1777 = vunpack.c.l.b16 %v1727
    %v1778 = vunpack.c.h.b16 %v1727
    %v1779 = vunpack.c.l.b16 %v1728
    %v1780 = vunpack.c.h.b16 %v1728
    %v1781 = vunpack.c.l.b16 %v1729
    %v1782 = vunpack.c.h.b16 %v1729
    %v1783 = vunpack.c.l.b16 %v1730
    %v1784 = vunpack.c.h.b16 %v1730
    %v1785 = vunpack.c.l.b16 %v1731
    %v1786 = vunpack.c.h.b16 %v1731
    %v1787 = vunpack.c.l.b16 %v1732
    %v1788 = vunpack.c.h.b16 %v1732
    %v1789 = vunpack.c.l.b16 %v1733
    %v1790 = vunpack.c.h.b16 %v1733
    %v1791 = vunpack.c.l.b16 %v1734
    %v1792 = vunpack.c.h.b16 %v1734
    %v1793 = vunpack.c.l.b16 %v1735
    %v1794 = vunpack.c.h.b16 %v1735
    %v1795 = vunpack.c.l.b16 %v1736
    %v1796 = vunpack.c.h.b16 %v1736
    %v1797 = vunpack.c.l.b16 %v1737
    %v1798 = vunpack.c.h.b16 %v1737
    %v1799 = vunpack.c.l.b16 %v1738
    %v1800 = vunpack.c.h.b16 %v1738
    %v1801 = vunpack.c.l.b16 %v1739
    %v1802 = vunpack.c.h.b16 %v1739
    %v1803 = vunpack.c.l.b16 %v1740
    %v1804 = vunpack.c.h.b16 %v1740
    %v1805 = vunpack.c.l.b16 %v1741
    %v1806 = vunpack.c.h.b16 %v1741
    %v1807 = vunpack.c.l.b16 %v1742
    %v1808 = vunpack.c.h.b16 %v1742
    %v1809 = vunpack.c.l.b16 %v1743
    %v1810 = vunpack.c.h.b16 %v1743
    %v1811 = vunpack.c.l.b16 %v1744
    %v1812 = vunpack.c.h.b16 %v1744
    %v1813 = vunpack.c.l.b16 %v1745
    %v1814 = vunpack.c.h.b16 %v1745
    %v1815 = vunpack.c.l.b16 %v1746
    %v1816 = vunpack.c.h.b16 %v1746
    %v1817 = vunpack.c.l.b16 %v1747
    %v1818 = vunpack.c.h.b16 %v1747
    %v1819 = vunpack.c.l.b16 %v1748
    %v1820 = vunpack.c.h.b16 %v1748
    %v1821 = vpack.c.b16 %v1775, %v1773
    %v1822 = vpack.c.b16 %v1776, %v1774
    %v1823 = vpack.c.b16 %v1779, %v1777
    %v1824 = vpack.c.b16 %v1780, %v1778
    %v1825 = vpack.c.b16 %v1783, %v1781
    %v1826 = vpack.c.b16 %v1784, %v1782
    %v1827 = vpack.c.b16 %v1787, %v1785
    %v1828 = vpack.c.b16 %v1788, %v1786
    %v1829 = vpack.c.b16 %v1791, %v1789
    %v1830 = vpack.c.b16 %v1792, %v1790
    %v1831 = vpack.c.b16 %v1795, %v1793
    %v1832 = vpack.c.b16 %v1796, %v1794
    %v1833 = vpack.c.b16 %v1799, %v1797
    %v1834 = vpack.c.b16 %v1800, %v1798
    %v1835 = vpack.c.b16 %v1803, %v1801
    %v1836 = vpack.c.b16 %v1804, %v1802
    %v1837 = vpack.c.b16 %v1807, %v1805
    %v1838 = vpack.c.b16 %v1808, %v1806
    %v1839 = vpack.c.b16 %v1811, %v1809
    %v1840 = vpack.c.b16 %v1812, %v1810
    %v1841 = vpack.c.b16 %v1815, %v1813
    %v1842 = vpack.c.b16 %v1816, %v1814
    %v1843 = vpack.c.b16 %v1819, %v1817
    %v1844 = vpack.c.b16 %v1820, %v1818
    %v1870 = vsel %vm383, %v1724, 0
    %1872 = vmatprep.subr.bf16.mxu0 %v1822
    %1873 = vmatpush1.bf16.msra.mxu0 %v1821
    %1874 = vmatprep.subr.bf16.mxu0 %v1824
    %1875 = vmatpush1.bf16.msra.mxu0 %v1823
    %1876 = vmatprep.subr.bf16.mxu0 %v1826
    %1877 = vmatpush1.bf16.msra.mxu0 %v1825
    %1878 = vmatprep.subr.bf16.mxu0 %v1828
    %1879 = vmatpush1.bf16.msra.mxu0 %v1827
    %1880 = vmatprep.subr.bf16.mxu0 %v1830
    %1881 = vmatpush1.bf16.msra.mxu0 %v1829
    %1882 = vmatprep.subr.bf16.mxu0 %v1832
    %1883 = vmatpush1.bf16.msra.mxu0 %v1831
    %1884 = vmatprep.subr.bf16.mxu0 %v1834
    %1885 = vmatpush1.bf16.msra.mxu0 %v1833
    %1886 = vmatprep.subr.bf16.mxu0 %v1836
    %1887 = vmatpush1.bf16.msra.mxu0 %v1835
    %1888 = vmatprep.subr.bf16.mxu0 %v1838
    %1889 = vmatpush1.bf16.msra.mxu0 %v1837
    %1890 = vmatprep.subr.bf16.mxu0 %v1840
    %1891 = vmatpush1.bf16.msra.mxu0 %v1839
    %1892 = vmatprep.subr.bf16.mxu0 %v1842
    %1893 = vmatpush1.bf16.msra.mxu0 %v1841
    %1894 = vmatprep.subr.bf16.mxu0 %v1844
    %1895 = vmatpush1.bf16.msra.mxu0 %v1843
    %1896 = vmatprep.subr.bf16.mxu0 0
    %1897 = vmatpush1.bf16.msra.mxu0 0
    %1898 = vmatprep.subr.bf16.mxu0 0
    %1899 = vmatpush1.bf16.msra.mxu0 0
    %1900 = vmatprep.subr.bf16.mxu0 0
    %1901 = vmatpush1.bf16.msra.mxu0 0
    %1902 = vmatprep.subr.bf16.mxu0 0
    %1903 = vmatpush1.bf16.msra.mxu0 0
    %1904 = vmatprep.mubr.bf16.mxu0 %v1870
    %1905 = vmatmul.mubr.bf16.gmra.mrb[0].mxu0 %v1723
    %v1906 = vpop.f32.mrb[0].mxu0
    %v1907 = vadd.f32 %v88, %v1906
    %v1908 = vpop.f32.mrb[0].mxu0
    %v1909 = vadd.f32 %v92, %v1908
    %v1910 = vpop.f32.mrb[0].mxu0
    %v1911 = vpop.f32.mrb[0].mxu0
    %1912 = vdwg.mxu0
    %v1913 = vxor.u32 %v1907, 2147483648
    %v1914 = vmul.f32 %v1913, 1.442695
    %v1915 = vpow.pop %v1914
    %v1916 = vadd.f32 %v1915, 1.0
    %v1917 = vrcp.pop %v1916
    %v1918 = vmul.f32 1.0, %v1917
    %v1919 = vtanh.pop %v1909
    %v1920 = vxor.u32 %v1909, 2147483648
    %v1921 = vmul.f32 %v1920, 1.442695
    %v1922 = vpow.pop %v1921
    %v1923 = vadd.f32 %v1922, 1.0
    %v1924 = vrcp.pop %v1923
    %v1925 = vmul.f32 1.0, %v1924
    %v1926 = vmul.f32 %v1918, %v1615
    %v1927 = vmul.f32 %v1918, %v1919
    %1929 = vrot.lane.b32.xlu0 %v1927, 64
    %v1930 = vpop.permute.xlu0 %1929
    %v1932 = vadd.f32 %v1926, %v1930
    %v1933 = vtanh.pop %v1932
    %v1934 = vmul.f32 %v1925, %v1933
    %v1935 = vpack.c.bf16 %v1934, %v1934
    %v1936 = vld [vmem:[#allocation8] sm:$0xff]
    %v1937 = vld [vmem:[#allocation8 + $0x8] sm:$0xff]
    %v1938 = vld [vmem:[#allocation8 + $0x10] sm:$0xff]
    %v1939 = vld [vmem:[#allocation8 + $0x18] sm:$0xff]
    %v1940 = vld [vmem:[#allocation8 + $0x20] sm:$0xff]
    %v1941 = vld [vmem:[#allocation8 + $0x28] sm:$0xff]
    %v1942 = vld [vmem:[#allocation8 + $0x30] sm:$0xff]
    %v1943 = vld [vmem:[#allocation8 + $0x38] sm:$0xff]
    %1945 = vrot.lane.b32.xlu0 %v1935, 64
    %v1946 = vpop.permute.xlu0 %1945
    %v1955 = vunpack.c.l.b16 %v1936
    %v1956 = vunpack.c.h.b16 %v1936
    %v1957 = vunpack.c.l.b16 %v1937
    %v1958 = vunpack.c.h.b16 %v1937
    %v1959 = vunpack.c.l.b16 %v1938
    %v1960 = vunpack.c.h.b16 %v1938
    %v1961 = vunpack.c.l.b16 %v1939
    %v1962 = vunpack.c.h.b16 %v1939
    %v1963 = vunpack.c.l.b16 %v1940
    %v1964 = vunpack.c.h.b16 %v1940
    %v1965 = vunpack.c.l.b16 %v1941
    %v1966 = vunpack.c.h.b16 %v1941
    %v1967 = vunpack.c.l.b16 %v1942
    %v1968 = vunpack.c.h.b16 %v1942
    %v1969 = vunpack.c.l.b16 %v1943
    %v1970 = vunpack.c.h.b16 %v1943
    %v1971 = vpack.c.b16 %v1957, %v1955
    %v1972 = vpack.c.b16 %v1958, %v1956
    %v1973 = vpack.c.b16 %v1961, %v1959
    %v1974 = vpack.c.b16 %v1962, %v1960
    %v1975 = vpack.c.b16 %v1965, %v1963
    %v1976 = vpack.c.b16 %v1966, %v1964
    %v1977 = vpack.c.b16 %v1969, %v1967
    %v1978 = vpack.c.b16 %v1970, %v1968
    %v1988 = vsel %vm383, %v1946, 0
    %1990 = vmatprep.subr.bf16.mxu0 %v1972
    %1991 = vmatpush1.bf16.msra.mxu0 %v1971
    %1992 = vmatprep.subr.bf16.mxu0 %v1974
    %1993 = vmatpush1.bf16.msra.mxu0 %v1973
    %1994 = vmatprep.subr.bf16.mxu0 %v1976
    %1995 = vmatpush1.bf16.msra.mxu0 %v1975
    %1996 = vmatprep.subr.bf16.mxu0 %v1978
    %1997 = vmatpush1.bf16.msra.mxu0 %v1977
    %1998 = vmatprep.subr.bf16.mxu0 0
    %1999 = vmatpush1.bf16.msra.mxu0 0
    %2000 = vmatprep.subr.bf16.mxu0 0
    %2001 = vmatpush1.bf16.msra.mxu0 0
    %2002 = vmatprep.subr.bf16.mxu0 0
    %2003 = vmatpush1.bf16.msra.mxu0 0
    %2004 = vmatprep.subr.bf16.mxu0 0
    %2005 = vmatpush1.bf16.msra.mxu0 0
    %2006 = vmatprep.subr.bf16.mxu0 0
    %2007 = vmatpush1.bf16.msra.mxu0 0
    %2008 = vmatprep.subr.bf16.mxu0 0
    %2009 = vmatpush1.bf16.msra.mxu0 0
    %2010 = vmatprep.subr.bf16.mxu0 0
    %2011 = vmatpush1.bf16.msra.mxu0 0
    %2012 = vmatprep.subr.bf16.mxu0 0
    %2013 = vmatpush1.bf16.msra.mxu0 0
    %2014 = vmatprep.subr.bf16.mxu0 0
    %2015 = vmatpush1.bf16.msra.mxu0 0
    %2016 = vmatprep.subr.bf16.mxu0 0
    %2017 = vmatpush1.bf16.msra.mxu0 0
    %2018 = vmatprep.subr.bf16.mxu0 0
    %2019 = vmatpush1.bf16.msra.mxu0 0
    %2020 = vmatprep.subr.bf16.mxu0 0
    %2021 = vmatpush1.bf16.msra.mxu0 0
    %2022 = vmatprep.mubr.bf16.mxu0 0
    %2023 = vmatmul.mubr.bf16.gmra.mrb[0].mxu0 %v1988
    %v2024 = vpop.f32.mrb[0].mxu0
    %v2025 = vadd.f32 %v100, %v2024
    %v2026 = vpop.f32.mrb[0].mxu0
    %v2027 = vadd.f32 %v104, %v2026
    %v2028 = vpop.f32.mrb[0].mxu0
    %v2029 = vpop.f32.mrb[0].mxu0
    %2030 = vdwg.mxu0
    %v2031 = vadd.f32 %v1714, %v2025
    %v2032 = vadd.f32 %v1715, %v2027
    %s2033 = scalar_lea.vmem [#allocation10], 32
    %2034 = vst [vmem:[%s2033] sm:$0xff] %v2031
    %v2035 = vmax.f32 %v2032, 0.0
    %2037 = vrot.lane.b32.xlu0 %v1934, 64
    %v2038 = vpop.permute.xlu0 %2037
    %v2040 = vpack.c.bf16 %v2035, %v2035
    %v2041 = vpack.c.bf16 %v2038, %v2038
    %v2042 = vld [vmem:[#allocation7] sm:$0xff]
    %v2043 = vld [vmem:[#allocation7 + $0x8] sm:$0xff]
    %v2044 = vld [vmem:[#allocation7 + $0x10] sm:$0xff]
    %v2045 = vld [vmem:[#allocation7 + $0x18] sm:$0xff]
    %v2046 = vld [vmem:[#allocation7 + $0x20] sm:$0xff]
    %v2047 = vld [vmem:[#allocation7 + $0x28] sm:$0xff]
    %v2048 = vld [vmem:[#allocation7 + $0x30] sm:$0xff]
    %v2049 = vld [vmem:[#allocation7 + $0x38] sm:$0xff]
    %v2050 = vld [vmem:[#allocation7 + $0x40] sm:$0xff]
    %v2051 = vld [vmem:[#allocation7 + $0x48] sm:$0xff]
    %v2052 = vld [vmem:[#allocation7 + $0x50] sm:$0xff]
    %v2053 = vld [vmem:[#allocation7 + $0x58] sm:$0xff]
    %v2054 = vld [vmem:[#allocation7 + $0x60] sm:$0xff]
    %v2055 = vld [vmem:[#allocation7 + $0x68] sm:$0xff]
    %v2056 = vld [vmem:[#allocation7 + $0x70] sm:$0xff]
    %v2057 = vld [vmem:[#allocation7 + $0x78] sm:$0xff]
    %v2058 = vld [vmem:[#allocation7 + $0x80] sm:$0xff]
    %v2059 = vld [vmem:[#allocation7 + $0x88] sm:$0xff]
    %v2060 = vld [vmem:[#allocation7 + $0x90] sm:$0xff]
    %v2061 = vld [vmem:[#allocation7 + $0x98] sm:$0xff]
    %v2062 = vld [vmem:[#allocation7 + $0xa0] sm:$0xff]
    %v2063 = vld [vmem:[#allocation7 + $0xa8] sm:$0xff]
    %v2064 = vld [vmem:[#allocation7 + $0xb0] sm:$0xff]
    %v2065 = vld [vmem:[#allocation7 + $0xb8] sm:$0xff]
    %v2090 = vunpack.c.l.b16 %v2042
    %v2091 = vunpack.c.h.b16 %v2042
    %v2092 = vunpack.c.l.b16 %v2043
    %v2093 = vunpack.c.h.b16 %v2043
    %v2094 = vunpack.c.l.b16 %v2044
    %v2095 = vunpack.c.h.b16 %v2044
    %v2096 = vunpack.c.l.b16 %v2045
    %v2097 = vunpack.c.h.b16 %v2045
    %v2098 = vunpack.c.l.b16 %v2046
    %v2099 = vunpack.c.h.b16 %v2046
    %v2100 = vunpack.c.l.b16 %v2047
    %v2101 = vunpack.c.h.b16 %v2047
    %v2102 = vunpack.c.l.b16 %v2048
    %v2103 = vunpack.c.h.b16 %v2048
    %v2104 = vunpack.c.l.b16 %v2049
    %v2105 = vunpack.c.h.b16 %v2049
    %v2106 = vunpack.c.l.b16 %v2050
    %v2107 = vunpack.c.h.b16 %v2050
    %v2108 = vunpack.c.l.b16 %v2051
    %v2109 = vunpack.c.h.b16 %v2051
    %v2110 = vunpack.c.l.b16 %v2052
    %v2111 = vunpack.c.h.b16 %v2052
    %v2112 = vunpack.c.l.b16 %v2053
    %v2113 = vunpack.c.h.b16 %v2053
    %v2114 = vunpack.c.l.b16 %v2054
    %v2115 = vunpack.c.h.b16 %v2054
    %v2116 = vunpack.c.l.b16 %v2055
    %v2117 = vunpack.c.h.b16 %v2055
    %v2118 = vunpack.c.l.b16 %v2056
    %v2119 = vunpack.c.h.b16 %v2056
    %v2120 = vunpack.c.l.b16 %v2057
    %v2121 = vunpack.c.h.b16 %v2057
    %v2122 = vunpack.c.l.b16 %v2058
    %v2123 = vunpack.c.h.b16 %v2058
    %v2124 = vunpack.c.l.b16 %v2059
    %v2125 = vunpack.c.h.b16 %v2059
    %v2126 = vunpack.c.l.b16 %v2060
    %v2127 = vunpack.c.h.b16 %v2060
    %v2128 = vunpack.c.l.b16 %v2061
    %v2129 = vunpack.c.h.b16 %v2061
    %v2130 = vunpack.c.l.b16 %v2062
    %v2131 = vunpack.c.h.b16 %v2062
    %v2132 = vunpack.c.l.b16 %v2063
    %v2133 = vunpack.c.h.b16 %v2063
    %v2134 = vunpack.c.l.b16 %v2064
    %v2135 = vunpack.c.h.b16 %v2064
    %v2136 = vunpack.c.l.b16 %v2065
    %v2137 = vunpack.c.h.b16 %v2065
    %v2138 = vpack.c.b16 %v2092, %v2090
    %v2139 = vpack.c.b16 %v2093, %v2091
    %v2140 = vpack.c.b16 %v2096, %v2094
    %v2141 = vpack.c.b16 %v2097, %v2095
    %v2142 = vpack.c.b16 %v2100, %v2098
    %v2143 = vpack.c.b16 %v2101, %v2099
    %v2144 = vpack.c.b16 %v2104, %v2102
    %v2145 = vpack.c.b16 %v2105, %v2103
    %v2146 = vpack.c.b16 %v2108, %v2106
    %v2147 = vpack.c.b16 %v2109, %v2107
    %v2148 = vpack.c.b16 %v2112, %v2110
    %v2149 = vpack.c.b16 %v2113, %v2111
    %v2150 = vpack.c.b16 %v2116, %v2114
    %v2151 = vpack.c.b16 %v2117, %v2115
    %v2152 = vpack.c.b16 %v2120, %v2118
    %v2153 = vpack.c.b16 %v2121, %v2119
    %v2154 = vpack.c.b16 %v2124, %v2122
    %v2155 = vpack.c.b16 %v2125, %v2123
    %v2156 = vpack.c.b16 %v2128, %v2126
    %v2157 = vpack.c.b16 %v2129, %v2127
    %v2158 = vpack.c.b16 %v2132, %v2130
    %v2159 = vpack.c.b16 %v2133, %v2131
    %v2160 = vpack.c.b16 %v2136, %v2134
    %v2161 = vpack.c.b16 %v2137, %v2135
    %v2187 = vsel %vm383, %v2041, 0
    %2189 = vmatprep.subr.bf16.mxu0 %v2139
    %2190 = vmatpush1.bf16.msra.mxu0 %v2138
    %2191 = vmatprep.subr.bf16.mxu0 %v2141
    %2192 = vmatpush1.bf16.msra.mxu0 %v2140
    %2193 = vmatprep.subr.bf16.mxu0 %v2143
    %2194 = vmatpush1.bf16.msra.mxu0 %v2142
    %2195 = vmatprep.subr.bf16.mxu0 %v2145
    %2196 = vmatpush1.bf16.msra.mxu0 %v2144
    %2197 = vmatprep.subr.bf16.mxu0 %v2147
    %2198 = vmatpush1.bf16.msra.mxu0 %v2146
    %2199 = vmatprep.subr.bf16.mxu0 %v2149
    %2200 = vmatpush1.bf16.msra.mxu0 %v2148
    %2201 = vmatprep.subr.bf16.mxu0 %v2151
    %2202 = vmatpush1.bf16.msra.mxu0 %v2150
    %2203 = vmatprep.subr.bf16.mxu0 %v2153
    %2204 = vmatpush1.bf16.msra.mxu0 %v2152
    %2205 = vmatprep.subr.bf16.mxu0 %v2155
    %2206 = vmatpush1.bf16.msra.mxu0 %v2154
    %2207 = vmatprep.subr.bf16.mxu0 %v2157
    %2208 = vmatpush1.bf16.msra.mxu0 %v2156
    %2209 = vmatprep.subr.bf16.mxu0 %v2159
    %2210 = vmatpush1.bf16.msra.mxu0 %v2158
    %2211 = vmatprep.subr.bf16.mxu0 %v2161
    %2212 = vmatpush1.bf16.msra.mxu0 %v2160
    %2213 = vmatprep.subr.bf16.mxu0 0
    %2214 = vmatpush1.bf16.msra.mxu0 0
    %2215 = vmatprep.subr.bf16.mxu0 0
    %2216 = vmatpush1.bf16.msra.mxu0 0
    %2217 = vmatprep.subr.bf16.mxu0 0
    %2218 = vmatpush1.bf16.msra.mxu0 0
    %2219 = vmatprep.subr.bf16.mxu0 0
    %2220 = vmatpush1.bf16.msra.mxu0 0
    %2221 = vmatprep.mubr.bf16.mxu0 %v2187
    %2222 = vmatmul.mubr.bf16.gmra.mrb[0].mxu0 %v2040
    %v2223 = vpop.f32.mrb[0].mxu0
    %v2224 = vadd.f32 %v88, %v2223
    %v2225 = vpop.f32.mrb[0].mxu0
    %v2226 = vadd.f32 %v92, %v2225
    %v2227 = vpop.f32.mrb[0].mxu0
    %v2228 = vpop.f32.mrb[0].mxu0
    %2229 = vdwg.mxu0
    %v2230 = vxor.u32 %v2224, 2147483648
    %v2231 = vmul.f32 %v2230, 1.442695
    %v2232 = vpow.pop %v2231
    %v2233 = vadd.f32 %v2232, 1.0
    %v2234 = vrcp.pop %v2233
    %v2235 = vmul.f32 1.0, %v2234
    %v2236 = vtanh.pop %v2226
    %v2237 = vxor.u32 %v2226, 2147483648
    %v2238 = vmul.f32 %v2237, 1.442695
    %v2239 = vpow.pop %v2238
    %v2240 = vadd.f32 %v2239, 1.0
    %v2241 = vrcp.pop %v2240
    %v2242 = vmul.f32 1.0, %v2241
    %v2243 = vmul.f32 %v2235, %v1932
    %v2244 = vmul.f32 %v2235, %v2236
    %2246 = vrot.lane.b32.xlu0 %v2244, 64
    %v2247 = vpop.permute.xlu0 %2246
    %v2249 = vadd.f32 %v2243, %v2247
    %v2250 = vtanh.pop %v2249
    %v2251 = vmul.f32 %v2242, %v2250
    %v2252 = vpack.c.bf16 %v2251, %v2251
    %v2253 = vld [vmem:[#allocation8] sm:$0xff]
    %v2254 = vld [vmem:[#allocation8 + $0x8] sm:$0xff]
    %v2255 = vld [vmem:[#allocation8 + $0x10] sm:$0xff]
    %v2256 = vld [vmem:[#allocation8 + $0x18] sm:$0xff]
    %v2257 = vld [vmem:[#allocation8 + $0x20] sm:$0xff]
    %v2258 = vld [vmem:[#allocation8 + $0x28] sm:$0xff]
    %v2259 = vld [vmem:[#allocation8 + $0x30] sm:$0xff]
    %v2260 = vld [vmem:[#allocation8 + $0x38] sm:$0xff]
    %2262 = vrot.lane.b32.xlu0 %v2252, 64
    %v2263 = vpop.permute.xlu0 %2262
    %v2272 = vunpack.c.l.b16 %v2253
    %v2273 = vunpack.c.h.b16 %v2253
    %v2274 = vunpack.c.l.b16 %v2254
    %v2275 = vunpack.c.h.b16 %v2254
    %v2276 = vunpack.c.l.b16 %v2255
    %v2277 = vunpack.c.h.b16 %v2255
    %v2278 = vunpack.c.l.b16 %v2256
    %v2279 = vunpack.c.h.b16 %v2256
    %v2280 = vunpack.c.l.b16 %v2257
    %v2281 = vunpack.c.h.b16 %v2257
    %v2282 = vunpack.c.l.b16 %v2258
    %v2283 = vunpack.c.h.b16 %v2258
    %v2284 = vunpack.c.l.b16 %v2259
    %v2285 = vunpack.c.h.b16 %v2259
    %v2286 = vunpack.c.l.b16 %v2260
    %v2287 = vunpack.c.h.b16 %v2260
    %v2288 = vpack.c.b16 %v2274, %v2272
    %v2289 = vpack.c.b16 %v2275, %v2273
    %v2290 = vpack.c.b16 %v2278, %v2276
    %v2291 = vpack.c.b16 %v2279, %v2277
    %v2292 = vpack.c.b16 %v2282, %v2280
    %v2293 = vpack.c.b16 %v2283, %v2281
    %v2294 = vpack.c.b16 %v2286, %v2284
    %v2295 = vpack.c.b16 %v2287, %v2285
    %v2305 = vsel %vm383, %v2263, 0
    %2307 = vmatprep.subr.bf16.mxu0 %v2289
    %2308 = vmatpush1.bf16.msra.mxu0 %v2288
    %2309 = vmatprep.subr.bf16.mxu0 %v2291
    %2310 = vmatpush1.bf16.msra.mxu0 %v2290
    %2311 = vmatprep.subr.bf16.mxu0 %v2293
    %2312 = vmatpush1.bf16.msra.mxu0 %v2292
    %2313 = vmatprep.subr.bf16.mxu0 %v2295
    %2314 = vmatpush1.bf16.msra.mxu0 %v2294
    %2315 = vmatprep.subr.bf16.mxu0 0
    %2316 = vmatpush1.bf16.msra.mxu0 0
    %2317 = vmatprep.subr.bf16.mxu0 0
    %2318 = vmatpush1.bf16.msra.mxu0 0
    %2319 = vmatprep.subr.bf16.mxu0 0
    %2320 = vmatpush1.bf16.msra.mxu0 0
    %2321 = vmatprep.subr.bf16.mxu0 0
    %2322 = vmatpush1.bf16.msra.mxu0 0
    %2323 = vmatprep.subr.bf16.mxu0 0
    %2324 = vmatpush1.bf16.msra.mxu0 0
    %2325 = vmatprep.subr.bf16.mxu0 0
    %2326 = vmatpush1.bf16.msra.mxu0 0
    %2327 = vmatprep.subr.bf16.mxu0 0
    %2328 = vmatpush1.bf16.msra.mxu0 0
    %2329 = vmatprep.subr.bf16.mxu0 0
    %2330 = vmatpush1.bf16.msra.mxu0 0
    %2331 = vmatprep.subr.bf16.mxu0 0
    %2332 = vmatpush1.bf16.msra.mxu0 0
    %2333 = vmatprep.subr.bf16.mxu0 0
    %2334 = vmatpush1.bf16.msra.mxu0 0
    %2335 = vmatprep.subr.bf16.mxu0 0
    %2336 = vmatpush1.bf16.msra.mxu0 0
    %2337 = vmatprep.subr.bf16.mxu0 0
    %2338 = vmatpush1.bf16.msra.mxu0 0
    %2339 = vmatprep.mubr.bf16.mxu0 0
    %2340 = vmatmul.mubr.bf16.gmra.mrb[0].mxu0 %v2305
    %v2341 = vpop.f32.mrb[0].mxu0
    %v2342 = vadd.f32 %v100, %v2341
    %v2343 = vpop.f32.mrb[0].mxu0
    %v2344 = vadd.f32 %v104, %v2343
    %v2345 = vpop.f32.mrb[0].mxu0
    %v2346 = vpop.f32.mrb[0].mxu0
    %2347 = vdwg.mxu0
    %v2348 = vadd.f32 %v2031, %v2342
    %v2349 = vadd.f32 %v2032, %v2344
    %s2350 = scalar_lea.vmem [#allocation10], 40
    %2351 = vst [vmem:[%s2350] sm:$0xff] %v2348
    %v2352 = vmax.f32 %v2349, 0.0
    %2354 = vrot.lane.b32.xlu0 %v2251, 64
    %v2355 = vpop.permute.xlu0 %2354
    %v2357 = vpack.c.bf16 %v2352, %v2352
    %v2358 = vpack.c.bf16 %v2355, %v2355
    %v2359 = vld [vmem:[#allocation7] sm:$0xff]
    %v2360 = vld [vmem:[#allocation7 + $0x8] sm:$0xff]
    %v2361 = vld [vmem:[#allocation7 + $0x10] sm:$0xff]
    %v2362 = vld [vmem:[#allocation7 + $0x18] sm:$0xff]
    %v2363 = vld [vmem:[#allocation7 + $0x20] sm:$0xff]
    %v2364 = vld [vmem:[#allocation7 + $0x28] sm:$0xff]
    %v2365 = vld [vmem:[#allocation7 + $0x30] sm:$0xff]
    %v2366 = vld [vmem:[#allocation7 + $0x38] sm:$0xff]
    %v2367 = vld [vmem:[#allocation7 + $0x40] sm:$0xff]
    %v2368 = vld [vmem:[#allocation7 + $0x48] sm:$0xff]
    %v2369 = vld [vmem:[#allocation7 + $0x50] sm:$0xff]
    %v2370 = vld [vmem:[#allocation7 + $0x58] sm:$0xff]
    %v2371 = vld [vmem:[#allocation7 + $0x60] sm:$0xff]
    %v2372 = vld [vmem:[#allocation7 + $0x68] sm:$0xff]
    %v2373 = vld [vmem:[#allocation7 + $0x70] sm:$0xff]
    %v2374 = vld [vmem:[#allocation7 + $0x78] sm:$0xff]
    %v2375 = vld [vmem:[#allocation7 + $0x80] sm:$0xff]
    %v2376 = vld [vmem:[#allocation7 + $0x88] sm:$0xff]
    %v2377 = vld [vmem:[#allocation7 + $0x90] sm:$0xff]
    %v2378 = vld [vmem:[#allocation7 + $0x98] sm:$0xff]
    %v2379 = vld [vmem:[#allocation7 + $0xa0] sm:$0xff]
    %v2380 = vld [vmem:[#allocation7 + $0xa8] sm:$0xff]
    %v2381 = vld [vmem:[#allocation7 + $0xb0] sm:$0xff]
    %v2382 = vld [vmem:[#allocation7 + $0xb8] sm:$0xff]
    %v2407 = vunpack.c.l.b16 %v2359
    %v2408 = vunpack.c.h.b16 %v2359
    %v2409 = vunpack.c.l.b16 %v2360
    %v2410 = vunpack.c.h.b16 %v2360
    %v2411 = vunpack.c.l.b16 %v2361
    %v2412 = vunpack.c.h.b16 %v2361
    %v2413 = vunpack.c.l.b16 %v2362
    %v2414 = vunpack.c.h.b16 %v2362
    %v2415 = vunpack.c.l.b16 %v2363
    %v2416 = vunpack.c.h.b16 %v2363
    %v2417 = vunpack.c.l.b16 %v2364
    %v2418 = vunpack.c.h.b16 %v2364
    %v2419 = vunpack.c.l.b16 %v2365
    %v2420 = vunpack.c.h.b16 %v2365
    %v2421 = vunpack.c.l.b16 %v2366
    %v2422 = vunpack.c.h.b16 %v2366
    %v2423 = vunpack.c.l.b16 %v2367
    %v2424 = vunpack.c.h.b16 %v2367
    %v2425 = vunpack.c.l.b16 %v2368
    %v2426 = vunpack.c.h.b16 %v2368
    %v2427 = vunpack.c.l.b16 %v2369
    %v2428 = vunpack.c.h.b16 %v2369
    %v2429 = vunpack.c.l.b16 %v2370
    %v2430 = vunpack.c.h.b16 %v2370
    %v2431 = vunpack.c.l.b16 %v2371
    %v2432 = vunpack.c.h.b16 %v2371
    %v2433 = vunpack.c.l.b16 %v2372
    %v2434 = vunpack.c.h.b16 %v2372
    %v2435 = vunpack.c.l.b16 %v2373
    %v2436 = vunpack.c.h.b16 %v2373
    %v2437 = vunpack.c.l.b16 %v2374
    %v2438 = vunpack.c.h.b16 %v2374
    %v2439 = vunpack.c.l.b16 %v2375
    %v2440 = vunpack.c.h.b16 %v2375
    %v2441 = vunpack.c.l.b16 %v2376
    %v2442 = vunpack.c.h.b16 %v2376
    %v2443 = vunpack.c.l.b16 %v2377
    %v2444 = vunpack.c.h.b16 %v2377
    %v2445 = vunpack.c.l.b16 %v2378
    %v2446 = vunpack.c.h.b16 %v2378
    %v2447 = vunpack.c.l.b16 %v2379
    %v2448 = vunpack.c.h.b16 %v2379
    %v2449 = vunpack.c.l.b16 %v2380
    %v2450 = vunpack.c.h.b16 %v2380
    %v2451 = vunpack.c.l.b16 %v2381
    %v2452 = vunpack.c.h.b16 %v2381
    %v2453 = vunpack.c.l.b16 %v2382
    %v2454 = vunpack.c.h.b16 %v2382
    %v2455 = vpack.c.b16 %v2409, %v2407
    %v2456 = vpack.c.b16 %v2410, %v2408
    %v2457 = vpack.c.b16 %v2413, %v2411
    %v2458 = vpack.c.b16 %v2414, %v2412
    %v2459 = vpack.c.b16 %v2417, %v2415
    %v2460 = vpack.c.b16 %v2418, %v2416
    %v2461 = vpack.c.b16 %v2421, %v2419
    %v2462 = vpack.c.b16 %v2422, %v2420
    %v2463 = vpack.c.b16 %v2425, %v2423
    %v2464 = vpack.c.b16 %v2426, %v2424
    %v2465 = vpack.c.b16 %v2429, %v2427
    %v2466 = vpack.c.b16 %v2430, %v2428
    %v2467 = vpack.c.b16 %v2433, %v2431
    %v2468 = vpack.c.b16 %v2434, %v2432
    %v2469 = vpack.c.b16 %v2437, %v2435
    %v2470 = vpack.c.b16 %v2438, %v2436
    %v2471 = vpack.c.b16 %v2441, %v2439
    %v2472 = vpack.c.b16 %v2442, %v2440
    %v2473 = vpack.c.b16 %v2445, %v2443
    %v2474 = vpack.c.b16 %v2446, %v2444
    %v2475 = vpack.c.b16 %v2449, %v2447
    %v2476 = vpack.c.b16 %v2450, %v2448
    %v2477 = vpack.c.b16 %v2453, %v2451
    %v2478 = vpack.c.b16 %v2454, %v2452
    %v2504 = vsel %vm383, %v2358, 0
    %2506 = vmatprep.subr.bf16.mxu0 %v2456
    %2507 = vmatpush1.bf16.msra.mxu0 %v2455
    %2508 = vmatprep.subr.bf16.mxu0 %v2458
    %2509 = vmatpush1.bf16.msra.mxu0 %v2457
    %2510 = vmatprep.subr.bf16.mxu0 %v2460
    %2511 = vmatpush1.bf16.msra.mxu0 %v2459
    %2512 = vmatprep.subr.bf16.mxu0 %v2462
    %2513 = vmatpush1.bf16.msra.mxu0 %v2461
    %2514 = vmatprep.subr.bf16.mxu0 %v2464
    %2515 = vmatpush1.bf16.msra.mxu0 %v2463
    %2516 = vmatprep.subr.bf16.mxu0 %v2466
    %2517 = vmatpush1.bf16.msra.mxu0 %v2465
    %2518 = vmatprep.subr.bf16.mxu0 %v2468
    %2519 = vmatpush1.bf16.msra.mxu0 %v2467
    %2520 = vmatprep.subr.bf16.mxu0 %v2470
    %2521 = vmatpush1.bf16.msra.mxu0 %v2469
    %2522 = vmatprep.subr.bf16.mxu0 %v2472
    %2523 = vmatpush1.bf16.msra.mxu0 %v2471
    %2524 = vmatprep.subr.bf16.mxu0 %v2474
    %2525 = vmatpush1.bf16.msra.mxu0 %v2473
    %2526 = vmatprep.subr.bf16.mxu0 %v2476
    %2527 = vmatpush1.bf16.msra.mxu0 %v2475
    %2528 = vmatprep.subr.bf16.mxu0 %v2478
    %2529 = vmatpush1.bf16.msra.mxu0 %v2477
    %2530 = vmatprep.subr.bf16.mxu0 0
    %2531 = vmatpush1.bf16.msra.mxu0 0
    %2532 = vmatprep.subr.bf16.mxu0 0
    %2533 = vmatpush1.bf16.msra.mxu0 0
    %2534 = vmatprep.subr.bf16.mxu0 0
    %2535 = vmatpush1.bf16.msra.mxu0 0
    %2536 = vmatprep.subr.bf16.mxu0 0
    %2537 = vmatpush1.bf16.msra.mxu0 0
    %2538 = vmatprep.mubr.bf16.mxu0 %v2504
    %2539 = vmatmul.mubr.bf16.gmra.mrb[0].mxu0 %v2357
    %v2540 = vpop.f32.mrb[0].mxu0
    %v2541 = vadd.f32 %v88, %v2540
    %v2542 = vpop.f32.mrb[0].mxu0
    %v2543 = vadd.f32 %v92, %v2542
    %v2544 = vpop.f32.mrb[0].mxu0
    %v2545 = vpop.f32.mrb[0].mxu0
    %2546 = vdwg.mxu0
    %v2547 = vxor.u32 %v2541, 2147483648
    %v2548 = vmul.f32 %v2547, 1.442695
    %v2549 = vpow.pop %v2548
    %v2550 = vadd.f32 %v2549, 1.0
    %v2551 = vrcp.pop %v2550
    %v2552 = vmul.f32 1.0, %v2551
    %v2553 = vtanh.pop %v2543
    %v2554 = vxor.u32 %v2543, 2147483648
    %v2555 = vmul.f32 %v2554, 1.442695
    %v2556 = vpow.pop %v2555
    %v2557 = vadd.f32 %v2556, 1.0
    %v2558 = vrcp.pop %v2557
    %v2559 = vmul.f32 1.0, %v2558
    %v2560 = vmul.f32 %v2552, %v2249
    %v2561 = vmul.f32 %v2552, %v2553
    %2563 = vrot.lane.b32.xlu0 %v2561, 64
    %v2564 = vpop.permute.xlu0 %2563
    %v2566 = vadd.f32 %v2560, %v2564
    %v2567 = vtanh.pop %v2566
    %v2568 = vmul.f32 %v2559, %v2567
    %v2569 = vpack.c.bf16 %v2568, %v2568
    %v2570 = vld [vmem:[#allocation8] sm:$0xff]
    %v2571 = vld [vmem:[#allocation8 + $0x8] sm:$0xff]
    %v2572 = vld [vmem:[#allocation8 + $0x10] sm:$0xff]
    %v2573 = vld [vmem:[#allocation8 + $0x18] sm:$0xff]
    %v2574 = vld [vmem:[#allocation8 + $0x20] sm:$0xff]
    %v2575 = vld [vmem:[#allocation8 + $0x28] sm:$0xff]
    %v2576 = vld [vmem:[#allocation8 + $0x30] sm:$0xff]
    %v2577 = vld [vmem:[#allocation8 + $0x38] sm:$0xff]
    %2579 = vrot.lane.b32.xlu0 %v2569, 64
    %v2580 = vpop.permute.xlu0 %2579
    %v2589 = vunpack.c.l.b16 %v2570
    %v2590 = vunpack.c.h.b16 %v2570
    %v2591 = vunpack.c.l.b16 %v2571
    %v2592 = vunpack.c.h.b16 %v2571
    %v2593 = vunpack.c.l.b16 %v2572
    %v2594 = vunpack.c.h.b16 %v2572
    %v2595 = vunpack.c.l.b16 %v2573
    %v2596 = vunpack.c.h.b16 %v2573
    %v2597 = vunpack.c.l.b16 %v2574
    %v2598 = vunpack.c.h.b16 %v2574
    %v2599 = vunpack.c.l.b16 %v2575
    %v2600 = vunpack.c.h.b16 %v2575
    %v2601 = vunpack.c.l.b16 %v2576
    %v2602 = vunpack.c.h.b16 %v2576
    %v2603 = vunpack.c.l.b16 %v2577
    %v2604 = vunpack.c.h.b16 %v2577
    %v2605 = vpack.c.b16 %v2591, %v2589
    %v2606 = vpack.c.b16 %v2592, %v2590
    %v2607 = vpack.c.b16 %v2595, %v2593
    %v2608 = vpack.c.b16 %v2596, %v2594
    %v2609 = vpack.c.b16 %v2599, %v2597
    %v2610 = vpack.c.b16 %v2600, %v2598
    %v2611 = vpack.c.b16 %v2603, %v2601
    %v2612 = vpack.c.b16 %v2604, %v2602
    %v2622 = vsel %vm383, %v2580, 0
    %2624 = vmatprep.subr.bf16.mxu0 %v2606
    %2625 = vmatpush1.bf16.msra.mxu0 %v2605
    %2626 = vmatprep.subr.bf16.mxu0 %v2608
    %2627 = vmatpush1.bf16.msra.mxu0 %v2607
    %2628 = vmatprep.subr.bf16.mxu0 %v2610
    %2629 = vmatpush1.bf16.msra.mxu0 %v2609
    %2630 = vmatprep.subr.bf16.mxu0 %v2612
    %2631 = vmatpush1.bf16.msra.mxu0 %v2611
    %2632 = vmatprep.subr.bf16.mxu0 0
    %2633 = vmatpush1.bf16.msra.mxu0 0
    %2634 = vmatprep.subr.bf16.mxu0 0
    %2635 = vmatpush1.bf16.msra.mxu0 0
    %2636 = vmatprep.subr.bf16.mxu0 0
    %2637 = vmatpush1.bf16.msra.mxu0 0
    %2638 = vmatprep.subr.bf16.mxu0 0
    %2639 = vmatpush1.bf16.msra.mxu0 0
    %2640 = vmatprep.subr.bf16.mxu0 0
    %2641 = vmatpush1.bf16.msra.mxu0 0
    %2642 = vmatprep.subr.bf16.mxu0 0
    %2643 = vmatpush1.bf16.msra.mxu0 0
    %2644 = vmatprep.subr.bf16.mxu0 0
    %2645 = vmatpush1.bf16.msra.mxu0 0
    %2646 = vmatprep.subr.bf16.mxu0 0
    %2647 = vmatpush1.bf16.msra.mxu0 0
    %2648 = vmatprep.subr.bf16.mxu0 0
    %2649 = vmatpush1.bf16.msra.mxu0 0
    %2650 = vmatprep.subr.bf16.mxu0 0
    %2651 = vmatpush1.bf16.msra.mxu0 0
    %2652 = vmatprep.subr.bf16.mxu0 0
    %2653 = vmatpush1.bf16.msra.mxu0 0
    %2654 = vmatprep.subr.bf16.mxu0 0
    %2655 = vmatpush1.bf16.msra.mxu0 0
    %2656 = vmatprep.mubr.bf16.mxu0 0
    %2657 = vmatmul.mubr.bf16.gmra.mrb[0].mxu0 %v2622
    %v2658 = vpop.f32.mrb[0].mxu0
    %v2659 = vadd.f32 %v100, %v2658
    %v2660 = vpop.f32.mrb[0].mxu0
    %v2661 = vadd.f32 %v104, %v2660
    %v2662 = vpop.f32.mrb[0].mxu0
    %v2663 = vpop.f32.mrb[0].mxu0
    %2664 = vdwg.mxu0
    %v2665 = vadd.f32 %v2348, %v2659
    %v2666 = vadd.f32 %v2349, %v2661
    %s2667 = scalar_lea.vmem [#allocation10], 48
    %2668 = vst [vmem:[%s2667] sm:$0xff] %v2665
    %v2669 = vmax.f32 %v2666, 0.0
    %2671 = vrot.lane.b32.xlu0 %v2568, 64
    %v2672 = vpop.permute.xlu0 %2671
    %v2674 = vpack.c.bf16 %v2669, %v2669
    %v2675 = vpack.c.bf16 %v2672, %v2672
    %v2676 = vld [vmem:[#allocation7] sm:$0xff]
    %v2677 = vld [vmem:[#allocation7 + $0x8] sm:$0xff]
    %v2678 = vld [vmem:[#allocation7 + $0x10] sm:$0xff]
    %v2679 = vld [vmem:[#allocation7 + $0x18] sm:$0xff]
    %v2680 = vld [vmem:[#allocation7 + $0x20] sm:$0xff]
    %v2681 = vld [vmem:[#allocation7 + $0x28] sm:$0xff]
    %v2682 = vld [vmem:[#allocation7 + $0x30] sm:$0xff]
    %v2683 = vld [vmem:[#allocation7 + $0x38] sm:$0xff]
    %v2684 = vld [vmem:[#allocation7 + $0x40] sm:$0xff]
    %v2685 = vld [vmem:[#allocation7 + $0x48] sm:$0xff]
    %v2686 = vld [vmem:[#allocation7 + $0x50] sm:$0xff]
    %v2687 = vld [vmem:[#allocation7 + $0x58] sm:$0xff]
    %v2688 = vld [vmem:[#allocation7 + $0x60] sm:$0xff]
    %v2689 = vld [vmem:[#allocation7 + $0x68] sm:$0xff]
    %v2690 = vld [vmem:[#allocation7 + $0x70] sm:$0xff]
    %v2691 = vld [vmem:[#allocation7 + $0x78] sm:$0xff]
    %v2692 = vld [vmem:[#allocation7 + $0x80] sm:$0xff]
    %v2693 = vld [vmem:[#allocation7 + $0x88] sm:$0xff]
    %v2694 = vld [vmem:[#allocation7 + $0x90] sm:$0xff]
    %v2695 = vld [vmem:[#allocation7 + $0x98] sm:$0xff]
    %v2696 = vld [vmem:[#allocation7 + $0xa0] sm:$0xff]
    %v2697 = vld [vmem:[#allocation7 + $0xa8] sm:$0xff]
    %v2698 = vld [vmem:[#allocation7 + $0xb0] sm:$0xff]
    %v2699 = vld [vmem:[#allocation7 + $0xb8] sm:$0xff]
    %v2724 = vunpack.c.l.b16 %v2676
    %v2725 = vunpack.c.h.b16 %v2676
    %v2726 = vunpack.c.l.b16 %v2677
    %v2727 = vunpack.c.h.b16 %v2677
    %v2728 = vunpack.c.l.b16 %v2678
    %v2729 = vunpack.c.h.b16 %v2678
    %v2730 = vunpack.c.l.b16 %v2679
    %v2731 = vunpack.c.h.b16 %v2679
    %v2732 = vunpack.c.l.b16 %v2680
    %v2733 = vunpack.c.h.b16 %v2680
    %v2734 = vunpack.c.l.b16 %v2681
    %v2735 = vunpack.c.h.b16 %v2681
    %v2736 = vunpack.c.l.b16 %v2682
    %v2737 = vunpack.c.h.b16 %v2682
    %v2738 = vunpack.c.l.b16 %v2683
    %v2739 = vunpack.c.h.b16 %v2683
    %v2740 = vunpack.c.l.b16 %v2684
    %v2741 = vunpack.c.h.b16 %v2684
    %v2742 = vunpack.c.l.b16 %v2685
    %v2743 = vunpack.c.h.b16 %v2685
    %v2744 = vunpack.c.l.b16 %v2686
    %v2745 = vunpack.c.h.b16 %v2686
    %v2746 = vunpack.c.l.b16 %v2687
    %v2747 = vunpack.c.h.b16 %v2687
    %v2748 = vunpack.c.l.b16 %v2688
    %v2749 = vunpack.c.h.b16 %v2688
    %v2750 = vunpack.c.l.b16 %v2689
    %v2751 = vunpack.c.h.b16 %v2689
    %v2752 = vunpack.c.l.b16 %v2690
    %v2753 = vunpack.c.h.b16 %v2690
    %v2754 = vunpack.c.l.b16 %v2691
    %v2755 = vunpack.c.h.b16 %v2691
    %v2756 = vunpack.c.l.b16 %v2692
    %v2757 = vunpack.c.h.b16 %v2692
    %v2758 = vunpack.c.l.b16 %v2693
    %v2759 = vunpack.c.h.b16 %v2693
    %v2760 = vunpack.c.l.b16 %v2694
    %v2761 = vunpack.c.h.b16 %v2694
    %v2762 = vunpack.c.l.b16 %v2695
    %v2763 = vunpack.c.h.b16 %v2695
    %v2764 = vunpack.c.l.b16 %v2696
    %v2765 = vunpack.c.h.b16 %v2696
    %v2766 = vunpack.c.l.b16 %v2697
    %v2767 = vunpack.c.h.b16 %v2697
    %v2768 = vunpack.c.l.b16 %v2698
    %v2769 = vunpack.c.h.b16 %v2698
    %v2770 = vunpack.c.l.b16 %v2699
    %v2771 = vunpack.c.h.b16 %v2699
    %v2772 = vpack.c.b16 %v2726, %v2724
    %v2773 = vpack.c.b16 %v2727, %v2725
    %v2774 = vpack.c.b16 %v2730, %v2728
    %v2775 = vpack.c.b16 %v2731, %v2729
    %v2776 = vpack.c.b16 %v2734, %v2732
    %v2777 = vpack.c.b16 %v2735, %v2733
    %v2778 = vpack.c.b16 %v2738, %v2736
    %v2779 = vpack.c.b16 %v2739, %v2737
    %v2780 = vpack.c.b16 %v2742, %v2740
    %v2781 = vpack.c.b16 %v2743, %v2741
    %v2782 = vpack.c.b16 %v2746, %v2744
    %v2783 = vpack.c.b16 %v2747, %v2745
    %v2784 = vpack.c.b16 %v2750, %v2748
    %v2785 = vpack.c.b16 %v2751, %v2749
    %v2786 = vpack.c.b16 %v2754, %v2752
    %v2787 = vpack.c.b16 %v2755, %v2753
    %v2788 = vpack.c.b16 %v2758, %v2756
    %v2789 = vpack.c.b16 %v2759, %v2757
    %v2790 = vpack.c.b16 %v2762, %v2760
    %v2791 = vpack.c.b16 %v2763, %v2761
    %v2792 = vpack.c.b16 %v2766, %v2764
    %v2793 = vpack.c.b16 %v2767, %v2765
    %v2794 = vpack.c.b16 %v2770, %v2768
    %v2795 = vpack.c.b16 %v2771, %v2769
    %v2821 = vsel %vm383, %v2675, 0
    %2823 = vmatprep.subr.bf16.mxu0 %v2773
    %2824 = vmatpush1.bf16.msra.mxu0 %v2772
    %2825 = vmatprep.subr.bf16.mxu0 %v2775
    %2826 = vmatpush1.bf16.msra.mxu0 %v2774
    %2827 = vmatprep.subr.bf16.mxu0 %v2777
    %2828 = vmatpush1.bf16.msra.mxu0 %v2776
    %2829 = vmatprep.subr.bf16.mxu0 %v2779
    %2830 = vmatpush1.bf16.msra.mxu0 %v2778
    %2831 = vmatprep.subr.bf16.mxu0 %v2781
    %2832 = vmatpush1.bf16.msra.mxu0 %v2780
    %2833 = vmatprep.subr.bf16.mxu0 %v2783
    %2834 = vmatpush1.bf16.msra.mxu0 %v2782
    %2835 = vmatprep.subr.bf16.mxu0 %v2785
    %2836 = vmatpush1.bf16.msra.mxu0 %v2784
    %2837 = vmatprep.subr.bf16.mxu0 %v2787
    %2838 = vmatpush1.bf16.msra.mxu0 %v2786
    %2839 = vmatprep.subr.bf16.mxu0 %v2789
    %2840 = vmatpush1.bf16.msra.mxu0 %v2788
    %2841 = vmatprep.subr.bf16.mxu0 %v2791
    %2842 = vmatpush1.bf16.msra.mxu0 %v2790
    %2843 = vmatprep.subr.bf16.mxu0 %v2793
    %2844 = vmatpush1.bf16.msra.mxu0 %v2792
    %2845 = vmatprep.subr.bf16.mxu0 %v2795
    %2846 = vmatpush1.bf16.msra.mxu0 %v2794
    %2847 = vmatprep.subr.bf16.mxu0 0
    %2848 = vmatpush1.bf16.msra.mxu0 0
    %2849 = vmatprep.subr.bf16.mxu0 0
    %2850 = vmatpush1.bf16.msra.mxu0 0
    %2851 = vmatprep.subr.bf16.mxu0 0
    %2852 = vmatpush1.bf16.msra.mxu0 0
    %2853 = vmatprep.subr.bf16.mxu0 0
    %2854 = vmatpush1.bf16.msra.mxu0 0
    %2855 = vmatprep.mubr.bf16.mxu0 %v2821
    %2856 = vmatmul.mubr.bf16.gmra.mrb[0].mxu0 %v2674
    %v2857 = vpop.f32.mrb[0].mxu0
    %v2858 = vadd.f32 %v88, %v2857
    %v2859 = vpop.f32.mrb[0].mxu0
    %v2860 = vadd.f32 %v92, %v2859
    %v2861 = vpop.f32.mrb[0].mxu0
    %v2862 = vpop.f32.mrb[0].mxu0
    %2863 = vdwg.mxu0
    %v2864 = vxor.u32 %v2858, 2147483648
    %v2865 = vmul.f32 %v2864, 1.442695
    %v2866 = vpow.pop %v2865
    %v2867 = vadd.f32 %v2866, 1.0
    %v2868 = vrcp.pop %v2867
    %v2869 = vmul.f32 1.0, %v2868
    %v2870 = vtanh.pop %v2860
    %v2871 = vxor.u32 %v2860, 2147483648
    %v2872 = vmul.f32 %v2871, 1.442695
    %v2873 = vpow.pop %v2872
    %v2874 = vadd.f32 %v2873, 1.0
    %v2875 = vrcp.pop %v2874
    %v2876 = vmul.f32 1.0, %v2875
    %v2877 = vmul.f32 %v2869, %v2566
    %v2878 = vmul.f32 %v2869, %v2870
    %2880 = vrot.lane.b32.xlu0 %v2878, 64
    %v2881 = vpop.permute.xlu0 %2880
    %v2883 = vadd.f32 %v2877, %v2881
    %v2884 = vtanh.pop %v2883
    %v2885 = vmul.f32 %v2876, %v2884
    %v2886 = vpack.c.bf16 %v2885, %v2885
    %v2887 = vld [vmem:[#allocation8] sm:$0xff]
    %v2888 = vld [vmem:[#allocation8 + $0x8] sm:$0xff]
    %v2889 = vld [vmem:[#allocation8 + $0x10] sm:$0xff]
    %v2890 = vld [vmem:[#allocation8 + $0x18] sm:$0xff]
    %v2891 = vld [vmem:[#allocation8 + $0x20] sm:$0xff]
    %v2892 = vld [vmem:[#allocation8 + $0x28] sm:$0xff]
    %v2893 = vld [vmem:[#allocation8 + $0x30] sm:$0xff]
    %v2894 = vld [vmem:[#allocation8 + $0x38] sm:$0xff]
    %2896 = vrot.lane.b32.xlu0 %v2886, 64
    %v2897 = vpop.permute.xlu0 %2896
    %v2906 = vunpack.c.l.b16 %v2887
    %v2907 = vunpack.c.h.b16 %v2887
    %v2908 = vunpack.c.l.b16 %v2888
    %v2909 = vunpack.c.h.b16 %v2888
    %v2910 = vunpack.c.l.b16 %v2889
    %v2911 = vunpack.c.h.b16 %v2889
    %v2912 = vunpack.c.l.b16 %v2890
    %v2913 = vunpack.c.h.b16 %v2890
    %v2914 = vunpack.c.l.b16 %v2891
    %v2915 = vunpack.c.h.b16 %v2891
    %v2916 = vunpack.c.l.b16 %v2892
    %v2917 = vunpack.c.h.b16 %v2892
    %v2918 = vunpack.c.l.b16 %v2893
    %v2919 = vunpack.c.h.b16 %v2893
    %v2920 = vunpack.c.l.b16 %v2894
    %v2921 = vunpack.c.h.b16 %v2894
    %v2922 = vpack.c.b16 %v2908, %v2906
    %v2923 = vpack.c.b16 %v2909, %v2907
    %v2924 = vpack.c.b16 %v2912, %v2910
    %v2925 = vpack.c.b16 %v2913, %v2911
    %v2926 = vpack.c.b16 %v2916, %v2914
    %v2927 = vpack.c.b16 %v2917, %v2915
    %v2928 = vpack.c.b16 %v2920, %v2918
    %v2929 = vpack.c.b16 %v2921, %v2919
    %v2939 = vsel %vm383, %v2897, 0
    %2941 = vmatprep.subr.bf16.mxu0 %v2923
    %2942 = vmatpush1.bf16.msra.mxu0 %v2922
    %2943 = vmatprep.subr.bf16.mxu0 %v2925
    %2944 = vmatpush1.bf16.msra.mxu0 %v2924
    %2945 = vmatprep.subr.bf16.mxu0 %v2927
    %2946 = vmatpush1.bf16.msra.mxu0 %v2926
    %2947 = vmatprep.subr.bf16.mxu0 %v2929
    %2948 = vmatpush1.bf16.msra.mxu0 %v2928
    %2949 = vmatprep.subr.bf16.mxu0 0
    %2950 = vmatpush1.bf16.msra.mxu0 0
    %2951 = vmatprep.subr.bf16.mxu0 0
    %2952 = vmatpush1.bf16.msra.mxu0 0
    %2953 = vmatprep.subr.bf16.mxu0 0
    %2954 = vmatpush1.bf16.msra.mxu0 0
    %2955 = vmatprep.subr.bf16.mxu0 0
    %2956 = vmatpush1.bf16.msra.mxu0 0
    %2957 = vmatprep.subr.bf16.mxu0 0
    %2958 = vmatpush1.bf16.msra.mxu0 0
    %2959 = vmatprep.subr.bf16.mxu0 0
    %2960 = vmatpush1.bf16.msra.mxu0 0
    %2961 = vmatprep.subr.bf16.mxu0 0
    %2962 = vmatpush1.bf16.msra.mxu0 0
    %2963 = vmatprep.subr.bf16.mxu0 0
    %2964 = vmatpush1.bf16.msra.mxu0 0
    %2965 = vmatprep.subr.bf16.mxu0 0
    %2966 = vmatpush1.bf16.msra.mxu0 0
    %2967 = vmatprep.subr.bf16.mxu0 0
    %2968 = vmatpush1.bf16.msra.mxu0 0
    %2969 = vmatprep.subr.bf16.mxu0 0
    %2970 = vmatpush1.bf16.msra.mxu0 0
    %2971 = vmatprep.subr.bf16.mxu0 0
    %2972 = vmatpush1.bf16.msra.mxu0 0
    %2973 = vmatprep.mubr.bf16.mxu0 0
    %2974 = vmatmul.mubr.bf16.gmra.mrb[0].mxu0 %v2939
    %v2975 = vpop.f32.mrb[0].mxu0
    %v2976 = vadd.f32 %v100, %v2975
    %v2977 = vpop.f32.mrb[0].mxu0
    %v2978 = vpop.f32.mrb[0].mxu0
    %v2979 = vpop.f32.mrb[0].mxu0
    %2980 = vdwg.mxu0
    %v2981 = vadd.f32 %v2665, %v2976
    %s2982 = scalar_lea.vmem [#allocation10], 56
    %2983 = vst [vmem:[%s2982] sm:$0xff] %v2981
    // Predicated region
    $region46: #{tpu_custom_call.1} parent=1 // pred_check
      _
    $region47: #{tpu_custom_call.1} parent=1 // pred_check_branch
      %2985 = sbr.rel (0) target = $region49
    $region48: #{tpu_custom_call.1} parent=1 // pred_region
      %s2987 = ssub.s32 1024, 1024
      %2988 = vsyncadd [#allocation4], %s2987
      %s2989 = sshll.u32 [#allocation10], 4
      %s2990 = int_to_ptr.vmem [resolvable:$true] %s2989
      %2995 = dma.vmem_to_hbm [thread:$0]  %s2990, 1024, %s7, [#allocation4], 128, 128, 8
    $region49: #{tpu_custom_call.1} parent=1 // pred_fallthru
      _
    // Predicated region
    $region50: #{tpu_custom_call.1} parent=1 // pred_check
      _
    $region51: #{tpu_custom_call.1} parent=1 // pred_check_branch
      %2997 = sbr.rel (0) target = $region53
    $region52: #{tpu_custom_call.1} parent=1 // pred_region
      %2998 = dma.done [#allocation4], 1024
    $region53: #{tpu_custom_call.1} parent=1 // pred_fallthru
      _
    %2999 = vsyncpa [#allocation3], 1
    %3000 = vsyncpa [#allocation6], 1
    %3001 = vsyncpa [#allocation9], 1
    %3002 = vsyncpa [#allocation4], 1

</llo_original>
